<compile_context>
chip_gen: v7x
topology: tpu7x:2x2x1
jax: 0.10.0
libtpu: 0.0.40
codegen_flags: <defaults>
</compile_context>

<pallas_src>
import functools

import jax
import jax.numpy as jnp
from jax.experimental import pallas as pl
from jax.experimental.pallas import tpu as pltpu


# ------------------------------ Pallas kernel --------------------------------

def _fused_unet_up_kernel(
    x1_ref, x2_ref, wup_ref, bup_ref, w1_ref, b1_ref, w2_ref, b2_ref,
    mask_ref, o_ref, cat_ref, h1_ref, *,
    H1, W1, H2, Hv, Wv, Wc, Lv, L2, C1, Cup, o2):
  """One batch element; all intermediates stay in VMEM (bf16 canvases).

  cat_ref : (C1+Cup, Lc)     zero-ringed canvas holding concat(x1_pad, up)
  h1_ref  : (Cout, Lc + 128) zero-ringed canvas holding the conv1 output
  Canvas lane index l = row*Wc + col; valid conv outputs sit at col < Wv.
  """
  f32 = jnp.float32
  cdt = cat_ref.dtype                       # bf16
  Cout = o_ref.shape[1]
  Lup = x2_ref.shape[2]                     # = H2 * Wv
  Lh1 = h1_ref.shape[1]

  # ---- 0) zeroing ------------------------------------------------------------
  # cat: full zero each iteration (ring + F.pad bands); no program_id gating so
  # it stays correct under "parallel" grid semantics with per-core scratch.
  # h1: interior is fully overwritten by the masked conv1 store below, so only
  # the never-dirtied ring/slack needs zeroing (staging reuse was removed).
  cat_ref[...] = jnp.zeros_like(cat_ref)
  h1_ref[:, pl.ds(0, Wc + 1)] = jnp.zeros((Cout, Wc + 1), cdt)
  t0 = (Hv + 1) * Wc - 1
  h1_ref[:, pl.ds(t0, Lh1 - t0)] = jnp.zeros((Cout, Lh1 - t0), cdt)

  # ---- 1) place the (F.pad'ed) skip connection x1 ----------------------------
  for i in range(H1):
    dst = (i + o2 + 1) * Wc + (o2 + 1)
    cat_ref[pl.ds(0, C1), pl.ds(dst, W1)] = x1_ref[0, :, pl.ds(i * W1, W1)]

  # ---- 2) ConvTranspose2d(k=2, s=2): ONE bulk MXU matmul ---------------------
  # x2 arrives with its columns pre-duplicated (nearest-neighbour along W), so
  # all four (kh,kw) taps are one stacked lane-dense bf16 matmul; the kw
  # interleave is a free VPU parity select (no expansion matmuls, no strided
  # stores).  Bias broadcast hoisted out of the row loop.
  z = jnp.dot(wup_ref[...], x2_ref[0], preferred_element_type=f32)  # (4Cup,Lup)
  col = jax.lax.broadcasted_iota(jnp.int32, (Cup, Lup), 1)
  even = (col & 1) == 0
  bup = bup_ref[...]                                                # (Cup, 1)
  up0 = (jnp.where(even, z[0 * Cup:1 * Cup], z[1 * Cup:2 * Cup]) + bup).astype(cdt)
  up1 = (jnp.where(even, z[2 * Cup:3 * Cup], z[3 * Cup:4 * Cup]) + bup).astype(cdt)
  for h in range(H2):                              # row scatter into the canvas
    src = slice(h * Wv, (h + 1) * Wv)
    cat_ref[pl.ds(C1, Cup), pl.ds((2 * h + 1) * Wc + 1, Wv)] = up0[:, src]
    cat_ref[pl.ds(C1, Cup), pl.ds((2 * h + 2) * Wc + 1, Wv)] = up1[:, src]

  # ---- 3) conv1: 3x3 pad=1 + ReLU over the concatenated canvas ---------------
  acc = jnp.zeros((Cout, Lv), f32)
  for dh in range(3):
    for dw in range(3):
      acc += jnp.dot(w1_ref[3 * dh + dw], cat_ref[:, pl.ds(dh * Wc + dw, Lv)],
                     preferred_element_type=f32)
  h1v = jnp.maximum(acc + b1_ref[...], 0.0) * mask_ref[...]   # zero gap columns
  h1_ref[:, pl.ds(Wc + 1, Lv)] = h1v.astype(cdt)              # one contig. store

  # ---- 4) conv2: 3x3 pad=1 + ReLU --------------------------------------------
  acc = jnp.zeros((Cout, L2), f32)
  for dh in range(3):
    for dw in range(3):
      acc += jnp.dot(w2_ref[3 * dh + dw], h1_ref[:, pl.ds(dh * Wc + dw, L2)],
                     preferred_element_type=f32)
  y = jnp.maximum(acc + b2_ref[...], 0.0)

  # ---- 5) single lane-dense output store (canvas-pitch slab) -----------------
  # No staging copy, no per-row unaligned stores; the 2 junk gap columns per
  # row are cropped by a free XLA slice in the wrapper.
  o_ref[0, :, :] = y


# --------------------------------- Wrapper -----------------------------------

def unet_up_forward(params, inputs1, inputs2, padding=1):
  """unetUp.forward(inputs1, inputs2), is_deconv=True.  Inputs/outputs NCHW."""
  assert padding == 1, "fused kernel implements the UNet default padding=1"

  N, C1, H1, W1 = inputs1.shape
  N2, Cin2, H2, W2 = inputs2.shape
  assert N == N2
  Cup = params['up_w'].shape[1]            # ConvTranspose2d out channels
  Cout = params['conv1_w'].shape[0]
  Ct = C1 + Cup
  assert params['conv1_w'].shape[1] == Ct

  Hv, Wv = 2 * H2, 2 * W2                  # upsampled spatial size
  offset = Hv - H1
  assert offset >= 0 and offset % 2 == 0 and (Wv - W1) == offset
  o2 = offset // 2
  Hc, Wc = Hv + 2, Wv + 2                  # padded canvas (padding = 1)
  Lc = Hc * Wc
  Lv = Hv * Wc - 2                         # flat length covering conv1 outputs
  L2 = Hv * Wc                             # conv2 canvas-pitch output slab
  Lh1 = Lc + 128                           # h1 canvas + read slack for L2 taps

  f32, bf16 = jnp.float32, jnp.bfloat16

  # bf16 operands (halves HBM + VMEM); matmuls accumulate in f32 in-kernel.
  x1f = inputs1.astype(bf16).reshape(N, C1, H1 * W1)
  # Column-duplicated x2 (nearest-neighbour along W) so the deconv becomes one
  # bulk matmul + parity select in the kernel.
  x2e = jnp.repeat(inputs2.astype(bf16), 2, axis=3).reshape(N, Cin2, H2 * Wv)

  # ConvTranspose2d weight (Cin,Cout,kh,kw) -> stacked (4*Cout, Cin), rows
  # ordered by block b = 2*kh + kw.
  wup_s = jnp.transpose(params['up_w'], (2, 3, 1, 0)).reshape(4 * Cup, Cin2).astype(bf16)
  bup = params['up_b'].astype(f32).reshape(Cup, 1)
  # Conv2d weight (Cout,Cin,3,3) -> (9,Cout,Cin), tap index t = 3*dh + dw.
  w1t = jnp.transpose(params['conv1_w'], (2, 3, 0, 1)).reshape(9, Cout, Ct).astype(bf16)
  b1 = params['conv1_b'].astype(f32).reshape(Cout, 1)
  w2t = jnp.transpose(params['conv2_w'], (2, 3, 0, 1)).reshape(9, Cout, Cout).astype(bf16)
  b2 = params['conv2_b'].astype(f32).reshape(Cout, 1)

  # Validity mask over flat canvas-pitch conv1 outputs (zeros the 2 gap cols).
  mask = ((jnp.arange(Lv) % Wc) < Wv).astype(f32).reshape(1, Lv)

  kernel = functools.partial(
      _fused_unet_up_kernel, H1=H1, W1=W1, H2=H2, Hv=Hv, Wv=Wv, Wc=Wc,
      Lv=Lv, L2=L2, C1=C1, Cup=Cup, o2=o2)

  flops = N * (2 * (4 * Cup) * Cin2 * (H2 * Wv)
               + 2 * 9 * Ct * Cout * (Hv * Wv)
               + 2 * 9 * Cout * Cout * (Hv * Wv))
  bytes_accessed = (2 * (x1f.size + x2e.size + wup_s.size + w1t.size + w2t.size)
                    + 4 * (bup.size + b1.size + b2.size + mask.size)
                    + 4 * N * Cout * L2)

  # vmem limit from the actual footprint (canvases + double-buffered IO blocks
  # + weights), with headroom; capped below the smallest physical VMEM (v7x).
  canvas_bytes = Ct * Lc * 2 + Cout * Lh1 * 2
  io_block_bytes = 2 * ((C1 * H1 * W1 + Cin2 * H2 * Wv) * 2 + Cout * L2 * 4)
  const_bytes = 2 * ((wup_s.size + w1t.size + w2t.size) * 2
                     + (bup.size + b1.size + b2.size + mask.size) * 4)
  vmem_limit = int(min(96 * 2**20,
                       max(32 * 2**20,
                           2 * (canvas_bytes + io_block_bytes + const_bytes))))

  out = pl.pallas_call(
      kernel,
      out_shape=jax.ShapeDtypeStruct((N, Cout, L2), f32),
      grid=(N,),
      in_specs=[
          pl.BlockSpec((1, C1, H1 * W1), lambda n: (n, 0, 0)),      # x1 (NCHW flat)
          pl.BlockSpec((1, Cin2, H2 * Wv), lambda n: (n, 0, 0)),    # x2, cols dup'ed
          pl.BlockSpec((4 * Cup, Cin2), lambda n: (0, 0)),          # deconv weights
          pl.BlockSpec((Cup, 1), lambda n: (0, 0)),                 # deconv bias
          pl.BlockSpec((9, Cout, Ct), lambda n: (0, 0, 0)),         # conv1 weights
          pl.BlockSpec((Cout, 1), lambda n: (0, 0)),                # conv1 bias
          pl.BlockSpec((9, Cout, Cout), lambda n: (0, 0, 0)),       # conv2 weights
          pl.BlockSpec((Cout, 1), lambda n: (0, 0)),                # conv2 bias
          pl.BlockSpec((1, Lv), lambda n: (0, 0)),                  # validity mask
      ],
      out_specs=pl.BlockSpec((1, Cout, L2), lambda n: (n, 0, 0)),
      scratch_shapes=[
          pltpu.VMEM((Ct, Lc), bf16),      # concat(x1_pad, up) canvas
          pltpu.VMEM((Cout, Lh1), bf16),   # conv1-output canvas (+ read slack)
      ],
      compiler_params=pltpu.CompilerParams(
          dimension_semantics=("parallel",),
          vmem_limit_bytes=vmem_limit),
      cost_estimate=pl.CostEstimate(
          flops=flops, transcendentals=0, bytes_accessed=bytes_accessed),
  )(x1f, x2e, wup_s, bup, w1t, b1, w2t, b2, mask)

  # Already NCHW; drop the 2 canvas gap columns per row with a cheap XLA slice.
  return out.reshape(N, Cout, Hv, Wc)[:, :, :, :Wv]


# --------------------------- Pure-JAX reference ------------------------------

def ref_forward(params, inputs1, inputs2, padding=1):
  """Mirrors the kernel's bf16 operand / bf16 intermediate roundings."""
  f32, bf16 = jnp.float32, jnp.bfloat16
  hi = jax.lax.Precision.HIGHEST
  rnd = lambda a: a.astype(bf16).astype(f32)

  x1 = rnd(jnp.transpose(inputs1, (0, 2, 3, 1)))
  x2 = rnd(jnp.transpose(inputs2, (0, 2, 3, 1)))
  # ConvTranspose2d(k=2, s=2)
  t = jnp.einsum('nhwi,iojk->nhjwko', x2, rnd(params['up_w']), precision=hi)
  N, H2, _, W2, _, Co = t.shape
  out2 = t.reshape(N, 2 * H2, 2 * W2, Co) + params['up_b'].astype(f32)
  out2 = rnd(out2)                                   # canvas is bf16
  o2 = (out2.shape[1] - x1.shape[1]) // 2
  out1 = jnp.pad(x1, ((0, 0), (o2, o2), (o2, o2), (0, 0)))
  cat = jnp.concatenate([out1, out2], axis=-1)

  def conv(x, w, b):
    y = jax.lax.conv_general_dilated(
        x, jnp.transpose(rnd(w), (2, 3, 1, 0)), window_strides=(1, 1),
        padding=[(padding, padding), (padding, padding)],
        dimension_numbers=('NHWC', 'HWIO', 'NHWC'), precision=hi)
    return jnp.maximum(y + b.astype(jnp.float32), 0.0)

  h = rnd(conv(cat, params['conv1_w'], params['conv1_b']))   # h1 canvas is bf16
  h = conv(h, params['conv2_w'], params['conv2_b'])
  return jnp.transpose(h, (0, 3, 1, 2))


# ----------------------------------- Main -------------------------------------

if __name__ == "__main__":
  in_size, out_size, padding = 16, 8, 1
  N, H1, W1 = 2, 16, 16
  H2, W2 = H1 // 2, W1 // 2

  key = jax.random.PRNGKey(0)
  ks = jax.random.split(key, 8)
  params = {
      # PyTorch parameter shapes:
      'up_w': 0.1 * jax.random.normal(ks[0], (in_size, out_size, 2, 2), jnp.float32),
      'up_b': 0.1 * jax.random.normal(ks[1], (out_size,), jnp.float32),
      'conv1_w': 0.1 * jax.random.normal(ks[2], (out_size, in_size, 3, 3), jnp.float32),
      'conv1_b': 0.1 * jax.random.normal(ks[3], (out_size,), jnp.float32),
      'conv2_w': 0.1 * jax.random.normal(ks[4], (out_size, out_size, 3, 3), jnp.float32),
      'conv2_b': 0.1 * jax.random.normal(ks[5], (out_size,), jnp.float32),
  }
  # skip connection has (in_size - out_size) channels so that after the concat
  # with the upsampled path conv1 sees in_size input channels.
  inputs1 = jax.random.normal(ks[6], (N, in_size - out_size, H1, W1), jnp.float32)
  inputs2 = jax.random.normal(ks[7], (N, in_size, H2, W2), jnp.float32)

  out = jax.block_until_ready(unet_up_forward(params, inputs1, inputs2, padding))
  ref = jax.block_until_ready(ref_forward(params, inputs1, inputs2, padding))

  assert out.shape == (N, out_size, H1, W1), out.shape
  max_err = float(jnp.max(jnp.abs(out - ref)))
  assert jnp.allclose(out, ref, atol=2e-3, rtol=2e-3), max_err
  print("KERNEL_OK")
</pallas_src>

<mosaic_0001>
module attributes {stable_mosaic.version = 11 : i64} {
  func.func @_fused_unet_up_kernel(%arg0: i32, %arg1: memref<1x8x256xbf16, #tpu.memory_space<vmem>>, %arg2: memref<1x16x128xbf16, #tpu.memory_space<vmem>>, %arg3: memref<32x16xbf16, #tpu.memory_space<vmem>>, %arg4: memref<8x1xf32, #tpu.memory_space<vmem>>, %arg5: memref<9x8x16xbf16, #tpu.memory_space<vmem>>, %arg6: memref<8x1xf32, #tpu.memory_space<vmem>>, %arg7: memref<9x8x8xbf16, #tpu.memory_space<vmem>>, %arg8: memref<8x1xf32, #tpu.memory_space<vmem>>, %arg9: memref<1x286xf32, #tpu.memory_space<vmem>>, %arg10: memref<1x8x288xf32, #tpu.memory_space<vmem>>, %arg11: memref<16x324xbf16, #tpu.memory_space<vmem>>, %arg12: memref<8x452xbf16, #tpu.memory_space<vmem>>) attributes {dimension_semantics = [#tpu.dimension_semantics<parallel>], iteration_bounds = array<i64: 2>, scalar_prefetch = 0 : i64, scratch_operands = 2 : i64, tpu.core_type = #tpu.core_type<tc>, window_params = [{transform_indices = @transform_0, window_bounds = array<i64: 1, 8, 256>}, {transform_indices = @transform_1, window_bounds = array<i64: 1, 16, 128>}, {pipeline_mode = #tpu.pipeline_mode<synchronous>, transform_indices = @transform_2, window_bounds = array<i64: 32, 16>}, {pipeline_mode = #tpu.pipeline_mode<synchronous>, transform_indices = @transform_3, window_bounds = array<i64: 8, 1>}, {pipeline_mode = #tpu.pipeline_mode<synchronous>, transform_indices = @transform_4, window_bounds = array<i64: 9, 8, 16>}, {pipeline_mode = #tpu.pipeline_mode<synchronous>, transform_indices = @transform_5, window_bounds = array<i64: 8, 1>}, {pipeline_mode = #tpu.pipeline_mode<synchronous>, transform_indices = @transform_6, window_bounds = array<i64: 9, 8, 8>}, {pipeline_mode = #tpu.pipeline_mode<synchronous>, transform_indices = @transform_7, window_bounds = array<i64: 8, 1>}, {pipeline_mode = #tpu.pipeline_mode<synchronous>, transform_indices = @transform_8, window_bounds = array<i64: 1, 286>}, {transform_indices = @transform_9, window_bounds = array<i64: 1, 8, 288>}]} {
    %cst = arith.constant 0.000000e+00 : bf16
    %0 = vector.broadcast %cst : bf16 to vector<16x324xbf16>
    %c0 = arith.constant 0 : index
    %c0_0 = arith.constant 0 : index
    %1 = vector.load %arg11[%c0, %c0_0] : memref<16x324xbf16, #tpu.memory_space<vmem>>, vector<16x324xbf16>
    tpu.vector_store %arg11[%c0, %c0_0], %0 {strides = array<i32>} : memref<16x324xbf16, #tpu.memory_space<vmem>>, vector<16x324xbf16>,
    %cst_1 = arith.constant 0.000000e+00 : bf16
    %2 = vector.broadcast %cst_1 : bf16 to vector<8x19xbf16>
    %c0_2 = arith.constant 0 : index
    %c0_3 = arith.constant 0 : index
    %3 = vector.load %arg12[%c0_2, %c0_3] : memref<8x452xbf16, #tpu.memory_space<vmem>>, vector<8x19xbf16>
    tpu.vector_store %arg12[%c0_2, %c0_3], %2 {strides = array<i32>} : memref<8x452xbf16, #tpu.memory_space<vmem>>, vector<8x19xbf16>,
    %cst_4 = arith.constant 0.000000e+00 : bf16
    %4 = vector.broadcast %cst_4 : bf16 to vector<8x147xbf16>
    %c0_5 = arith.constant 0 : index
    %c305 = arith.constant 305 : index
    %5 = vector.load %arg12[%c0_5, %c305] : memref<8x452xbf16, #tpu.memory_space<vmem>>, vector<8x147xbf16>
    tpu.vector_store %arg12[%c0_5, %c305], %4 {strides = array<i32>} : memref<8x452xbf16, #tpu.memory_space<vmem>>, vector<8x147xbf16>,
    %c0_6 = arith.constant 0 : index
    %c0_7 = arith.constant 0 : index
    %c0_8 = arith.constant 0 : index
    %6 = vector.load %arg1[%c0_6, %c0_7, %c0_8] : memref<1x8x256xbf16, #tpu.memory_space<vmem>>, vector<1x8x16xbf16>
    %7 = vector.shape_cast %6 : vector<1x8x16xbf16> to vector<8x16xbf16>
    %c0_9 = arith.constant 0 : index
    %c19 = arith.constant 19 : index
    %8 = vector.load %arg11[%c0_9, %c19] : memref<16x324xbf16, #tpu.memory_space<vmem>>, vector<8x16xbf16>
    tpu.vector_store %arg11[%c0_9, %c19], %7 {strides = array<i32>} : memref<16x324xbf16, #tpu.memory_space<vmem>>, vector<8x16xbf16>,
    %c0_10 = arith.constant 0 : index
    %c0_11 = arith.constant 0 : index
    %c16 = arith.constant 16 : index
    %9 = vector.load %arg1[%c0_10, %c0_11, %c16] : memref<1x8x256xbf16, #tpu.memory_space<vmem>>, vector<1x8x16xbf16>
    %10 = vector.shape_cast %9 : vector<1x8x16xbf16> to vector<8x16xbf16>
    %c0_12 = arith.constant 0 : index
    %c37 = arith.constant 37 : index
    %11 = vector.load %arg11[%c0_12, %c37] : memref<16x324xbf16, #tpu.memory_space<vmem>>, vector<8x16xbf16>
    tpu.vector_store %arg11[%c0_12, %c37], %10 {strides = array<i32>} : memref<16x324xbf16, #tpu.memory_space<vmem>>, vector<8x16xbf16>,
    %c0_13 = arith.constant 0 : index
    %c0_14 = arith.constant 0 : index
    %c32 = arith.constant 32 : index
    %12 = vector.load %arg1[%c0_13, %c0_14, %c32] : memref<1x8x256xbf16, #tpu.memory_space<vmem>>, vector<1x8x16xbf16>
    %13 = vector.shape_cast %12 : vector<1x8x16xbf16> to vector<8x16xbf16>
    %c0_15 = arith.constant 0 : index
    %c55 = arith.constant 55 : index
    %14 = vector.load %arg11[%c0_15, %c55] : memref<16x324xbf16, #tpu.memory_space<vmem>>, vector<8x16xbf16>
    tpu.vector_store %arg11[%c0_15, %c55], %13 {strides = array<i32>} : memref<16x324xbf16, #tpu.memory_space<vmem>>, vector<8x16xbf16>,
    %c0_16 = arith.constant 0 : index
    %c0_17 = arith.constant 0 : index
    %c48 = arith.constant 48 : index
    %15 = vector.load %arg1[%c0_16, %c0_17, %c48] : memref<1x8x256xbf16, #tpu.memory_space<vmem>>, vector<1x8x16xbf16>
    %16 = vector.shape_cast %15 : vector<1x8x16xbf16> to vector<8x16xbf16>
    %c0_18 = arith.constant 0 : index
    %c73 = arith.constant 73 : index
    %17 = vector.load %arg11[%c0_18, %c73] : memref<16x324xbf16, #tpu.memory_space<vmem>>, vector<8x16xbf16>
    tpu.vector_store %arg11[%c0_18, %c73], %16 {strides = array<i32>} : memref<16x324xbf16, #tpu.memory_space<vmem>>, vector<8x16xbf16>,
    %c0_19 = arith.constant 0 : index
    %c0_20 = arith.constant 0 : index
    %c64 = arith.constant 64 : index
    %18 = vector.load %arg1[%c0_19, %c0_20, %c64] : memref<1x8x256xbf16, #tpu.memory_space<vmem>>, vector<1x8x16xbf16>
    %19 = vector.shape_cast %18 : vector<1x8x16xbf16> to vector<8x16xbf16>
    %c0_21 = arith.constant 0 : index
    %c91 = arith.constant 91 : index
    %20 = vector.load %arg11[%c0_21, %c91] : memref<16x324xbf16, #tpu.memory_space<vmem>>, vector<8x16xbf16>
    tpu.vector_store %arg11[%c0_21, %c91], %19 {strides = array<i32>} : memref<16x324xbf16, #tpu.memory_space<vmem>>, vector<8x16xbf16>,
    %c0_22 = arith.constant 0 : index
    %c0_23 = arith.constant 0 : index
    %c80 = arith.constant 80 : index
    %21 = vector.load %arg1[%c0_22, %c0_23, %c80] : memref<1x8x256xbf16, #tpu.memory_space<vmem>>, vector<1x8x16xbf16>
    %22 = vector.shape_cast %21 : vector<1x8x16xbf16> to vector<8x16xbf16>
    %c0_24 = arith.constant 0 : index
    %c109 = arith.constant 109 : index
    %23 = vector.load %arg11[%c0_24, %c109] : memref<16x324xbf16, #tpu.memory_space<vmem>>, vector<8x16xbf16>
    tpu.vector_store %arg11[%c0_24, %c109], %22 {strides = array<i32>} : memref<16x324xbf16, #tpu.memory_space<vmem>>, vector<8x16xbf16>,
    %c0_25 = arith.constant 0 : index
    %c0_26 = arith.constant 0 : index
    %c96 = arith.constant 96 : index
    %24 = vector.load %arg1[%c0_25, %c0_26, %c96] : memref<1x8x256xbf16, #tpu.memory_space<vmem>>, vector<1x8x16xbf16>
    %25 = vector.shape_cast %24 : vector<1x8x16xbf16> to vector<8x16xbf16>
    %c0_27 = arith.constant 0 : index
    %c127 = arith.constant 127 : index
    %26 = vector.load %arg11[%c0_27, %c127] : memref<16x324xbf16, #tpu.memory_space<vmem>>, vector<8x16xbf16>
    tpu.vector_store %arg11[%c0_27, %c127], %25 {strides = array<i32>} : memref<16x324xbf16, #tpu.memory_space<vmem>>, vector<8x16xbf16>,
    %c0_28 = arith.constant 0 : index
    %c0_29 = arith.constant 0 : index
    %c112 = arith.constant 112 : index
    %27 = vector.load %arg1[%c0_28, %c0_29, %c112] : memref<1x8x256xbf16, #tpu.memory_space<vmem>>, vector<1x8x16xbf16>
    %28 = vector.shape_cast %27 : vector<1x8x16xbf16> to vector<8x16xbf16>
    %c0_30 = arith.constant 0 : index
    %c145 = arith.constant 145 : index
    %29 = vector.load %arg11[%c0_30, %c145] : memref<16x324xbf16, #tpu.memory_space<vmem>>, vector<8x16xbf16>
    tpu.vector_store %arg11[%c0_30, %c145], %28 {strides = array<i32>} : memref<16x324xbf16, #tpu.memory_space<vmem>>, vector<8x16xbf16>,
    %c0_31 = arith.constant 0 : index
    %c0_32 = arith.constant 0 : index
    %c128 = arith.constant 128 : index
    %30 = vector.load %arg1[%c0_31, %c0_32, %c128] : memref<1x8x256xbf16, #tpu.memory_space<vmem>>, vector<1x8x16xbf16>
    %31 = vector.shape_cast %30 : vector<1x8x16xbf16> to vector<8x16xbf16>
    %c0_33 = arith.constant 0 : index
    %c163 = arith.constant 163 : index
    %32 = vector.load %arg11[%c0_33, %c163] : memref<16x324xbf16, #tpu.memory_space<vmem>>, vector<8x16xbf16>
    tpu.vector_store %arg11[%c0_33, %c163], %31 {strides = array<i32>} : memref<16x324xbf16, #tpu.memory_space<vmem>>, vector<8x16xbf16>,
    %c0_34 = arith.constant 0 : index
    %c0_35 = arith.constant 0 : index
    %c144 = arith.constant 144 : index
    %33 = vector.load %arg1[%c0_34, %c0_35, %c144] : memref<1x8x256xbf16, #tpu.memory_space<vmem>>, vector<1x8x16xbf16>
    %34 = vector.shape_cast %33 : vector<1x8x16xbf16> to vector<8x16xbf16>
    %c0_36 = arith.constant 0 : index
    %c181 = arith.constant 181 : index
    %35 = vector.load %arg11[%c0_36, %c181] : memref<16x324xbf16, #tpu.memory_space<vmem>>, vector<8x16xbf16>
    tpu.vector_store %arg11[%c0_36, %c181], %34 {strides = array<i32>} : memref<16x324xbf16, #tpu.memory_space<vmem>>, vector<8x16xbf16>,
    %c0_37 = arith.constant 0 : index
    %c0_38 = arith.constant 0 : index
    %c160 = arith.constant 160 : index
    %36 = vector.load %arg1[%c0_37, %c0_38, %c160] : memref<1x8x256xbf16, #tpu.memory_space<vmem>>, vector<1x8x16xbf16>
    %37 = vector.shape_cast %36 : vector<1x8x16xbf16> to vector<8x16xbf16>
    %c0_39 = arith.constant 0 : index
    %c199 = arith.constant 199 : index
    %38 = vector.load %arg11[%c0_39, %c199] : memref<16x324xbf16, #tpu.memory_space<vmem>>, vector<8x16xbf16>
    tpu.vector_store %arg11[%c0_39, %c199], %37 {strides = array<i32>} : memref<16x324xbf16, #tpu.memory_space<vmem>>, vector<8x16xbf16>,
    %c0_40 = arith.constant 0 : index
    %c0_41 = arith.constant 0 : index
    %c176 = arith.constant 176 : index
    %39 = vector.load %arg1[%c0_40, %c0_41, %c176] : memref<1x8x256xbf16, #tpu.memory_space<vmem>>, vector<1x8x16xbf16>
    %40 = vector.shape_cast %39 : vector<1x8x16xbf16> to vector<8x16xbf16>
    %c0_42 = arith.constant 0 : index
    %c217 = arith.constant 217 : index
    %41 = vector.load %arg11[%c0_42, %c217] : memref<16x324xbf16, #tpu.memory_space<vmem>>, vector<8x16xbf16>
    tpu.vector_store %arg11[%c0_42, %c217], %40 {strides = array<i32>} : memref<16x324xbf16, #tpu.memory_space<vmem>>, vector<8x16xbf16>,
    %c0_43 = arith.constant 0 : index
    %c0_44 = arith.constant 0 : index
    %c192 = arith.constant 192 : index
    %42 = vector.load %arg1[%c0_43, %c0_44, %c192] : memref<1x8x256xbf16, #tpu.memory_space<vmem>>, vector<1x8x16xbf16>
    %43 = vector.shape_cast %42 : vector<1x8x16xbf16> to vector<8x16xbf16>
    %c0_45 = arith.constant 0 : index
    %c235 = arith.constant 235 : index
    %44 = vector.load %arg11[%c0_45, %c235] : memref<16x324xbf16, #tpu.memory_space<vmem>>, vector<8x16xbf16>
    tpu.vector_store %arg11[%c0_45, %c235], %43 {strides = array<i32>} : memref<16x324xbf16, #tpu.memory_space<vmem>>, vector<8x16xbf16>,
    %c0_46 = arith.constant 0 : index
    %c0_47 = arith.constant 0 : index
    %c208 = arith.constant 208 : index
    %45 = vector.load %arg1[%c0_46, %c0_47, %c208] : memref<1x8x256xbf16, #tpu.memory_space<vmem>>, vector<1x8x16xbf16>
    %46 = vector.shape_cast %45 : vector<1x8x16xbf16> to vector<8x16xbf16>
    %c0_48 = arith.constant 0 : index
    %c253 = arith.constant 253 : index
    %47 = vector.load %arg11[%c0_48, %c253] : memref<16x324xbf16, #tpu.memory_space<vmem>>, vector<8x16xbf16>
    tpu.vector_store %arg11[%c0_48, %c253], %46 {strides = array<i32>} : memref<16x324xbf16, #tpu.memory_space<vmem>>, vector<8x16xbf16>,
    %c0_49 = arith.constant 0 : index
    %c0_50 = arith.constant 0 : index
    %c224 = arith.constant 224 : index
    %48 = vector.load %arg1[%c0_49, %c0_50, %c224] : memref<1x8x256xbf16, #tpu.memory_space<vmem>>, vector<1x8x16xbf16>
    %49 = vector.shape_cast %48 : vector<1x8x16xbf16> to vector<8x16xbf16>
    %c0_51 = arith.constant 0 : index
    %c271 = arith.constant 271 : index
    %50 = vector.load %arg11[%c0_51, %c271] : memref<16x324xbf16, #tpu.memory_space<vmem>>, vector<8x16xbf16>
    tpu.vector_store %arg11[%c0_51, %c271], %49 {strides = array<i32>} : memref<16x324xbf16, #tpu.memory_space<vmem>>, vector<8x16xbf16>,
    %c0_52 = arith.constant 0 : index
    %c0_53 = arith.constant 0 : index
    %c240 = arith.constant 240 : index
    %51 = vector.load %arg1[%c0_52, %c0_53, %c240] : memref<1x8x256xbf16, #tpu.memory_space<vmem>>, vector<1x8x16xbf16>
    %52 = vector.shape_cast %51 : vector<1x8x16xbf16> to vector<8x16xbf16>
    %c0_54 = arith.constant 0 : index
    %c289 = arith.constant 289 : index
    %53 = vector.load %arg11[%c0_54, %c289] : memref<16x324xbf16, #tpu.memory_space<vmem>>, vector<8x16xbf16>
    tpu.vector_store %arg11[%c0_54, %c289], %52 {strides = array<i32>} : memref<16x324xbf16, #tpu.memory_space<vmem>>, vector<8x16xbf16>,
    %c0_55 = arith.constant 0 : index
    %c0_56 = arith.constant 0 : index
    %54 = vector.load %arg3[%c0_55, %c0_56] : memref<32x16xbf16, #tpu.memory_space<vmem>>, vector<32x16xbf16>
    %c0_57 = arith.constant 0 : index
    %c0_58 = arith.constant 0 : index
    %c0_59 = arith.constant 0 : index
    %55 = vector.load %arg2[%c0_57, %c0_58, %c0_59] : memref<1x16x128xbf16, #tpu.memory_space<vmem>>, vector<1x16x128xbf16>
    %56 = vector.shape_cast %55 : vector<1x16x128xbf16> to vector<16x128xbf16>
    %cst_60 = arith.constant dense<0.000000e+00> : vector<32x128xf32>
    %57 = tpu.matmul %54, %56, %cst_60 {dimension_numbers = #tpu.dot_dimension_numbers<[1], [0], [0], [1], [0, 0, 1, 1], [], []>} : vector<32x16xbf16>, vector<16x128xbf16>, vector<32x128xf32> -> vector<32x128xf32>
    %58 = tpu.iota {dimensions = array<i32: 1>} : vector<8x128xi32>
    %c1_i32 = arith.constant 1 : i32
    %59 = vector.broadcast %c1_i32 : i32 to vector<8x128xi32>
    %60 = arith.andi %58, %59 : vector<8x128xi32>
    %c0_i32 = arith.constant 0 : i32
    %61 = vector.broadcast %c0_i32 : i32 to vector<8x128xi32>
    %62 = arith.cmpi eq, %60, %61 : vector<8x128xi32>
    %c0_61 = arith.constant 0 : index
    %c0_62 = arith.constant 0 : index
    %63 = vector.load %arg4[%c0_61, %c0_62] : memref<8x1xf32, #tpu.memory_space<vmem>>, vector<8x1xf32>
    %64 = vector.extract_strided_slice %57 {offsets = [0, 0], sizes = [8, 128], strides = [1, 1]} : vector<32x128xf32> to vector<8x128xf32>
    %65 = vector.extract_strided_slice %57 {offsets = [8, 0], sizes = [8, 128], strides = [1, 1]} : vector<32x128xf32> to vector<8x128xf32>
    %66 = arith.select %62, %64, %65 : vector<8x128xi1>, vector<8x128xf32>
    %67 = vector.broadcast %63 : vector<8x1xf32> to vector<8x128xf32>
    %68 = arith.addf %66, %67 : vector<8x128xf32>
    %69 = arith.truncf %68 : vector<8x128xf32> to vector<8x128xbf16>
    %70 = vector.extract_strided_slice %57 {offsets = [16, 0], sizes = [8, 128], strides = [1, 1]} : vector<32x128xf32> to vector<8x128xf32>
    %71 = vector.extract_strided_slice %57 {offsets = [24, 0], sizes = [8, 128], strides = [1, 1]} : vector<32x128xf32> to vector<8x128xf32>
    %72 = arith.select %62, %70, %71 : vector<8x128xi1>, vector<8x128xf32>
    %73 = vector.broadcast %63 : vector<8x1xf32> to vector<8x128xf32>
    %74 = arith.addf %72, %73 : vector<8x128xf32>
    %75 = arith.truncf %74 : vector<8x128xf32> to vector<8x128xbf16>
    %76 = vector.extract_strided_slice %69 {offsets = [0, 0], sizes = [8, 16], strides = [1, 1]} : vector<8x128xbf16> to vector<8x16xbf16>
    %c8 = arith.constant 8 : index
    %c19_63 = arith.constant 19 : index
    %77 = vector.load %arg11[%c8, %c19_63] : memref<16x324xbf16, #tpu.memory_space<vmem>>, vector<8x16xbf16>
    tpu.vector_store %arg11[%c8, %c19_63], %76 {strides = array<i32>} : memref<16x324xbf16, #tpu.memory_space<vmem>>, vector<8x16xbf16>,
    %78 = vector.extract_strided_slice %75 {offsets = [0, 0], sizes = [8, 16], strides = [1, 1]} : vector<8x128xbf16> to vector<8x16xbf16>
    %c8_64 = arith.constant 8 : index
    %c37_65 = arith.constant 37 : index
    %79 = vector.load %arg11[%c8_64, %c37_65] : memref<16x324xbf16, #tpu.memory_space<vmem>>, vector<8x16xbf16>
    tpu.vector_store %arg11[%c8_64, %c37_65], %78 {strides = array<i32>} : memref<16x324xbf16, #tpu.memory_space<vmem>>, vector<8x16xbf16>,
    %80 = vector.extract_strided_slice %69 {offsets = [0, 16], sizes = [8, 16], strides = [1, 1]} : vector<8x128xbf16> to vector<8x16xbf16>
    %c8_66 = arith.constant 8 : index
    %c55_67 = arith.constant 55 : index
    %81 = vector.load %arg11[%c8_66, %c55_67] : memref<16x324xbf16, #tpu.memory_space<vmem>>, vector<8x16xbf16>
    tpu.vector_store %arg11[%c8_66, %c55_67], %80 {strides = array<i32>} : memref<16x324xbf16, #tpu.memory_space<vmem>>, vector<8x16xbf16>,
    %82 = vector.extract_strided_slice %75 {offsets = [0, 16], sizes = [8, 16], strides = [1, 1]} : vector<8x128xbf16> to vector<8x16xbf16>
    %c8_68 = arith.constant 8 : index
    %c73_69 = arith.constant 73 : index
    %83 = vector.load %arg11[%c8_68, %c73_69] : memref<16x324xbf16, #tpu.memory_space<vmem>>, vector<8x16xbf16>
    tpu.vector_store %arg11[%c8_68, %c73_69], %82 {strides = array<i32>} : memref<16x324xbf16, #tpu.memory_space<vmem>>, vector<8x16xbf16>,
    %84 = vector.extract_strided_slice %69 {offsets = [0, 32], sizes = [8, 16], strides = [1, 1]} : vector<8x128xbf16> to vector<8x16xbf16>
    %c8_70 = arith.constant 8 : index
    %c91_71 = arith.constant 91 : index
    %85 = vector.load %arg11[%c8_70, %c91_71] : memref<16x324xbf16, #tpu.memory_space<vmem>>, vector<8x16xbf16>
    tpu.vector_store %arg11[%c8_70, %c91_71], %84 {strides = array<i32>} : memref<16x324xbf16, #tpu.memory_space<vmem>>, vector<8x16xbf16>,
    %86 = vector.extract_strided_slice %75 {offsets = [0, 32], sizes = [8, 16], strides = [1, 1]} : vector<8x128xbf16> to vector<8x16xbf16>
    %c8_72 = arith.constant 8 : index
    %c109_73 = arith.constant 109 : index
    %87 = vector.load %arg11[%c8_72, %c109_73] : memref<16x324xbf16, #tpu.memory_space<vmem>>, vector<8x16xbf16>
    tpu.vector_store %arg11[%c8_72, %c109_73], %86 {strides = array<i32>} : memref<16x324xbf16, #tpu.memory_space<vmem>>, vector<8x16xbf16>,
    %88 = vector.extract_strided_slice %69 {offsets = [0, 48], sizes = [8, 16], strides = [1, 1]} : vector<8x128xbf16> to vector<8x16xbf16>
    %c8_74 = arith.constant 8 : index
    %c127_75 = arith.constant 127 : index
    %89 = vector.load %arg11[%c8_74, %c127_75] : memref<16x324xbf16, #tpu.memory_space<vmem>>, vector<8x16xbf16>
    tpu.vector_store %arg11[%c8_74, %c127_75], %88 {strides = array<i32>} : memref<16x324xbf16, #tpu.memory_space<vmem>>, vector<8x16xbf16>,
    %90 = vector.extract_strided_slice %75 {offsets = [0, 48], sizes = [8, 16], strides = [1, 1]} : vector<8x128xbf16> to vector<8x16xbf16>
    %c8_76 = arith.constant 8 : index
    %c145_77 = arith.constant 145 : index
    %91 = vector.load %arg11[%c8_76, %c145_77] : memref<16x324xbf16, #tpu.memory_space<vmem>>, vector<8x16xbf16>
    tpu.vector_store %arg11[%c8_76, %c145_77], %90 {strides = array<i32>} : memref<16x324xbf16, #tpu.memory_space<vmem>>, vector<8x16xbf16>,
    %92 = vector.extract_strided_slice %69 {offsets = [0, 64], sizes = [8, 16], strides = [1, 1]} : vector<8x128xbf16> to vector<8x16xbf16>
    %c8_78 = arith.constant 8 : index
    %c163_79 = arith.constant 163 : index
    %93 = vector.load %arg11[%c8_78, %c163_79] : memref<16x324xbf16, #tpu.memory_space<vmem>>, vector<8x16xbf16>
    tpu.vector_store %arg11[%c8_78, %c163_79], %92 {strides = array<i32>} : memref<16x324xbf16, #tpu.memory_space<vmem>>, vector<8x16xbf16>,
    %94 = vector.extract_strided_slice %75 {offsets = [0, 64], sizes = [8, 16], strides = [1, 1]} : vector<8x128xbf16> to vector<8x16xbf16>
    %c8_80 = arith.constant 8 : index
    %c181_81 = arith.constant 181 : index
    %95 = vector.load %arg11[%c8_80, %c181_81] : memref<16x324xbf16, #tpu.memory_space<vmem>>, vector<8x16xbf16>
    tpu.vector_store %arg11[%c8_80, %c181_81], %94 {strides = array<i32>} : memref<16x324xbf16, #tpu.memory_space<vmem>>, vector<8x16xbf16>,
    %96 = vector.extract_strided_slice %69 {offsets = [0, 80], sizes = [8, 16], strides = [1, 1]} : vector<8x128xbf16> to vector<8x16xbf16>
    %c8_82 = arith.constant 8 : index
    %c199_83 = arith.constant 199 : index
    %97 = vector.load %arg11[%c8_82, %c199_83] : memref<16x324xbf16, #tpu.memory_space<vmem>>, vector<8x16xbf16>
    tpu.vector_store %arg11[%c8_82, %c199_83], %96 {strides = array<i32>} : memref<16x324xbf16, #tpu.memory_space<vmem>>, vector<8x16xbf16>,
    %98 = vector.extract_strided_slice %75 {offsets = [0, 80], sizes = [8, 16], strides = [1, 1]} : vector<8x128xbf16> to vector<8x16xbf16>
    %c8_84 = arith.constant 8 : index
    %c217_85 = arith.constant 217 : index
    %99 = vector.load %arg11[%c8_84, %c217_85] : memref<16x324xbf16, #tpu.memory_space<vmem>>, vector<8x16xbf16>
    tpu.vector_store %arg11[%c8_84, %c217_85], %98 {strides = array<i32>} : memref<16x324xbf16, #tpu.memory_space<vmem>>, vector<8x16xbf16>,
    %100 = vector.extract_strided_slice %69 {offsets = [0, 96], sizes = [8, 16], strides = [1, 1]} : vector<8x128xbf16> to vector<8x16xbf16>
    %c8_86 = arith.constant 8 : index
    %c235_87 = arith.constant 235 : index
    %101 = vector.load %arg11[%c8_86, %c235_87] : memref<16x324xbf16, #tpu.memory_space<vmem>>, vector<8x16xbf16>
    tpu.vector_store %arg11[%c8_86, %c235_87], %100 {strides = array<i32>} : memref<16x324xbf16, #tpu.memory_space<vmem>>, vector<8x16xbf16>,
    %102 = vector.extract_strided_slice %75 {offsets = [0, 96], sizes = [8, 16], strides = [1, 1]} : vector<8x128xbf16> to vector<8x16xbf16>
    %c8_88 = arith.constant 8 : index
    %c253_89 = arith.constant 253 : index
    %103 = vector.load %arg11[%c8_88, %c253_89] : memref<16x324xbf16, #tpu.memory_space<vmem>>, vector<8x16xbf16>
    tpu.vector_store %arg11[%c8_88, %c253_89], %102 {strides = array<i32>} : memref<16x324xbf16, #tpu.memory_space<vmem>>, vector<8x16xbf16>,
    %104 = vector.extract_strided_slice %69 {offsets = [0, 112], sizes = [8, 16], strides = [1, 1]} : vector<8x128xbf16> to vector<8x16xbf16>
    %c8_90 = arith.constant 8 : index
    %c271_91 = arith.constant 271 : index
    %105 = vector.load %arg11[%c8_90, %c271_91] : memref<16x324xbf16, #tpu.memory_space<vmem>>, vector<8x16xbf16>
    tpu.vector_store %arg11[%c8_90, %c271_91], %104 {strides = array<i32>} : memref<16x324xbf16, #tpu.memory_space<vmem>>, vector<8x16xbf16>,
    %106 = vector.extract_strided_slice %75 {offsets = [0, 112], sizes = [8, 16], strides = [1, 1]} : vector<8x128xbf16> to vector<8x16xbf16>
    %c8_92 = arith.constant 8 : index
    %c289_93 = arith.constant 289 : index
    %107 = vector.load %arg11[%c8_92, %c289_93] : memref<16x324xbf16, #tpu.memory_space<vmem>>, vector<8x16xbf16>
    tpu.vector_store %arg11[%c8_92, %c289_93], %106 {strides = array<i32>} : memref<16x324xbf16, #tpu.memory_space<vmem>>, vector<8x16xbf16>,
    %cst_94 = arith.constant 0.000000e+00 : f32
    %108 = vector.broadcast %cst_94 : f32 to vector<8x286xf32>
    %c0_95 = arith.constant 0 : index
    %c0_96 = arith.constant 0 : index
    %c0_97 = arith.constant 0 : index
    %109 = vector.load %arg5[%c0_95, %c0_96, %c0_97] : memref<9x8x16xbf16, #tpu.memory_space<vmem>>, vector<1x8x16xbf16>
    %110 = vector.shape_cast %109 : vector<1x8x16xbf16> to vector<8x16xbf16>
    %c0_98 = arith.constant 0 : index
    %c0_99 = arith.constant 0 : index
    %111 = vector.load %arg11[%c0_98, %c0_99] : memref<16x324xbf16, #tpu.memory_space<vmem>>, vector<16x286xbf16>
    %cst_100 = arith.constant dense<0.000000e+00> : vector<8x286xf32>
    %112 = tpu.matmul %110, %111, %cst_100 {dimension_numbers = #tpu.dot_dimension_numbers<[1], [0], [0], [1], [0, 0, 1, 1], [], []>} : vector<8x16xbf16>, vector<16x286xbf16>, vector<8x286xf32> -> vector<8x286xf32>
    %113 = arith.addf %108, %112 : vector<8x286xf32>
    %c1 = arith.constant 1 : index
    %c0_101 = arith.constant 0 : index
    %c0_102 = arith.constant 0 : index
    %114 = vector.load %arg5[%c1, %c0_101, %c0_102] : memref<9x8x16xbf16, #tpu.memory_space<vmem>>, vector<1x8x16xbf16>
    %115 = vector.shape_cast %114 : vector<1x8x16xbf16> to vector<8x16xbf16>
    %c0_103 = arith.constant 0 : index
    %c1_104 = arith.constant 1 : index
    %116 = vector.load %arg11[%c0_103, %c1_104] : memref<16x324xbf16, #tpu.memory_space<vmem>>, vector<16x286xbf16>
    %cst_105 = arith.constant dense<0.000000e+00> : vector<8x286xf32>
    %117 = tpu.matmul %115, %116, %cst_105 {dimension_numbers = #tpu.dot_dimension_numbers<[1], [0], [0], [1], [0, 0, 1, 1], [], []>} : vector<8x16xbf16>, vector<16x286xbf16>, vector<8x286xf32> -> vector<8x286xf32>
    %118 = arith.addf %113, %117 : vector<8x286xf32>
    %c2 = arith.constant 2 : index
    %c0_106 = arith.constant 0 : index
    %c0_107 = arith.constant 0 : index
    %119 = vector.load %arg5[%c2, %c0_106, %c0_107] : memref<9x8x16xbf16, #tpu.memory_space<vmem>>, vector<1x8x16xbf16>
    %120 = vector.shape_cast %119 : vector<1x8x16xbf16> to vector<8x16xbf16>
    %c0_108 = arith.constant 0 : index
    %c2_109 = arith.constant 2 : index
    %121 = vector.load %arg11[%c0_108, %c2_109] : memref<16x324xbf16, #tpu.memory_space<vmem>>, vector<16x286xbf16>
    %cst_110 = arith.constant dense<0.000000e+00> : vector<8x286xf32>
    %122 = tpu.matmul %120, %121, %cst_110 {dimension_numbers = #tpu.dot_dimension_numbers<[1], [0], [0], [1], [0, 0, 1, 1], [], []>} : vector<8x16xbf16>, vector<16x286xbf16>, vector<8x286xf32> -> vector<8x286xf32>
    %123 = arith.addf %118, %122 : vector<8x286xf32>
    %c3 = arith.constant 3 : index
    %c0_111 = arith.constant 0 : index
    %c0_112 = arith.constant 0 : index
    %124 = vector.load %arg5[%c3, %c0_111, %c0_112] : memref<9x8x16xbf16, #tpu.memory_space<vmem>>, vector<1x8x16xbf16>
    %125 = vector.shape_cast %124 : vector<1x8x16xbf16> to vector<8x16xbf16>
    %c0_113 = arith.constant 0 : index
    %c18 = arith.constant 18 : index
    %126 = vector.load %arg11[%c0_113, %c18] : memref<16x324xbf16, #tpu.memory_space<vmem>>, vector<16x286xbf16>
    %cst_114 = arith.constant dense<0.000000e+00> : vector<8x286xf32>
    %127 = tpu.matmul %125, %126, %cst_114 {dimension_numbers = #tpu.dot_dimension_numbers<[1], [0], [0], [1], [0, 0, 1, 1], [], []>} : vector<8x16xbf16>, vector<16x286xbf16>, vector<8x286xf32> -> vector<8x286xf32>
    %128 = arith.addf %123, %127 : vector<8x286xf32>
    %c4 = arith.constant 4 : index
    %c0_115 = arith.constant 0 : index
    %c0_116 = arith.constant 0 : index
    %129 = vector.load %arg5[%c4, %c0_115, %c0_116] : memref<9x8x16xbf16, #tpu.memory_space<vmem>>, vector<1x8x16xbf16>
    %130 = vector.shape_cast %129 : vector<1x8x16xbf16> to vector<8x16xbf16>
    %c0_117 = arith.constant 0 : index
    %c19_118 = arith.constant 19 : index
    %131 = vector.load %arg11[%c0_117, %c19_118] : memref<16x324xbf16, #tpu.memory_space<vmem>>, vector<16x286xbf16>
    %cst_119 = arith.constant dense<0.000000e+00> : vector<8x286xf32>
    %132 = tpu.matmul %130, %131, %cst_119 {dimension_numbers = #tpu.dot_dimension_numbers<[1], [0], [0], [1], [0, 0, 1, 1], [], []>} : vector<8x16xbf16>, vector<16x286xbf16>, vector<8x286xf32> -> vector<8x286xf32>
    %133 = arith.addf %128, %132 : vector<8x286xf32>
    %c5 = arith.constant 5 : index
    %c0_120 = arith.constant 0 : index
    %c0_121 = arith.constant 0 : index
    %134 = vector.load %arg5[%c5, %c0_120, %c0_121] : memref<9x8x16xbf16, #tpu.memory_space<vmem>>, vector<1x8x16xbf16>
    %135 = vector.shape_cast %134 : vector<1x8x16xbf16> to vector<8x16xbf16>
    %c0_122 = arith.constant 0 : index
    %c20 = arith.constant 20 : index
    %136 = vector.load %arg11[%c0_122, %c20] : memref<16x324xbf16, #tpu.memory_space<vmem>>, vector<16x286xbf16>
    %cst_123 = arith.constant dense<0.000000e+00> : vector<8x286xf32>
    %137 = tpu.matmul %135, %136, %cst_123 {dimension_numbers = #tpu.dot_dimension_numbers<[1], [0], [0], [1], [0, 0, 1, 1], [], []>} : vector<8x16xbf16>, vector<16x286xbf16>, vector<8x286xf32> -> vector<8x286xf32>
    %138 = arith.addf %133, %137 : vector<8x286xf32>
    %c6 = arith.constant 6 : index
    %c0_124 = arith.constant 0 : index
    %c0_125 = arith.constant 0 : index
    %139 = vector.load %arg5[%c6, %c0_124, %c0_125] : memref<9x8x16xbf16, #tpu.memory_space<vmem>>, vector<1x8x16xbf16>
    %140 = vector.shape_cast %139 : vector<1x8x16xbf16> to vector<8x16xbf16>
    %c0_126 = arith.constant 0 : index
    %c36 = arith.constant 36 : index
    %141 = vector.load %arg11[%c0_126, %c36] : memref<16x324xbf16, #tpu.memory_space<vmem>>, vector<16x286xbf16>
    %cst_127 = arith.constant dense<0.000000e+00> : vector<8x286xf32>
    %142 = tpu.matmul %140, %141, %cst_127 {dimension_numbers = #tpu.dot_dimension_numbers<[1], [0], [0], [1], [0, 0, 1, 1], [], []>} : vector<8x16xbf16>, vector<16x286xbf16>, vector<8x286xf32> -> vector<8x286xf32>
    %143 = arith.addf %138, %142 : vector<8x286xf32>
    %c7 = arith.constant 7 : index
    %c0_128 = arith.constant 0 : index
    %c0_129 = arith.constant 0 : index
    %144 = vector.load %arg5[%c7, %c0_128, %c0_129] : memref<9x8x16xbf16, #tpu.memory_space<vmem>>, vector<1x8x16xbf16>
    %145 = vector.shape_cast %144 : vector<1x8x16xbf16> to vector<8x16xbf16>
    %c0_130 = arith.constant 0 : index
    %c37_131 = arith.constant 37 : index
    %146 = vector.load %arg11[%c0_130, %c37_131] : memref<16x324xbf16, #tpu.memory_space<vmem>>, vector<16x286xbf16>
    %cst_132 = arith.constant dense<0.000000e+00> : vector<8x286xf32>
    %147 = tpu.matmul %145, %146, %cst_132 {dimension_numbers = #tpu.dot_dimension_numbers<[1], [0], [0], [1], [0, 0, 1, 1], [], []>} : vector<8x16xbf16>, vector<16x286xbf16>, vector<8x286xf32> -> vector<8x286xf32>
    %148 = arith.addf %143, %147 : vector<8x286xf32>
    %c8_133 = arith.constant 8 : index
    %c0_134 = arith.constant 0 : index
    %c0_135 = arith.constant 0 : index
    %149 = vector.load %arg5[%c8_133, %c0_134, %c0_135] : memref<9x8x16xbf16, #tpu.memory_space<vmem>>, vector<1x8x16xbf16>
    %150 = vector.shape_cast %149 : vector<1x8x16xbf16> to vector<8x16xbf16>
    %c0_136 = arith.constant 0 : index
    %c38 = arith.constant 38 : index
    %151 = vector.load %arg11[%c0_136, %c38] : memref<16x324xbf16, #tpu.memory_space<vmem>>, vector<16x286xbf16>
    %cst_137 = arith.constant dense<0.000000e+00> : vector<8x286xf32>
    %152 = tpu.matmul %150, %151, %cst_137 {dimension_numbers = #tpu.dot_dimension_numbers<[1], [0], [0], [1], [0, 0, 1, 1], [], []>} : vector<8x16xbf16>, vector<16x286xbf16>, vector<8x286xf32> -> vector<8x286xf32>
    %153 = arith.addf %148, %152 : vector<8x286xf32>
    %c0_138 = arith.constant 0 : index
    %c0_139 = arith.constant 0 : index
    %154 = vector.load %arg6[%c0_138, %c0_139] : memref<8x1xf32, #tpu.memory_space<vmem>>, vector<8x1xf32>
    %155 = vector.broadcast %154 : vector<8x1xf32> to vector<8x286xf32>
    %156 = arith.addf %153, %155 : vector<8x286xf32>
    %cst_140 = arith.constant 0.000000e+00 : f32
    %157 = vector.broadcast %cst_140 : f32 to vector<8x286xf32>
    %158 = arith.maximumf %156, %157 : vector<8x286xf32>
    %c0_141 = arith.constant 0 : index
    %c0_142 = arith.constant 0 : index
    %159 = vector.load %arg9[%c0_141, %c0_142] : memref<1x286xf32, #tpu.memory_space<vmem>>, vector<1x286xf32>
    %160 = vector.broadcast %159 : vector<1x286xf32> to vector<8x286xf32>
    %161 = arith.mulf %158, %160 : vector<8x286xf32>
    %162 = arith.truncf %161 : vector<8x286xf32> to vector<8x286xbf16>
    %c0_143 = arith.constant 0 : index
    %c19_144 = arith.constant 19 : index
    %163 = vector.load %arg12[%c0_143, %c19_144] : memref<8x452xbf16, #tpu.memory_space<vmem>>, vector<8x286xbf16>
    tpu.vector_store %arg12[%c0_143, %c19_144], %162 {strides = array<i32>} : memref<8x452xbf16, #tpu.memory_space<vmem>>, vector<8x286xbf16>,
    %cst_145 = arith.constant 0.000000e+00 : f32
    %164 = vector.broadcast %cst_145 : f32 to vector<8x288xf32>
    %c0_146 = arith.constant 0 : index
    %c0_147 = arith.constant 0 : index
    %c0_148 = arith.constant 0 : index
    %165 = vector.load %arg7[%c0_146, %c0_147, %c0_148] : memref<9x8x8xbf16, #tpu.memory_space<vmem>>, vector<1x8x8xbf16>
    %166 = vector.shape_cast %165 : vector<1x8x8xbf16> to vector<8x8xbf16>
    %c0_149 = arith.constant 0 : index
    %c0_150 = arith.constant 0 : index
    %167 = vector.load %arg12[%c0_149, %c0_150] : memref<8x452xbf16, #tpu.memory_space<vmem>>, vector<8x288xbf16>
    %cst_151 = arith.constant dense<0.000000e+00> : vector<8x288xf32>
    %168 = tpu.matmul %166, %167, %cst_151 {dimension_numbers = #tpu.dot_dimension_numbers<[1], [0], [0], [1], [0, 0, 1, 1], [], []>} : vector<8x8xbf16>, vector<8x288xbf16>, vector<8x288xf32> -> vector<8x288xf32>
    %169 = arith.addf %164, %168 : vector<8x288xf32>
    %c1_152 = arith.constant 1 : index
    %c0_153 = arith.constant 0 : index
    %c0_154 = arith.constant 0 : index
    %170 = vector.load %arg7[%c1_152, %c0_153, %c0_154] : memref<9x8x8xbf16, #tpu.memory_space<vmem>>, vector<1x8x8xbf16>
    %171 = vector.shape_cast %170 : vector<1x8x8xbf16> to vector<8x8xbf16>
    %c0_155 = arith.constant 0 : index
    %c1_156 = arith.constant 1 : index
    %172 = vector.load %arg12[%c0_155, %c1_156] : memref<8x452xbf16, #tpu.memory_space<vmem>>, vector<8x288xbf16>
    %cst_157 = arith.constant dense<0.000000e+00> : vector<8x288xf32>
    %173 = tpu.matmul %171, %172, %cst_157 {dimension_numbers = #tpu.dot_dimension_numbers<[1], [0], [0], [1], [0, 0, 1, 1], [], []>} : vector<8x8xbf16>, vector<8x288xbf16>, vector<8x288xf32> -> vector<8x288xf32>
    %174 = arith.addf %169, %173 : vector<8x288xf32>
    %c2_158 = arith.constant 2 : index
    %c0_159 = arith.constant 0 : index
    %c0_160 = arith.constant 0 : index
    %175 = vector.load %arg7[%c2_158, %c0_159, %c0_160] : memref<9x8x8xbf16, #tpu.memory_space<vmem>>, vector<1x8x8xbf16>
    %176 = vector.shape_cast %175 : vector<1x8x8xbf16> to vector<8x8xbf16>
    %c0_161 = arith.constant 0 : index
    %c2_162 = arith.constant 2 : index
    %177 = vector.load %arg12[%c0_161, %c2_162] : memref<8x452xbf16, #tpu.memory_space<vmem>>, vector<8x288xbf16>
    %cst_163 = arith.constant dense<0.000000e+00> : vector<8x288xf32>
    %178 = tpu.matmul %176, %177, %cst_163 {dimension_numbers = #tpu.dot_dimension_numbers<[1], [0], [0], [1], [0, 0, 1, 1], [], []>} : vector<8x8xbf16>, vector<8x288xbf16>, vector<8x288xf32> -> vector<8x288xf32>
    %179 = arith.addf %174, %178 : vector<8x288xf32>
    %c3_164 = arith.constant 3 : index
    %c0_165 = arith.constant 0 : index
    %c0_166 = arith.constant 0 : index
    %180 = vector.load %arg7[%c3_164, %c0_165, %c0_166] : memref<9x8x8xbf16, #tpu.memory_space<vmem>>, vector<1x8x8xbf16>
    %181 = vector.shape_cast %180 : vector<1x8x8xbf16> to vector<8x8xbf16>
    %c0_167 = arith.constant 0 : index
    %c18_168 = arith.constant 18 : index
    %182 = vector.load %arg12[%c0_167, %c18_168] : memref<8x452xbf16, #tpu.memory_space<vmem>>, vector<8x288xbf16>
    %cst_169 = arith.constant dense<0.000000e+00> : vector<8x288xf32>
    %183 = tpu.matmul %181, %182, %cst_169 {dimension_numbers = #tpu.dot_dimension_numbers<[1], [0], [0], [1], [0, 0, 1, 1], [], []>} : vector<8x8xbf16>, vector<8x288xbf16>, vector<8x288xf32> -> vector<8x288xf32>
    %184 = arith.addf %179, %183 : vector<8x288xf32>
    %c4_170 = arith.constant 4 : index
    %c0_171 = arith.constant 0 : index
    %c0_172 = arith.constant 0 : index
    %185 = vector.load %arg7[%c4_170, %c0_171, %c0_172] : memref<9x8x8xbf16, #tpu.memory_space<vmem>>, vector<1x8x8xbf16>
    %186 = vector.shape_cast %185 : vector<1x8x8xbf16> to vector<8x8xbf16>
    %c0_173 = arith.constant 0 : index
    %c19_174 = arith.constant 19 : index
    %187 = vector.load %arg12[%c0_173, %c19_174] : memref<8x452xbf16, #tpu.memory_space<vmem>>, vector<8x288xbf16>
    %cst_175 = arith.constant dense<0.000000e+00> : vector<8x288xf32>
    %188 = tpu.matmul %186, %187, %cst_175 {dimension_numbers = #tpu.dot_dimension_numbers<[1], [0], [0], [1], [0, 0, 1, 1], [], []>} : vector<8x8xbf16>, vector<8x288xbf16>, vector<8x288xf32> -> vector<8x288xf32>
    %189 = arith.addf %184, %188 : vector<8x288xf32>
    %c5_176 = arith.constant 5 : index
    %c0_177 = arith.constant 0 : index
    %c0_178 = arith.constant 0 : index
    %190 = vector.load %arg7[%c5_176, %c0_177, %c0_178] : memref<9x8x8xbf16, #tpu.memory_space<vmem>>, vector<1x8x8xbf16>
    %191 = vector.shape_cast %190 : vector<1x8x8xbf16> to vector<8x8xbf16>
    %c0_179 = arith.constant 0 : index
    %c20_180 = arith.constant 20 : index
    %192 = vector.load %arg12[%c0_179, %c20_180] : memref<8x452xbf16, #tpu.memory_space<vmem>>, vector<8x288xbf16>
    %cst_181 = arith.constant dense<0.000000e+00> : vector<8x288xf32>
    %193 = tpu.matmul %191, %192, %cst_181 {dimension_numbers = #tpu.dot_dimension_numbers<[1], [0], [0], [1], [0, 0, 1, 1], [], []>} : vector<8x8xbf16>, vector<8x288xbf16>, vector<8x288xf32> -> vector<8x288xf32>
    %194 = arith.addf %189, %193 : vector<8x288xf32>
    %c6_182 = arith.constant 6 : index
    %c0_183 = arith.constant 0 : index
    %c0_184 = arith.constant 0 : index
    %195 = vector.load %arg7[%c6_182, %c0_183, %c0_184] : memref<9x8x8xbf16, #tpu.memory_space<vmem>>, vector<1x8x8xbf16>
    %196 = vector.shape_cast %195 : vector<1x8x8xbf16> to vector<8x8xbf16>
    %c0_185 = arith.constant 0 : index
    %c36_186 = arith.constant 36 : index
    %197 = vector.load %arg12[%c0_185, %c36_186] : memref<8x452xbf16, #tpu.memory_space<vmem>>, vector<8x288xbf16>
    %cst_187 = arith.constant dense<0.000000e+00> : vector<8x288xf32>
    %198 = tpu.matmul %196, %197, %cst_187 {dimension_numbers = #tpu.dot_dimension_numbers<[1], [0], [0], [1], [0, 0, 1, 1], [], []>} : vector<8x8xbf16>, vector<8x288xbf16>, vector<8x288xf32> -> vector<8x288xf32>
    %199 = arith.addf %194, %198 : vector<8x288xf32>
    %c7_188 = arith.constant 7 : index
    %c0_189 = arith.constant 0 : index
    %c0_190 = arith.constant 0 : index
    %200 = vector.load %arg7[%c7_188, %c0_189, %c0_190] : memref<9x8x8xbf16, #tpu.memory_space<vmem>>, vector<1x8x8xbf16>
    %201 = vector.shape_cast %200 : vector<1x8x8xbf16> to vector<8x8xbf16>
    %c0_191 = arith.constant 0 : index
    %c37_192 = arith.constant 37 : index
    %202 = vector.load %arg12[%c0_191, %c37_192] : memref<8x452xbf16, #tpu.memory_space<vmem>>, vector<8x288xbf16>
    %cst_193 = arith.constant dense<0.000000e+00> : vector<8x288xf32>
    %203 = tpu.matmul %201, %202, %cst_193 {dimension_numbers = #tpu.dot_dimension_numbers<[1], [0], [0], [1], [0, 0, 1, 1], [], []>} : vector<8x8xbf16>, vector<8x288xbf16>, vector<8x288xf32> -> vector<8x288xf32>
    %204 = arith.addf %199, %203 : vector<8x288xf32>
    %c8_194 = arith.constant 8 : index
    %c0_195 = arith.constant 0 : index
    %c0_196 = arith.constant 0 : index
    %205 = vector.load %arg7[%c8_194, %c0_195, %c0_196] : memref<9x8x8xbf16, #tpu.memory_space<vmem>>, vector<1x8x8xbf16>
    %206 = vector.shape_cast %205 : vector<1x8x8xbf16> to vector<8x8xbf16>
    %c0_197 = arith.constant 0 : index
    %c38_198 = arith.constant 38 : index
    %207 = vector.load %arg12[%c0_197, %c38_198] : memref<8x452xbf16, #tpu.memory_space<vmem>>, vector<8x288xbf16>
    %cst_199 = arith.constant dense<0.000000e+00> : vector<8x288xf32>
    %208 = tpu.matmul %206, %207, %cst_199 {dimension_numbers = #tpu.dot_dimension_numbers<[1], [0], [0], [1], [0, 0, 1, 1], [], []>} : vector<8x8xbf16>, vector<8x288xbf16>, vector<8x288xf32> -> vector<8x288xf32>
    %209 = arith.addf %204, %208 : vector<8x288xf32>
    %c0_200 = arith.constant 0 : index
    %c0_201 = arith.constant 0 : index
    %210 = vector.load %arg8[%c0_200, %c0_201] : memref<8x1xf32, #tpu.memory_space<vmem>>, vector<8x1xf32>
    %211 = vector.broadcast %210 : vector<8x1xf32> to vector<8x288xf32>
    %212 = arith.addf %209, %211 : vector<8x288xf32>
    %cst_202 = arith.constant 0.000000e+00 : f32
    %213 = vector.broadcast %cst_202 : f32 to vector<8x288xf32>
    %214 = arith.maximumf %212, %213 : vector<8x288xf32>
    %c0_203 = arith.constant 0 : index
    %c0_204 = arith.constant 0 : index
    %c0_205 = arith.constant 0 : index
    %215 = vector.load %arg10[%c0_203, %c0_204, %c0_205] : memref<1x8x288xf32, #tpu.memory_space<vmem>>, vector<1x8x288xf32>
    %216 = vector.shape_cast %215 : vector<1x8x288xf32> to vector<8x288xf32>
    %217 = vector.shape_cast %214 : vector<8x288xf32> to vector<1x8x288xf32>
    tpu.vector_store %arg10[%c0_203, %c0_204, %c0_205], %217 {strides = array<i32>} : memref<1x8x288xf32, #tpu.memory_space<vmem>>, vector<1x8x288xf32>,
    return
  }
  func.func @transform_0(%arg0: i32) -> (i32, i32, i32) {
    %c0_i32 = arith.constant 0 : i32
    %c0_i32_0 = arith.constant 0 : i32
    %c0_i32_1 = arith.constant 0 : i32
    return %arg0, %c0_i32, %c0_i32_0 : i32, i32, i32
  }
  func.func @transform_1(%arg0: i32) -> (i32, i32, i32) {
    %c0_i32 = arith.constant 0 : i32
    %c0_i32_0 = arith.constant 0 : i32
    %c0_i32_1 = arith.constant 0 : i32
    return %arg0, %c0_i32, %c0_i32_0 : i32, i32, i32
  }
  func.func @transform_2(%arg0: i32) -> (i32, i32) {
    %c0_i32 = arith.constant 0 : i32
    %c0_i32_0 = arith.constant 0 : i32
    %c0_i32_1 = arith.constant 0 : i32
    return %c0_i32, %c0_i32_0 : i32, i32
  }
  func.func @transform_3(%arg0: i32) -> (i32, i32) {
    %c0_i32 = arith.constant 0 : i32
    %c0_i32_0 = arith.constant 0 : i32
    %c0_i32_1 = arith.constant 0 : i32
    return %c0_i32, %c0_i32_0 : i32, i32
  }
  func.func @transform_4(%arg0: i32) -> (i32, i32, i32) {
    %c0_i32 = arith.constant 0 : i32
    %c0_i32_0 = arith.constant 0 : i32
    %c0_i32_1 = arith.constant 0 : i32
    %c0_i32_2 = arith.constant 0 : i32
    return %c0_i32, %c0_i32_0, %c0_i32_1 : i32, i32, i32
  }
  func.func @transform_5(%arg0: i32) -> (i32, i32) {
    %c0_i32 = arith.constant 0 : i32
    %c0_i32_0 = arith.constant 0 : i32
    %c0_i32_1 = arith.constant 0 : i32
    return %c0_i32, %c0_i32_0 : i32, i32
  }
  func.func @transform_6(%arg0: i32) -> (i32, i32, i32) {
    %c0_i32 = arith.constant 0 : i32
    %c0_i32_0 = arith.constant 0 : i32
    %c0_i32_1 = arith.constant 0 : i32
    %c0_i32_2 = arith.constant 0 : i32
    return %c0_i32, %c0_i32_0, %c0_i32_1 : i32, i32, i32
  }
  func.func @transform_7(%arg0: i32) -> (i32, i32) {
    %c0_i32 = arith.constant 0 : i32
    %c0_i32_0 = arith.constant 0 : i32
    %c0_i32_1 = arith.constant 0 : i32
    return %c0_i32, %c0_i32_0 : i32, i32
  }
  func.func @transform_8(%arg0: i32) -> (i32, i32) {
    %c0_i32 = arith.constant 0 : i32
    %c0_i32_0 = arith.constant 0 : i32
    %c0_i32_1 = arith.constant 0 : i32
    return %c0_i32, %c0_i32_0 : i32, i32
  }
  func.func @transform_9(%arg0: i32) -> (i32, i32, i32) {
    %c0_i32 = arith.constant 0 : i32
    %c0_i32_0 = arith.constant 0 : i32
    %c0_i32_1 = arith.constant 0 : i32
    return %arg0, %c0_i32, %c0_i32_0 : i32, i32, i32
  }
}

</mosaic_0001>

<llo_original>
// kernel: tpu_custom_call.1
$region0: #{tpu_custom_call.1}
  #allocation0 [shape = 'u32[]', space=smem, size = 0x4, offset = 0x4, fixed_abs, tag = 'smem constant byte address 0x4 - core index']
  #allocation1 [shape = 'u32[144,128]{1,0:T(1,128)}', space=vmem, size = 0x12000, scoped, tag = 'internal scratch']
  #allocation2 [shape = 'bf16[16,324]{1,0:T(16,128)(2,1)}', space=vmem, size = 0x3000, scoped, tag = 'scratch operand']
  #allocation3 [shape = 'bf16[8,452]{1,0:T(8,128)(2,1)}', space=vmem, size = 0x2000, scoped, tag = 'scratch operand']
  %s0 = inlined_call_operand.vmem [shape: bf16[2,8,256], index: 0, kind: input, shape index: {}]
  %s1 = inlined_call_operand.vmem [shape: bf16[2,16,128], index: 1, kind: input, shape index: {}]
  %s2 = inlined_call_operand.vmem [shape: bf16[32,16], index: 2, kind: input, shape index: {}]
  %s3 = inlined_call_operand.vmem [shape: f32[8,1], index: 3, kind: input, shape index: {}]
  %s4 = inlined_call_operand.vmem [shape: bf16[9,8,16], index: 4, kind: input, shape index: {}]
  %s5 = inlined_call_operand.vmem [shape: f32[8,1], index: 5, kind: input, shape index: {}]
  %s6 = inlined_call_operand.vmem [shape: bf16[9,8,8], index: 6, kind: input, shape index: {}]
  %s7 = inlined_call_operand.vmem [shape: f32[8,1], index: 7, kind: input, shape index: {}]
  %s8 = inlined_call_operand.vmem [shape: f32[1,286], index: 8, kind: input, shape index: {}]
  %s9 = inlined_call_operand.hbm [shape: f32[2,8,288], index: 9, kind: output, shape index: {}]
  %s10 = sld [smem:[#allocation0]]
  $region69: #{tpu_custom_call.1} parent=0
    _
  %s12 = ssub.s32 1, %s10
  %s13 = scalar_select 0, %s12, %s10
  $region1: #{tpu_custom_call.1} parent=0
    #allocation4 [shape = 'u8[24576]{0}', space=vmem, size = 0x6000, scoped, tag = 'output window, operand 0']
    #allocation5 [shape = 's32[2]{0}', space=sflag, size = 0x8, scoped, tag = 'scoped memory for tpu_custom_call.1']
    %14 = vsyncpa [#allocation5], 0
    %s15 = scalar_lea.sflag [#allocation5], 1
    %16 = vsyncpa %s15, 0
    loop: start=0, step=1, limit=4
    $region2: #{tpu_custom_call.1} parent=1 // loop_pre_header
      _
    $region3: #{tpu_custom_call.1} parent=1 // loop_header
      %s18 = sphi 0, %s22
      %p19 = scmp.ge.s32.totalorder %s18, 4
      %s28 = sphi 0, %s30
      %s31 = sphi 0, %s28
      %s32 = sphi 0, %s31
      %s48 = sphi 0, %s32
      %s54 = sphi 0, %s56
      %s57 = sphi 0, %s54
      %s58 = sphi 0, %s57
      %s74 = sphi 0, %s58
      %s78 = sphi 0, %s78
      %s80 = sphi 0, %s78
      %s81 = sphi 0, %s80
      %s95 = sphi 0, %s81
      %s99 = sphi 0, %s99
      %s101 = sphi 0, %s99
      %s102 = sphi 0, %s101
      %s116 = sphi 0, %s102
      %s120 = sphi 0, %s120
      %s122 = sphi 0, %s120
      %s123 = sphi 0, %s122
      %s137 = sphi 0, %s123
      %s141 = sphi 0, %s141
      %s143 = sphi 0, %s141
      %s144 = sphi 0, %s143
      %s158 = sphi 0, %s144
      %s162 = sphi 0, %s162
      %s164 = sphi 0, %s162
      %s165 = sphi 0, %s164
      %s179 = sphi 0, %s165
      %s183 = sphi 0, %s183
      %s185 = sphi 0, %s183
      %s186 = sphi 0, %s185
      %s200 = sphi 0, %s186
      %s204 = sphi 0, %s204
      %s206 = sphi 0, %s204
      %s207 = sphi 0, %s206
      %s221 = sphi 0, %s207
      %s227 = sphi 0, %s229
      %s230 = sphi 0, %s227
      %s231 = sphi 0, %s230
      %s247 = sphi 0, %s231
    $region4: #{tpu_custom_call.1} parent=1 // loop_header_branch
      %21 = sbr.rel (%p19) target = $region8
    $region5: #{tpu_custom_call.1} parent=1 // loop_body
      %s23 = ssub.s32 %s18, 1
      %s24 = ssub.s32 %s18, 2
      %s25 = sadd.s32 %s18, 1
      %s26 = ssub.s32 %s18, %s25
      %p27 = scmp.eq.s32.totalorder %s26, 0
      %s29 = sadd.s32 %s28, 1
      %s30 = scalar_select %p27, %s28, %s29
      %p33 = pneg %p27
      %p34 = scmp.eq.s32.totalorder %s18, 1
      %p35 = por %p33, %p34
      %p36 = scmp.ne.s32.totalorder %s28, %s31
      %p37 = scmp.eq.s32.totalorder %s18, 0
      %p38 = por %p36, %p37
      %p39 = scmp.ne.s32.totalorder %s28, %s31
      %p40 = scmp.eq.s32.totalorder %s23, 1
      %p41 = por %p39, %p40
      %p42 = scmp.ne.s32.totalorder %s31, %s32
      %p43 = scmp.eq.s32.totalorder %s23, 0
      %p44 = por %p42, %p43
      %p45 = scmp.ne.s32.totalorder %s31, %s32
      %p46 = scmp.eq.s32.totalorder %s24, 1
      %p47 = por %p45, %p46
      %p49 = scmp.ne.s32.totalorder %s32, %s48
      %p50 = scmp.eq.s32.totalorder %s24, 0
      %p51 = por %p49, %p50
      %s52 = ssub.s32 %s18, %s25
      %p53 = scmp.eq.s32.totalorder %s52, 0
      %s55 = sadd.s32 %s54, 1
      %s56 = scalar_select %p53, %s54, %s55
      %p59 = pneg %p53
      %p60 = scmp.eq.s32.totalorder %s18, 1
      %p61 = por %p59, %p60
      %p62 = scmp.ne.s32.totalorder %s54, %s57
      %p63 = scmp.eq.s32.totalorder %s18, 0
      %p64 = por %p62, %p63
      %p65 = scmp.ne.s32.totalorder %s54, %s57
      %p66 = scmp.eq.s32.totalorder %s23, 1
      %p67 = por %p65, %p66
      %p68 = scmp.ne.s32.totalorder %s57, %s58
      %p69 = scmp.eq.s32.totalorder %s23, 0
      %p70 = por %p68, %p69
      %p71 = scmp.ne.s32.totalorder %s57, %s58
      %p72 = scmp.eq.s32.totalorder %s24, 1
      %p73 = por %p71, %p72
      %p75 = scmp.ne.s32.totalorder %s58, %s74
      %p76 = scmp.eq.s32.totalorder %s24, 0
      %p77 = por %p75, %p76
      %s79 = sadd.s32 %s78, 1
      %p82 = scmp.eq.s32.totalorder %s18, 1
      %p83 = scmp.ne.s32.totalorder %s78, %s80
      %p84 = scmp.eq.s32.totalorder %s18, 0
      %p85 = por %p83, %p84
      %p86 = scmp.ne.s32.totalorder %s78, %s80
      %p87 = scmp.eq.s32.totalorder %s23, 1
      %p88 = por %p86, %p87
      %p89 = scmp.ne.s32.totalorder %s80, %s81
      %p90 = scmp.eq.s32.totalorder %s23, 0
      %p91 = por %p89, %p90
      %p92 = scmp.ne.s32.totalorder %s80, %s81
      %p93 = scmp.eq.s32.totalorder %s24, 1
      %p94 = por %p92, %p93
      %p96 = scmp.ne.s32.totalorder %s81, %s95
      %p97 = scmp.eq.s32.totalorder %s24, 0
      %p98 = por %p96, %p97
      %s100 = sadd.s32 %s99, 1
      %p103 = scmp.eq.s32.totalorder %s18, 1
      %p104 = scmp.ne.s32.totalorder %s99, %s101
      %p105 = scmp.eq.s32.totalorder %s18, 0
      %p106 = por %p104, %p105
      %p107 = scmp.ne.s32.totalorder %s99, %s101
      %p108 = scmp.eq.s32.totalorder %s23, 1
      %p109 = por %p107, %p108
      %p110 = scmp.ne.s32.totalorder %s101, %s102
      %p111 = scmp.eq.s32.totalorder %s23, 0
      %p112 = por %p110, %p111
      %p113 = scmp.ne.s32.totalorder %s101, %s102
      %p114 = scmp.eq.s32.totalorder %s24, 1
      %p115 = por %p113, %p114
      %p117 = scmp.ne.s32.totalorder %s102, %s116
      %p118 = scmp.eq.s32.totalorder %s24, 0
      %p119 = por %p117, %p118
      %s121 = sadd.s32 %s120, 1
      %p124 = scmp.eq.s32.totalorder %s18, 1
      %p125 = scmp.ne.s32.totalorder %s120, %s122
      %p126 = scmp.eq.s32.totalorder %s18, 0
      %p127 = por %p125, %p126
      %p128 = scmp.ne.s32.totalorder %s120, %s122
      %p129 = scmp.eq.s32.totalorder %s23, 1
      %p130 = por %p128, %p129
      %p131 = scmp.ne.s32.totalorder %s122, %s123
      %p132 = scmp.eq.s32.totalorder %s23, 0
      %p133 = por %p131, %p132
      %p134 = scmp.ne.s32.totalorder %s122, %s123
      %p135 = scmp.eq.s32.totalorder %s24, 1
      %p136 = por %p134, %p135
      %p138 = scmp.ne.s32.totalorder %s123, %s137
      %p139 = scmp.eq.s32.totalorder %s24, 0
      %p140 = por %p138, %p139
      %s142 = sadd.s32 %s141, 1
      %p145 = scmp.eq.s32.totalorder %s18, 1
      %p146 = scmp.ne.s32.totalorder %s141, %s143
      %p147 = scmp.eq.s32.totalorder %s18, 0
      %p148 = por %p146, %p147
      %p149 = scmp.ne.s32.totalorder %s141, %s143
      %p150 = scmp.eq.s32.totalorder %s23, 1
      %p151 = por %p149, %p150
      %p152 = scmp.ne.s32.totalorder %s143, %s144
      %p153 = scmp.eq.s32.totalorder %s23, 0
      %p154 = por %p152, %p153
      %p155 = scmp.ne.s32.totalorder %s143, %s144
      %p156 = scmp.eq.s32.totalorder %s24, 1
      %p157 = por %p155, %p156
      %p159 = scmp.ne.s32.totalorder %s144, %s158
      %p160 = scmp.eq.s32.totalorder %s24, 0
      %p161 = por %p159, %p160
      %s163 = sadd.s32 %s162, 1
      %p166 = scmp.eq.s32.totalorder %s18, 1
      %p167 = scmp.ne.s32.totalorder %s162, %s164
      %p168 = scmp.eq.s32.totalorder %s18, 0
      %p169 = por %p167, %p168
      %p170 = scmp.ne.s32.totalorder %s162, %s164
      %p171 = scmp.eq.s32.totalorder %s23, 1
      %p172 = por %p170, %p171
      %p173 = scmp.ne.s32.totalorder %s164, %s165
      %p174 = scmp.eq.s32.totalorder %s23, 0
      %p175 = por %p173, %p174
      %p176 = scmp.ne.s32.totalorder %s164, %s165
      %p177 = scmp.eq.s32.totalorder %s24, 1
      %p178 = por %p176, %p177
      %p180 = scmp.ne.s32.totalorder %s165, %s179
      %p181 = scmp.eq.s32.totalorder %s24, 0
      %p182 = por %p180, %p181
      %s184 = sadd.s32 %s183, 1
      %p187 = scmp.eq.s32.totalorder %s18, 1
      %p188 = scmp.ne.s32.totalorder %s183, %s185
      %p189 = scmp.eq.s32.totalorder %s18, 0
      %p190 = por %p188, %p189
      %p191 = scmp.ne.s32.totalorder %s183, %s185
      %p192 = scmp.eq.s32.totalorder %s23, 1
      %p193 = por %p191, %p192
      %p194 = scmp.ne.s32.totalorder %s185, %s186
      %p195 = scmp.eq.s32.totalorder %s23, 0
      %p196 = por %p194, %p195
      %p197 = scmp.ne.s32.totalorder %s185, %s186
      %p198 = scmp.eq.s32.totalorder %s24, 1
      %p199 = por %p197, %p198
      %p201 = scmp.ne.s32.totalorder %s186, %s200
      %p202 = scmp.eq.s32.totalorder %s24, 0
      %p203 = por %p201, %p202
      %s205 = sadd.s32 %s204, 1
      %p208 = scmp.eq.s32.totalorder %s18, 1
      %p209 = scmp.ne.s32.totalorder %s204, %s206
      %p210 = scmp.eq.s32.totalorder %s18, 0
      %p211 = por %p209, %p210
      %p212 = scmp.ne.s32.totalorder %s204, %s206
      %p213 = scmp.eq.s32.totalorder %s23, 1
      %p214 = por %p212, %p213
      %p215 = scmp.ne.s32.totalorder %s206, %s207
      %p216 = scmp.eq.s32.totalorder %s23, 0
      %p217 = por %p215, %p216
      %p218 = scmp.ne.s32.totalorder %s206, %s207
      %p219 = scmp.eq.s32.totalorder %s24, 1
      %p220 = por %p218, %p219
      %p222 = scmp.ne.s32.totalorder %s207, %s221
      %p223 = scmp.eq.s32.totalorder %s24, 0
      %p224 = por %p222, %p223
      %s225 = ssub.s32 %s18, %s25
      %p226 = scmp.eq.s32.totalorder %s225, 0
      %s228 = sadd.s32 %s227, 1
      %s229 = scalar_select %p226, %s227, %s228
      %p232 = pneg %p226
      %p233 = scmp.eq.s32.totalorder %s18, 1
      %p234 = por %p232, %p233
      %p235 = scmp.ne.s32.totalorder %s227, %s230
      %p236 = scmp.eq.s32.totalorder %s18, 0
      %p237 = por %p235, %p236
      %p238 = scmp.ne.s32.totalorder %s227, %s230
      %p239 = scmp.eq.s32.totalorder %s23, 1
      %p240 = por %p238, %p239
      %p241 = scmp.ne.s32.totalorder %s230, %s231
      %p242 = scmp.eq.s32.totalorder %s23, 0
      %p243 = por %p241, %p242
      %p244 = scmp.ne.s32.totalorder %s230, %s231
      %p245 = scmp.eq.s32.totalorder %s24, 1
      %p246 = por %p244, %p245
      %p248 = scmp.ne.s32.totalorder %s231, %s247
      %p249 = scmp.eq.s32.totalorder %s24, 0
      %p250 = por %p248, %p249
      %p251 = scmp.le.s32.totalorder 1, %s18
      %p252 = scmp.lt.s32.totalorder %s18, 3
      %p253 = pnand %p251, %p252
      %p254 = pneg %p253
      // Predicated region
      $region9: #{tpu_custom_call.1} parent=5 // pred_check
        _
      $region10: #{tpu_custom_call.1} parent=5 // pred_check_branch
        %256 = sbr.rel (%p253) target = $region12
      $region11: #{tpu_custom_call.1} parent=5 // pred_region
        %s257 = ssub.s32 %s18, 1
        // Predicated region
        $region13: #{tpu_custom_call.1} parent=11 // pred_check
          %p258 = pneg %p91
        $region14: #{tpu_custom_call.1} parent=11 // pred_check_branch
          %260 = sbr.rel (%p258) target = $region16
        $region15: #{tpu_custom_call.1} parent=11 // pred_region
          _
        $region16: #{tpu_custom_call.1} parent=11 // pred_fallthru
          _
        // Predicated region
        $region17: #{tpu_custom_call.1} parent=11 // pred_check
          %p261 = pneg %p112
        $region18: #{tpu_custom_call.1} parent=11 // pred_check_branch
          %263 = sbr.rel (%p261) target = $region20
        $region19: #{tpu_custom_call.1} parent=11 // pred_region
          _
        $region20: #{tpu_custom_call.1} parent=11 // pred_fallthru
          _
        // Predicated region
        $region21: #{tpu_custom_call.1} parent=11 // pred_check
          %p264 = pneg %p133
        $region22: #{tpu_custom_call.1} parent=11 // pred_check_branch
          %266 = sbr.rel (%p264) target = $region24
        $region23: #{tpu_custom_call.1} parent=11 // pred_region
          _
        $region24: #{tpu_custom_call.1} parent=11 // pred_fallthru
          _
        // Predicated region
        $region25: #{tpu_custom_call.1} parent=11 // pred_check
          %p267 = pneg %p154
        $region26: #{tpu_custom_call.1} parent=11 // pred_check_branch
          %269 = sbr.rel (%p267) target = $region28
        $region27: #{tpu_custom_call.1} parent=11 // pred_region
          _
        $region28: #{tpu_custom_call.1} parent=11 // pred_fallthru
          _
        // Predicated region
        $region29: #{tpu_custom_call.1} parent=11 // pred_check
          %p270 = pneg %p175
        $region30: #{tpu_custom_call.1} parent=11 // pred_check_branch
          %272 = sbr.rel (%p270) target = $region32
        $region31: #{tpu_custom_call.1} parent=11 // pred_region
          _
        $region32: #{tpu_custom_call.1} parent=11 // pred_fallthru
          _
        // Predicated region
        $region33: #{tpu_custom_call.1} parent=11 // pred_check
          %p273 = pneg %p196
        $region34: #{tpu_custom_call.1} parent=11 // pred_check_branch
          %275 = sbr.rel (%p273) target = $region36
        $region35: #{tpu_custom_call.1} parent=11 // pred_region
          _
        $region36: #{tpu_custom_call.1} parent=11 // pred_fallthru
          _
        // Predicated region
        $region37: #{tpu_custom_call.1} parent=11 // pred_check
          %p276 = pneg %p217
        $region38: #{tpu_custom_call.1} parent=11 // pred_check_branch
          %278 = sbr.rel (%p276) target = $region40
        $region39: #{tpu_custom_call.1} parent=11 // pred_region
          _
        $region40: #{tpu_custom_call.1} parent=11 // pred_fallthru
          _
      $region12: #{tpu_custom_call.1} parent=5 // pred_fallthru
        _
      %p279 = scmp.lt.s32.totalorder %s18, 2
      // Predicated region
      $region41: #{tpu_custom_call.1} parent=5 // pred_check
        %p280 = pneg %p279
      $region42: #{tpu_custom_call.1} parent=5 // pred_check_branch
        %282 = sbr.rel (%p280) target = $region44
      $region43: #{tpu_custom_call.1} parent=5 // pred_region
        // Predicated region
        $region45: #{tpu_custom_call.1} parent=43 // pred_check
          %p283 = pneg %p38
        $region46: #{tpu_custom_call.1} parent=43 // pred_check_branch
          %285 = sbr.rel (%p283) target = $region48
        $region47: #{tpu_custom_call.1} parent=43 // pred_region
          %p286 = scmp.lt.s32.totalorder %s18, 1
          %s287 = scalar_select %p286, %s18, 1
          %s288 = smul.addr %s287, 2
          %s289 = smul.addr %s288, 4
          %s290 = scalar_lea.vmem %s0, %s289
        $region48: #{tpu_custom_call.1} parent=43 // pred_fallthru
          _
        // Predicated region
        $region49: #{tpu_custom_call.1} parent=43 // pred_check
          %p291 = pneg %p64
        $region50: #{tpu_custom_call.1} parent=43 // pred_check_branch
          %293 = sbr.rel (%p291) target = $region52
        $region51: #{tpu_custom_call.1} parent=43 // pred_region
          %p294 = scmp.lt.s32.totalorder %s18, 1
          %s295 = scalar_select %p294, %s18, 1
          %s296 = smul.addr %s295, 2
          %s297 = smul.addr %s296, 4
          %s298 = scalar_lea.vmem %s1, %s297
        $region52: #{tpu_custom_call.1} parent=43 // pred_fallthru
          _
      $region44: #{tpu_custom_call.1} parent=5 // pred_fallthru
        _
      %p299 = scmp.le.s32.totalorder 1, %s18
      %p300 = scmp.lt.s32.totalorder %s18, 3
      %p301 = pnand %p299, %p300
      %p302 = pneg %p301
      // Predicated region
      $region53: #{tpu_custom_call.1} parent=5 // pred_check
        _
      $region54: #{tpu_custom_call.1} parent=5 // pred_check_branch
        %304 = sbr.rel (%p301) target = $region56
      $region55: #{tpu_custom_call.1} parent=5 // pred_region
        %s305 = ssub.s32 %s18, 1
        %p306 = scmp.lt.s32.totalorder %s23, 1
        %s307 = scalar_select %p306, %s23, 1
        %s308 = smul.addr %s307, 2
        %s309 = smul.addr %s308, 4
        %s310 = scalar_lea.vmem %s0, %s309
        %p311 = pneg %p44
        %p312 = pneg %p41
        %p313 = scmp.lt.s32.totalorder %s23, 1
        %s314 = scalar_select %p313, %s23, 1
        %s315 = smul.addr %s314, 2
        %s316 = smul.addr %s315, 4
        %s317 = scalar_lea.vmem %s1, %s316
        %p318 = pneg %p70
        %p319 = pneg %p67
        %p320 = pneg %p91
        %p321 = pneg %p88
        %p322 = pneg %p112
        %p323 = pneg %p109
        %p324 = pneg %p133
        %p325 = pneg %p130
        %p326 = pneg %p154
        %p327 = pneg %p151
        %p328 = pneg %p175
        %p329 = pneg %p172
        %p330 = pneg %p196
        %p331 = pneg %p193
        %p332 = pneg %p217
        %p333 = pneg %p214
        %p334 = pneg %p243
        %p335 = pneg %p240
        %s336 = sand.u32 %s230, 1
        %s337 = scalar_lea.sflag [#allocation5], %s336
        %s338 = sand.u32 %s230, 1
        %s339 = smul.addr %s338, 24
        %s340 = scalar_lea.vmem [#allocation4], %s339
        %p341 = scmp.lt.s32.totalorder %s23, 1
        %s342 = scalar_select %p341, %s23, 1
        %s343 = smul.addr %s342, 2
        %s344 = smul.addr %s343, 4
        %s345 = scalar_lea.vmem %s0, %s344
        %p346 = scmp.lt.s32.totalorder %s23, 1
        %s347 = scalar_select %p346, %s23, 1
        %s348 = smul.addr %s347, 2
        %s349 = smul.addr %s348, 4
        %s350 = scalar_lea.vmem %s1, %s349
        %352 = vst [vmem:[#allocation2] sm:$0xff] 0
        %353 = vst [vmem:[#allocation2 + $0x8] sm:$0xff] 0
        %vm354 = vcmask 556032
        %355 = vst.msk [vmem:[#allocation2 + $0x10] sm:$0xff] %vm354, 0
        %vm356 = vcmask 150528
        %357 = vst.msk [vmem:[#allocation3] sm:$0xf] %vm356, 0
        %vm358 = vcmask 1043848
        %vm359 = vcmask 556036
        %vm360 = vmor %vm359, %vm358
        %361 = vst.msk [vmem:[#allocation3 + $0x8] sm:$0xff] %vm360, 0
        %v362 = vld [vmem:[%s345] sm:$0xf]
        %v364 = vunpack.c.l.b16 %v362
        %v365 = vpack.c.b16 %v364, %v364
        %366 = vrot.lane.b32.xlu0 %v365, 19
        %v367 = vpop.permute.xlu0 %366
        %vm369 = vcmask 281752
        %370 = vst.msk [vmem:[#allocation2] sm:$0xf] %vm369, %v367
        %v371 = vld [vmem:[%s345] sm:$0xf]
        %v373 = vunpack.c.l.b16 %v371
        %v374 = vpack.c.b16 %v373, %v373
        %375 = vrot.lane.b32.xlu0 %v374, 21
        %v376 = vpop.permute.xlu0 %375
        %vm378 = vcmask 429352
        %379 = vst.msk [vmem:[#allocation2] sm:$0xf] %vm378, %v376
        %v380 = vld [vmem:[%s345] sm:$0xf]
        %v382 = vunpack.c.l.b16 %v380
        %v383 = vpack.c.b16 %v382, %v382
        %384 = vrot.lane.b32.xlu0 %v383, 23
        %v385 = vpop.permute.xlu0 %384
        %vm387 = vcmask 576952
        %388 = vst.msk [vmem:[#allocation2] sm:$0xf] %vm387, %v385
        %v389 = vld [vmem:[%s345] sm:$0xf]
        %v391 = vunpack.c.l.b16 %v389
        %v392 = vpack.c.b16 %v391, %v391
        %393 = vrot.lane.b32.xlu0 %v392, 25
        %v394 = vpop.permute.xlu0 %393
        %vm396 = vcmask 724552
        %397 = vst.msk [vmem:[#allocation2] sm:$0xf] %vm396, %v394
        %v398 = vld [vmem:[%s345] sm:$0xf]
        %v400 = vunpack.c.l.b16 %v398
        %v401 = vpack.c.b16 %v400, %v400
        %402 = vrot.lane.b32.xlu0 %v401, 27
        %v403 = vpop.permute.xlu0 %402
        %vm405 = vcmask 872152
        %406 = vst.msk [vmem:[#allocation2] sm:$0xf] %vm405, %v403
        %v407 = vld [vmem:[%s345] sm:$0xf]
        %v409 = vunpack.c.l.b16 %v407
        %v410 = vpack.c.b16 %v409, %v409
        %411 = vrot.lane.b32.xlu0 %v410, 29
        %v412 = vpop.permute.xlu0 %411
        %vm414 = vcmask 1019752
        %415 = vst.msk [vmem:[#allocation2] sm:$0xf] %vm414, %v412
        %v416 = vld [vmem:[%s345] sm:$0xf]
        %v418 = vunpack.c.l.b16 %v416
        %v419 = vpack.c.b16 %v418, %v418
        %420 = vrot.lane.b32.xlu0 %v419, 31
        %v421 = vpop.permute.xlu0 %420
        %vm423 = vcmask 1044472
        %424 = vst.msk [vmem:[#allocation2] sm:$0xf] %vm423, %v421
        %vm425 = vcmask 117760
        %426 = vst.msk [vmem:[#allocation2 + $0x8] sm:$0xf] %vm425, %v421
        %v427 = vld [vmem:[%s345] sm:$0xf]
        %v429 = vunpack.c.l.b16 %v427
        %v430 = vpack.c.b16 %v429, %v429
        %431 = vrot.lane.b32.xlu0 %v430, 33
        %v432 = vpop.permute.xlu0 %431
        %vm434 = vcmask 265352
        %435 = vst.msk [vmem:[#allocation2 + $0x8] sm:$0xf] %vm434, %v432
        %v436 = vld [vmem:[%s345 + $0x4] sm:$0xf]
        %v438 = vunpack.c.l.b16 %v436
        %v439 = vpack.c.b16 %v438, %v438
        %440 = vrot.lane.b32.xlu0 %v439, 35
        %v441 = vpop.permute.xlu0 %440
        %vm443 = vcmask 412952
        %444 = vst.msk [vmem:[#allocation2 + $0x8] sm:$0xf] %vm443, %v441
        %v445 = vld [vmem:[%s345 + $0x4] sm:$0xf]
        %v447 = vunpack.c.l.b16 %v445
        %v448 = vpack.c.b16 %v447, %v447
        %449 = vrot.lane.b32.xlu0 %v448, 37
        %v450 = vpop.permute.xlu0 %449
        %vm452 = vcmask 560552
        %453 = vst.msk [vmem:[#allocation2 + $0x8] sm:$0xf] %vm452, %v450
        %v454 = vld [vmem:[%s345 + $0x4] sm:$0xf]
        %v456 = vunpack.c.l.b16 %v454
        %v457 = vpack.c.b16 %v456, %v456
        %458 = vrot.lane.b32.xlu0 %v457, 39
        %v459 = vpop.permute.xlu0 %458
        %vm461 = vcmask 708152
        %462 = vst.msk [vmem:[#allocation2 + $0x8] sm:$0xf] %vm461, %v459
        %v463 = vld [vmem:[%s345 + $0x4] sm:$0xf]
        %v465 = vunpack.c.l.b16 %v463
        %v466 = vpack.c.b16 %v465, %v465
        %467 = vrot.lane.b32.xlu0 %v466, 41
        %v468 = vpop.permute.xlu0 %467
        %vm470 = vcmask 855752
        %471 = vst.msk [vmem:[#allocation2 + $0x8] sm:$0xf] %vm470, %v468
        %v472 = vld [vmem:[%s345 + $0x4] sm:$0xf]
        %v474 = vunpack.c.l.b16 %v472
        %v475 = vpack.c.b16 %v474, %v474
        %476 = vrot.lane.b32.xlu0 %v475, 43
        %v477 = vpop.permute.xlu0 %476
        %vm479 = vcmask 1003352
        %480 = vst.msk [vmem:[#allocation2 + $0x8] sm:$0xf] %vm479, %v477
        %v481 = vld [vmem:[%s345 + $0x4] sm:$0xf]
        %v483 = vunpack.c.l.b16 %v481
        %v484 = vpack.c.b16 %v483, %v483
        %485 = vrot.lane.b32.xlu0 %v484, 45
        %v486 = vpop.permute.xlu0 %485
        %vm488 = vcmask 1044456
        %489 = vst.msk [vmem:[#allocation2 + $0x8] sm:$0xf] %vm488, %v486
        %vm490 = vcmask 101376
        %491 = vst.msk [vmem:[#allocation2 + $0x10] sm:$0xf] %vm490, %v486
        %v492 = vld [vmem:[%s345 + $0x4] sm:$0xf]
        %v494 = vunpack.c.l.b16 %v492
        %v495 = vpack.c.b16 %v494, %v494
        %496 = vrot.lane.b32.xlu0 %v495, 47
        %v497 = vpop.permute.xlu0 %496
        %vm499 = vcmask 248952
        %500 = vst.msk [vmem:[#allocation2 + $0x10] sm:$0xf] %vm499, %v497
        %v501 = vld [vmem:[%s345 + $0x4] sm:$0xf]
        %v503 = vunpack.c.l.b16 %v501
        %v504 = vpack.c.b16 %v503, %v503
        %505 = vrot.lane.b32.xlu0 %v504, 49
        %v506 = vpop.permute.xlu0 %505
        %vm508 = vcmask 396552
        %509 = vst.msk [vmem:[#allocation2 + $0x10] sm:$0xf] %vm508, %v506
        %v510 = vld [vmem:[%s2] sm:$0xf]
        %v511 = vld [vmem:[%s2 + $0x4] sm:$0xf]
        %v512 = vld [vmem:[%s2 + $0x8] sm:$0xf]
        %v513 = vld [vmem:[%s2 + $0xc] sm:$0xf]
        %v514 = vld [vmem:[%s350] sm:$0xf]
        %v515 = vld [vmem:[%s350 + $0x4] sm:$0xf]
        %v520 = vunpack.c.l.b16 %v510
        %v521 = vunpack.c.l.b16 %v511
        %v522 = vunpack.c.l.b16 %v512
        %v523 = vunpack.c.l.b16 %v513
        %v524 = vpack.c.b16 %v521, %v520
        %v525 = vpack.c.b16 %v523, %v522
        %v528 = vunpack.c.l.b16 %v514
        %v529 = vunpack.c.l.b16 %v515
        %v530 = vpack.c.b16 %v529, %v528
        %vm532 = vcmask 130048
        %v534 = vsel %vm532, %v524, 0
        %v537 = vsel %vm532, %v525, 0
        %539 = vmatprep.subr.bf16.mxu0 0
        %540 = vmatpush1.bf16.msra.mxu0 %v530
        %541 = vmatprep.subr.bf16.mxu0 0
        %542 = vmatpush1.bf16.msra.mxu0 0
        %543 = vmatprep.subr.bf16.mxu0 0
        %544 = vmatpush1.bf16.msra.mxu0 0
        %545 = vmatprep.subr.bf16.mxu0 0
        %546 = vmatpush1.bf16.msra.mxu0 0
        %547 = vmatprep.subr.bf16.mxu0 0
        %548 = vmatpush1.bf16.msra.mxu0 0
        %549 = vmatprep.subr.bf16.mxu0 0
        %550 = vmatpush1.bf16.msra.mxu0 0
        %551 = vmatprep.subr.bf16.mxu0 0
        %552 = vmatpush1.bf16.msra.mxu0 0
        %553 = vmatprep.subr.bf16.mxu0 0
        %554 = vmatpush1.bf16.msra.mxu0 0
        %555 = vmatprep.subr.bf16.mxu0 0
        %556 = vmatpush1.bf16.msra.mxu0 0
        %557 = vmatprep.subr.bf16.mxu0 0
        %558 = vmatpush1.bf16.msra.mxu0 0
        %559 = vmatprep.subr.bf16.mxu0 0
        %560 = vmatpush1.bf16.msra.mxu0 0
        %561 = vmatprep.subr.bf16.mxu0 0
        %562 = vmatpush1.bf16.msra.mxu0 0
        %563 = vmatprep.subr.bf16.mxu0 0
        %564 = vmatpush1.bf16.msra.mxu0 0
        %565 = vmatprep.subr.bf16.mxu0 0
        %566 = vmatpush1.bf16.msra.mxu0 0
        %567 = vmatprep.subr.bf16.mxu0 0
        %568 = vmatpush1.bf16.msra.mxu0 0
        %569 = vmatprep.subr.bf16.mxu0 0
        %570 = vmatpush1.bf16.msra.mxu0 0
        %571 = vmatprep.mubr.bf16.mxu0 0
        %572 = vmatmul.mubr.bf16.gmra.mrb[0].mxu0 %v534
        %v573 = vpop.f32.mrb[0].mxu0
        %v574 = vadd.f32 0.0, %v573
        %v575 = vpop.f32.mrb[0].mxu0
        %v576 = vpop.f32.mrb[0].mxu0
        %v577 = vadd.f32 0.0, %v576
        %v578 = vpop.f32.mrb[0].mxu0
        %579 = vmatprep.mubr.bf16.mxu0 0
        %580 = vmatmul.mubr.bf16.gmra.mrb[0].mxu0 %v537
        %v581 = vpop.f32.mrb[0].mxu0
        %v582 = vadd.f32 0.0, %v581
        %v583 = vpop.f32.mrb[0].mxu0
        %v584 = vpop.f32.mrb[0].mxu0
        %v585 = vadd.f32 0.0, %v584
        %v586 = vpop.f32.mrb[0].mxu0
        %587 = vdwg.mxu0
        %v588 = vlaneseq
        %v589 = vand.u32 %v588, 127
        %v590 = vand.u32 %v589, 1
        %vm591 = vcmp.eq.s32.totalorder %v590, 0
        %v592 = vld [vmem:[%s3] sm:$0xff]
        %v593 = vsel %vm591, %v574, %v577
        %595 = vset.pattern.permute.xlu0 0
        %596 = vperm.xlu0 %595, %v592
        %v597 = vpop.permute.xlu0 %596
        %v599 = vadd.f32 %v593, %v597
        %v600 = vpack.c.bf16 %v599, %v599
        %v601 = vsel %vm591, %v582, %v585
        %v602 = vadd.f32 %v601, %v597
        %v603 = vpack.c.bf16 %v602, %v602
        %v605 = vrot.slane %v600, 4
        %606 = vrot.lane.b32.xlu0 %v605, 19
        %v607 = vpop.permute.xlu0 %606
        %vm609 = vcmask 285852
        %610 = vst.msk [vmem:[#allocation2] sm:$0xf0] %vm609, %v607
        %v612 = vrot.slane %v603, 4
        %613 = vrot.lane.b32.xlu0 %v612, 37
        %v614 = vpop.permute.xlu0 %613
        %vm616 = vcmask 433452
        %617 = vst.msk [vmem:[#allocation2] sm:$0xf0] %vm616, %v614
        %618 = vrot.lane.b32.xlu0 %v605, 39
        %v619 = vpop.permute.xlu0 %618
        %vm621 = vcmask 581052
        %622 = vst.msk [vmem:[#allocation2] sm:$0xf0] %vm621, %v619
        %623 = vrot.lane.b32.xlu0 %v612, 57
        %v624 = vpop.permute.xlu0 %623
        %vm626 = vcmask 728652
        %627 = vst.msk [vmem:[#allocation2] sm:$0xf0] %vm626, %v624
        %628 = vrot.lane.b32.xlu0 %v605, 59
        %v629 = vpop.permute.xlu0 %628
        %vm631 = vcmask 876252
        %632 = vst.msk [vmem:[#allocation2] sm:$0xf0] %vm631, %v629
        %633 = vrot.lane.b32.xlu0 %v612, 77
        %v634 = vpop.permute.xlu0 %633
        %vm636 = vcmask 1023852
        %637 = vst.msk [vmem:[#allocation2] sm:$0xf0] %vm636, %v634
        %638 = vrot.lane.b32.xlu0 %v605, 79
        %v639 = vpop.permute.xlu0 %638
        %vm641 = vcmask 1048572
        %642 = vst.msk [vmem:[#allocation2] sm:$0xf0] %vm641, %v639
        %vm643 = vcmask 121860
        %644 = vst.msk [vmem:[#allocation2 + $0x8] sm:$0xf0] %vm643, %v639
        %645 = vrot.lane.b32.xlu0 %v612, 97
        %v646 = vpop.permute.xlu0 %645
        %vm648 = vcmask 269452
        %649 = vst.msk [vmem:[#allocation2 + $0x8] sm:$0xf0] %vm648, %v646
        %650 = vrot.lane.b32.xlu0 %v605, 99
        %v651 = vpop.permute.xlu0 %650
        %vm653 = vcmask 417052
        %654 = vst.msk [vmem:[#allocation2 + $0x8] sm:$0xf0] %vm653, %v651
        %655 = vrot.lane.b32.xlu0 %v612, 117
        %v656 = vpop.permute.xlu0 %655
        %vm658 = vcmask 564652
        %659 = vst.msk [vmem:[#allocation2 + $0x8] sm:$0xf0] %vm658, %v656
        %660 = vrot.lane.b32.xlu0 %v605, 119
        %v661 = vpop.permute.xlu0 %660
        %vm663 = vcmask 712252
        %664 = vst.msk [vmem:[#allocation2 + $0x8] sm:$0xf0] %vm663, %v661
        %665 = vrot.lane.b32.xlu0 %v612, 9
        %v666 = vpop.permute.xlu0 %665
        %vm668 = vcmask 859852
        %669 = vst.msk [vmem:[#allocation2 + $0x8] sm:$0xf0] %vm668, %v666
        %670 = vrot.lane.b32.xlu0 %v605, 11
        %v671 = vpop.permute.xlu0 %670
        %vm673 = vcmask 1007452
        %674 = vst.msk [vmem:[#allocation2 + $0x8] sm:$0xf0] %vm673, %v671
        %675 = vrot.lane.b32.xlu0 %v612, 29
        %v676 = vpop.permute.xlu0 %675
        %vm678 = vcmask 1048556
        %679 = vst.msk [vmem:[#allocation2 + $0x8] sm:$0xf0] %vm678, %v676
        %vm680 = vcmask 105476
        %681 = vst.msk [vmem:[#allocation2 + $0x10] sm:$0xf0] %vm680, %v676
        %682 = vrot.lane.b32.xlu0 %v605, 31
        %v683 = vpop.permute.xlu0 %682
        %vm685 = vcmask 253052
        %686 = vst.msk [vmem:[#allocation2 + $0x10] sm:$0xf0] %vm685, %v683
        %687 = vrot.lane.b32.xlu0 %v612, 49
        %v688 = vpop.permute.xlu0 %687
        %vm690 = vcmask 400652
        %691 = vst.msk [vmem:[#allocation2 + $0x10] sm:$0xf0] %vm690, %v688
        %v692 = vld [vmem:[%s4] sm:$0xf]
        %v693 = vld [vmem:[#allocation2] sm:$0xff]
        %v694 = vld [vmem:[#allocation2 + $0x8] sm:$0xff]
        %v695 = vld [vmem:[#allocation2 + $0x10] sm:$0xff]
        %s696 = scalar_lea.vmem %s4, 4
        %v697 = vld [vmem:[%s696] sm:$0xf]
        %701 = vrot.lane.b32.xlu0 %v693, 127
        %v702 = vpop.permute.xlu0 %701
        %703 = vrot.lane.b32.xlu0 %v694, 127
        %v704 = vpop.permute.xlu0 %703
        %705 = vrot.lane.b32.xlu0 %v695, 127
        %v706 = vpop.permute.xlu0 %705
        %vm707 = vcmask 1039360
        %v708 = vsel %vm707, %v702, %v704
        %v709 = vsel %vm707, %v704, %v706
        %v714 = vsel %vm532, %v697, 0
        %716 = vmatprep.subr.bf16.mxu0 %v709
        %717 = vmatpush1.bf16.msra.mxu0 %v708
        %718 = vmatprep.subr.bf16.mxu0 0
        %719 = vmatpush1.bf16.msra.mxu0 0
        %720 = vmatprep.subr.bf16.mxu0 0
        %721 = vmatpush1.bf16.msra.mxu0 0
        %722 = vmatprep.subr.bf16.mxu0 0
        %723 = vmatpush1.bf16.msra.mxu0 0
        %724 = vmatprep.subr.bf16.mxu0 0
        %725 = vmatpush1.bf16.msra.mxu0 0
        %726 = vmatprep.subr.bf16.mxu0 0
        %727 = vmatpush1.bf16.msra.mxu0 0
        %728 = vmatprep.subr.bf16.mxu0 0
        %729 = vmatpush1.bf16.msra.mxu0 0
        %730 = vmatprep.subr.bf16.mxu0 0
        %731 = vmatpush1.bf16.msra.mxu0 0
        %732 = vmatprep.subr.bf16.mxu0 0
        %733 = vmatpush1.bf16.msra.mxu0 0
        %734 = vmatprep.subr.bf16.mxu0 0
        %735 = vmatpush1.bf16.msra.mxu0 0
        %736 = vmatprep.subr.bf16.mxu0 0
        %737 = vmatpush1.bf16.msra.mxu0 0
        %738 = vmatprep.subr.bf16.mxu0 0
        %739 = vmatpush1.bf16.msra.mxu0 0
        %740 = vmatprep.subr.bf16.mxu0 0
        %741 = vmatpush1.bf16.msra.mxu0 0
        %742 = vmatprep.subr.bf16.mxu0 0
        %743 = vmatpush1.bf16.msra.mxu0 0
        %744 = vmatprep.subr.bf16.mxu0 0
        %745 = vmatpush1.bf16.msra.mxu0 0
        %746 = vmatprep.subr.bf16.mxu0 0
        %747 = vmatpush1.bf16.msra.mxu0 0
        %748 = vmatprep.mubr.bf16.mxu0 0
        %749 = vmatmul.mubr.bf16.gmra.mrb[0].mxu0 %v714
        %v750 = vpop.f32.mrb[0].mxu0
        %v751 = vadd.f32 0.0, %v750
        %v752 = vpop.f32.mrb[0].mxu0
        %v753 = vadd.f32 0.0, %v752
        %v754 = vpop.f32.mrb[0].mxu0
        %v755 = vpop.f32.mrb[0].mxu0
        %756 = vdwg.mxu0
        %757 = vmatprep.subr.bf16.mxu0 0
        %758 = vmatpush1.bf16.msra.mxu0 %v706
        %759 = vmatprep.subr.bf16.mxu0 0
        %760 = vmatpush1.bf16.msra.mxu0 0
        %761 = vmatprep.subr.bf16.mxu0 0
        %762 = vmatpush1.bf16.msra.mxu0 0
        %763 = vmatprep.subr.bf16.mxu0 0
        %764 = vmatpush1.bf16.msra.mxu0 0
        %765 = vmatprep.subr.bf16.mxu0 0
        %766 = vmatpush1.bf16.msra.mxu0 0
        %767 = vmatprep.subr.bf16.mxu0 0
        %768 = vmatpush1.bf16.msra.mxu0 0
        %769 = vmatprep.subr.bf16.mxu0 0
        %770 = vmatpush1.bf16.msra.mxu0 0
        %771 = vmatprep.subr.bf16.mxu0 0
        %772 = vmatpush1.bf16.msra.mxu0 0
        %773 = vmatprep.subr.bf16.mxu0 0
        %774 = vmatpush1.bf16.msra.mxu0 0
        %775 = vmatprep.subr.bf16.mxu0 0
        %776 = vmatpush1.bf16.msra.mxu0 0
        %777 = vmatprep.subr.bf16.mxu0 0
        %778 = vmatpush1.bf16.msra.mxu0 0
        %779 = vmatprep.subr.bf16.mxu0 0
        %780 = vmatpush1.bf16.msra.mxu0 0
        %781 = vmatprep.subr.bf16.mxu0 0
        %782 = vmatpush1.bf16.msra.mxu0 0
        %783 = vmatprep.subr.bf16.mxu0 0
        %784 = vmatpush1.bf16.msra.mxu0 0
        %785 = vmatprep.subr.bf16.mxu0 0
        %786 = vmatpush1.bf16.msra.mxu0 0
        %787 = vmatprep.subr.bf16.mxu0 0
        %788 = vmatpush1.bf16.msra.mxu0 0
        %789 = vmatprep.mubr.bf16.mxu0 0
        %790 = vmatmul.mubr.bf16.gmra.mrb[0].mxu0 %v714
        %v791 = vpop.f32.mrb[0].mxu0
        %v792 = vadd.f32 0.0, %v791
        %v793 = vpop.f32.mrb[0].mxu0
        %v794 = vpop.f32.mrb[0].mxu0
        %v795 = vpop.f32.mrb[0].mxu0
        %796 = vdwg.mxu0
        %v798 = vsel %vm532, %v692, 0
        %800 = vmatprep.subr.bf16.mxu0 %v694
        %801 = vmatpush1.bf16.msra.mxu0 %v693
        %802 = vmatprep.subr.bf16.mxu0 0
        %803 = vmatpush1.bf16.msra.mxu0 0
        %804 = vmatprep.subr.bf16.mxu0 0
        %805 = vmatpush1.bf16.msra.mxu0 0
        %806 = vmatprep.subr.bf16.mxu0 0
        %807 = vmatpush1.bf16.msra.mxu0 0
        %808 = vmatprep.subr.bf16.mxu0 0
        %809 = vmatpush1.bf16.msra.mxu0 0
        %810 = vmatprep.subr.bf16.mxu0 0
        %811 = vmatpush1.bf16.msra.mxu0 0
        %812 = vmatprep.subr.bf16.mxu0 0
        %813 = vmatpush1.bf16.msra.mxu0 0
        %814 = vmatprep.subr.bf16.mxu0 0
        %815 = vmatpush1.bf16.msra.mxu0 0
        %816 = vmatprep.subr.bf16.mxu0 0
        %817 = vmatpush1.bf16.msra.mxu0 0
        %818 = vmatprep.subr.bf16.mxu0 0
        %819 = vmatpush1.bf16.msra.mxu0 0
        %820 = vmatprep.subr.bf16.mxu0 0
        %821 = vmatpush1.bf16.msra.mxu0 0
        %822 = vmatprep.subr.bf16.mxu0 0
        %823 = vmatpush1.bf16.msra.mxu0 0
        %824 = vmatprep.subr.bf16.mxu0 0
        %825 = vmatpush1.bf16.msra.mxu0 0
        %826 = vmatprep.subr.bf16.mxu0 0
        %827 = vmatpush1.bf16.msra.mxu0 0
        %828 = vmatprep.subr.bf16.mxu0 0
        %829 = vmatpush1.bf16.msra.mxu0 0
        %830 = vmatprep.subr.bf16.mxu0 0
        %831 = vmatpush1.bf16.msra.mxu0 0
        %832 = vmatprep.mubr.bf16.mxu0 0
        %833 = vmatmul.mubr.bf16.gmra.mrb[0].mxu0 %v798
        %v834 = vpop.f32.mrb[0].mxu0
        %v835 = vadd.f32 %v751, %v834
        %v836 = vpop.f32.mrb[0].mxu0
        %v837 = vadd.f32 %v753, %v836
        %v838 = vpop.f32.mrb[0].mxu0
        %v839 = vpop.f32.mrb[0].mxu0
        %840 = vdwg.mxu0
        %841 = vmatprep.subr.bf16.mxu0 0
        %842 = vmatpush1.bf16.msra.mxu0 %v695
        %843 = vmatprep.subr.bf16.mxu0 0
        %844 = vmatpush1.bf16.msra.mxu0 0
        %845 = vmatprep.subr.bf16.mxu0 0
        %846 = vmatpush1.bf16.msra.mxu0 0
        %847 = vmatprep.subr.bf16.mxu0 0
        %848 = vmatpush1.bf16.msra.mxu0 0
        %849 = vmatprep.subr.bf16.mxu0 0
        %850 = vmatpush1.bf16.msra.mxu0 0
        %851 = vmatprep.subr.bf16.mxu0 0
        %852 = vmatpush1.bf16.msra.mxu0 0
        %853 = vmatprep.subr.bf16.mxu0 0
        %854 = vmatpush1.bf16.msra.mxu0 0
        %855 = vmatprep.subr.bf16.mxu0 0
        %856 = vmatpush1.bf16.msra.mxu0 0
        %857 = vmatprep.subr.bf16.mxu0 0
        %858 = vmatpush1.bf16.msra.mxu0 0
        %859 = vmatprep.subr.bf16.mxu0 0
        %860 = vmatpush1.bf16.msra.mxu0 0
        %861 = vmatprep.subr.bf16.mxu0 0
        %862 = vmatpush1.bf16.msra.mxu0 0
        %863 = vmatprep.subr.bf16.mxu0 0
        %864 = vmatpush1.bf16.msra.mxu0 0
        %865 = vmatprep.subr.bf16.mxu0 0
        %866 = vmatpush1.bf16.msra.mxu0 0
        %867 = vmatprep.subr.bf16.mxu0 0
        %868 = vmatpush1.bf16.msra.mxu0 0
        %869 = vmatprep.subr.bf16.mxu0 0
        %870 = vmatpush1.bf16.msra.mxu0 0
        %871 = vmatprep.subr.bf16.mxu0 0
        %872 = vmatpush1.bf16.msra.mxu0 0
        %873 = vmatprep.mubr.bf16.mxu0 0
        %874 = vmatmul.mubr.bf16.gmra.mrb[0].mxu0 %v798
        %v875 = vpop.f32.mrb[0].mxu0
        %v876 = vadd.f32 %v792, %v875
        %v877 = vpop.f32.mrb[0].mxu0
        %v878 = vpop.f32.mrb[0].mxu0
        %v879 = vpop.f32.mrb[0].mxu0
        %880 = vdwg.mxu0
        %s881 = scalar_lea.vmem %s4, 8
        %v882 = vld [vmem:[%s881] sm:$0xf]
        %883 = vrot.lane.b32.xlu0 %v693, 126
        %v884 = vpop.permute.xlu0 %883
        %885 = vrot.lane.b32.xlu0 %v694, 126
        %v886 = vpop.permute.xlu0 %885
        %887 = vrot.lane.b32.xlu0 %v695, 126
        %v888 = vpop.permute.xlu0 %887
        %vm889 = vcmask 1031168
        %v890 = vsel %vm889, %v884, %v886
        %v891 = vsel %vm889, %v886, %v888
        %v896 = vsel %vm532, %v882, 0
        %898 = vmatprep.subr.bf16.mxu0 %v891
        %899 = vmatpush1.bf16.msra.mxu0 %v890
        %900 = vmatprep.subr.bf16.mxu0 0
        %901 = vmatpush1.bf16.msra.mxu0 0
        %902 = vmatprep.subr.bf16.mxu0 0
        %903 = vmatpush1.bf16.msra.mxu0 0
        %904 = vmatprep.subr.bf16.mxu0 0
        %905 = vmatpush1.bf16.msra.mxu0 0
        %906 = vmatprep.subr.bf16.mxu0 0
        %907 = vmatpush1.bf16.msra.mxu0 0
        %908 = vmatprep.subr.bf16.mxu0 0
        %909 = vmatpush1.bf16.msra.mxu0 0
        %910 = vmatprep.subr.bf16.mxu0 0
        %911 = vmatpush1.bf16.msra.mxu0 0
        %912 = vmatprep.subr.bf16.mxu0 0
        %913 = vmatpush1.bf16.msra.mxu0 0
        %914 = vmatprep.subr.bf16.mxu0 0
        %915 = vmatpush1.bf16.msra.mxu0 0
        %916 = vmatprep.subr.bf16.mxu0 0
        %917 = vmatpush1.bf16.msra.mxu0 0
        %918 = vmatprep.subr.bf16.mxu0 0
        %919 = vmatpush1.bf16.msra.mxu0 0
        %920 = vmatprep.subr.bf16.mxu0 0
        %921 = vmatpush1.bf16.msra.mxu0 0
        %922 = vmatprep.subr.bf16.mxu0 0
        %923 = vmatpush1.bf16.msra.mxu0 0
        %924 = vmatprep.subr.bf16.mxu0 0
        %925 = vmatpush1.bf16.msra.mxu0 0
        %926 = vmatprep.subr.bf16.mxu0 0
        %927 = vmatpush1.bf16.msra.mxu0 0
        %928 = vmatprep.subr.bf16.mxu0 0
        %929 = vmatpush1.bf16.msra.mxu0 0
        %930 = vmatprep.mubr.bf16.mxu0 0
        %931 = vmatmul.mubr.bf16.gmra.mrb[0].mxu0 %v896
        %v932 = vpop.f32.mrb[0].mxu0
        %v933 = vadd.f32 0.0, %v932
        %v934 = vpop.f32.mrb[0].mxu0
        %v935 = vadd.f32 0.0, %v934
        %v936 = vpop.f32.mrb[0].mxu0
        %v937 = vpop.f32.mrb[0].mxu0
        %938 = vdwg.mxu0
        %939 = vmatprep.subr.bf16.mxu0 0
        %940 = vmatpush1.bf16.msra.mxu0 %v888
        %941 = vmatprep.subr.bf16.mxu0 0
        %942 = vmatpush1.bf16.msra.mxu0 0
        %943 = vmatprep.subr.bf16.mxu0 0
        %944 = vmatpush1.bf16.msra.mxu0 0
        %945 = vmatprep.subr.bf16.mxu0 0
        %946 = vmatpush1.bf16.msra.mxu0 0
        %947 = vmatprep.subr.bf16.mxu0 0
        %948 = vmatpush1.bf16.msra.mxu0 0
        %949 = vmatprep.subr.bf16.mxu0 0
        %950 = vmatpush1.bf16.msra.mxu0 0
        %951 = vmatprep.subr.bf16.mxu0 0
        %952 = vmatpush1.bf16.msra.mxu0 0
        %953 = vmatprep.subr.bf16.mxu0 0
        %954 = vmatpush1.bf16.msra.mxu0 0
        %955 = vmatprep.subr.bf16.mxu0 0
        %956 = vmatpush1.bf16.msra.mxu0 0
        %957 = vmatprep.subr.bf16.mxu0 0
        %958 = vmatpush1.bf16.msra.mxu0 0
        %959 = vmatprep.subr.bf16.mxu0 0
        %960 = vmatpush1.bf16.msra.mxu0 0
        %961 = vmatprep.subr.bf16.mxu0 0
        %962 = vmatpush1.bf16.msra.mxu0 0
        %963 = vmatprep.subr.bf16.mxu0 0
        %964 = vmatpush1.bf16.msra.mxu0 0
        %965 = vmatprep.subr.bf16.mxu0 0
        %966 = vmatpush1.bf16.msra.mxu0 0
        %967 = vmatprep.subr.bf16.mxu0 0
        %968 = vmatpush1.bf16.msra.mxu0 0
        %969 = vmatprep.subr.bf16.mxu0 0
        %970 = vmatpush1.bf16.msra.mxu0 0
        %971 = vmatprep.mubr.bf16.mxu0 0
        %972 = vmatmul.mubr.bf16.gmra.mrb[0].mxu0 %v896
        %v973 = vpop.f32.mrb[0].mxu0
        %v974 = vadd.f32 0.0, %v973
        %v975 = vpop.f32.mrb[0].mxu0
        %v976 = vpop.f32.mrb[0].mxu0
        %v977 = vpop.f32.mrb[0].mxu0
        %978 = vdwg.mxu0
        %v979 = vadd.f32 %v835, %v933
        %v980 = vadd.f32 %v837, %v935
        %v981 = vadd.f32 %v876, %v974
        %s982 = scalar_lea.vmem %s4, 12
        %v983 = vld [vmem:[%s982] sm:$0xf]
        %984 = vrot.lane.b32.xlu0 %v693, 110
        %v985 = vpop.permute.xlu0 %984
        %986 = vrot.lane.b32.xlu0 %v694, 110
        %v987 = vpop.permute.xlu0 %986
        %988 = vrot.lane.b32.xlu0 %v695, 110
        %v989 = vpop.permute.xlu0 %988
        %vm990 = vcmask 900096
        %v991 = vsel %vm990, %v985, %v987
        %v992 = vsel %vm990, %v987, %v989
        %v997 = vsel %vm532, %v983, 0
        %999 = vmatprep.subr.bf16.mxu0 %v992
        %1000 = vmatpush1.bf16.msra.mxu0 %v991
        %1001 = vmatprep.subr.bf16.mxu0 0
        %1002 = vmatpush1.bf16.msra.mxu0 0
        %1003 = vmatprep.subr.bf16.mxu0 0
        %1004 = vmatpush1.bf16.msra.mxu0 0
        %1005 = vmatprep.subr.bf16.mxu0 0
        %1006 = vmatpush1.bf16.msra.mxu0 0
        %1007 = vmatprep.subr.bf16.mxu0 0
        %1008 = vmatpush1.bf16.msra.mxu0 0
        %1009 = vmatprep.subr.bf16.mxu0 0
        %1010 = vmatpush1.bf16.msra.mxu0 0
        %1011 = vmatprep.subr.bf16.mxu0 0
        %1012 = vmatpush1.bf16.msra.mxu0 0
        %1013 = vmatprep.subr.bf16.mxu0 0
        %1014 = vmatpush1.bf16.msra.mxu0 0
        %1015 = vmatprep.subr.bf16.mxu0 0
        %1016 = vmatpush1.bf16.msra.mxu0 0
        %1017 = vmatprep.subr.bf16.mxu0 0
        %1018 = vmatpush1.bf16.msra.mxu0 0
        %1019 = vmatprep.subr.bf16.mxu0 0
        %1020 = vmatpush1.bf16.msra.mxu0 0
        %1021 = vmatprep.subr.bf16.mxu0 0
        %1022 = vmatpush1.bf16.msra.mxu0 0
        %1023 = vmatprep.subr.bf16.mxu0 0
        %1024 = vmatpush1.bf16.msra.mxu0 0
        %1025 = vmatprep.subr.bf16.mxu0 0
        %1026 = vmatpush1.bf16.msra.mxu0 0
        %1027 = vmatprep.subr.bf16.mxu0 0
        %1028 = vmatpush1.bf16.msra.mxu0 0
        %1029 = vmatprep.subr.bf16.mxu0 0
        %1030 = vmatpush1.bf16.msra.mxu0 0
        %1031 = vmatprep.mubr.bf16.mxu0 0
        %1032 = vmatmul.mubr.bf16.gmra.mrb[0].mxu0 %v997
        %v1033 = vpop.f32.mrb[0].mxu0
        %v1034 = vadd.f32 0.0, %v1033
        %v1035 = vpop.f32.mrb[0].mxu0
        %v1036 = vadd.f32 0.0, %v1035
        %v1037 = vpop.f32.mrb[0].mxu0
        %v1038 = vpop.f32.mrb[0].mxu0
        %1039 = vdwg.mxu0
        %1040 = vmatprep.subr.bf16.mxu0 0
        %1041 = vmatpush1.bf16.msra.mxu0 %v989
        %1042 = vmatprep.subr.bf16.mxu0 0
        %1043 = vmatpush1.bf16.msra.mxu0 0
        %1044 = vmatprep.subr.bf16.mxu0 0
        %1045 = vmatpush1.bf16.msra.mxu0 0
        %1046 = vmatprep.subr.bf16.mxu0 0
        %1047 = vmatpush1.bf16.msra.mxu0 0
        %1048 = vmatprep.subr.bf16.mxu0 0
        %1049 = vmatpush1.bf16.msra.mxu0 0
        %1050 = vmatprep.subr.bf16.mxu0 0
        %1051 = vmatpush1.bf16.msra.mxu0 0
        %1052 = vmatprep.subr.bf16.mxu0 0
        %1053 = vmatpush1.bf16.msra.mxu0 0
        %1054 = vmatprep.subr.bf16.mxu0 0
        %1055 = vmatpush1.bf16.msra.mxu0 0
        %1056 = vmatprep.subr.bf16.mxu0 0
        %1057 = vmatpush1.bf16.msra.mxu0 0
        %1058 = vmatprep.subr.bf16.mxu0 0
        %1059 = vmatpush1.bf16.msra.mxu0 0
        %1060 = vmatprep.subr.bf16.mxu0 0
        %1061 = vmatpush1.bf16.msra.mxu0 0
        %1062 = vmatprep.subr.bf16.mxu0 0
        %1063 = vmatpush1.bf16.msra.mxu0 0
        %1064 = vmatprep.subr.bf16.mxu0 0
        %1065 = vmatpush1.bf16.msra.mxu0 0
        %1066 = vmatprep.subr.bf16.mxu0 0
        %1067 = vmatpush1.bf16.msra.mxu0 0
        %1068 = vmatprep.subr.bf16.mxu0 0
        %1069 = vmatpush1.bf16.msra.mxu0 0
        %1070 = vmatprep.subr.bf16.mxu0 0
        %1071 = vmatpush1.bf16.msra.mxu0 0
        %1072 = vmatprep.mubr.bf16.mxu0 0
        %1073 = vmatmul.mubr.bf16.gmra.mrb[0].mxu0 %v997
        %v1074 = vpop.f32.mrb[0].mxu0
        %v1075 = vadd.f32 0.0, %v1074
        %v1076 = vpop.f32.mrb[0].mxu0
        %v1077 = vpop.f32.mrb[0].mxu0
        %v1078 = vpop.f32.mrb[0].mxu0
        %1079 = vdwg.mxu0
        %v1080 = vadd.f32 %v979, %v1034
        %v1081 = vadd.f32 %v980, %v1036
        %v1082 = vadd.f32 %v981, %v1075
        %s1083 = scalar_lea.vmem %s4, 16
        %v1084 = vld [vmem:[%s1083] sm:$0xf]
        %1085 = vrot.lane.b32.xlu0 %v693, 109
        %v1086 = vpop.permute.xlu0 %1085
        %1087 = vrot.lane.b32.xlu0 %v694, 109
        %v1088 = vpop.permute.xlu0 %1087
        %1089 = vrot.lane.b32.xlu0 %v695, 109
        %v1090 = vpop.permute.xlu0 %1089
        %vm1091 = vcmask 891904
        %v1092 = vsel %vm1091, %v1086, %v1088
        %v1093 = vsel %vm1091, %v1088, %v1090
        %v1098 = vsel %vm532, %v1084, 0
        %1100 = vmatprep.subr.bf16.mxu0 %v1093
        %1101 = vmatpush1.bf16.msra.mxu0 %v1092
        %1102 = vmatprep.subr.bf16.mxu0 0
        %1103 = vmatpush1.bf16.msra.mxu0 0
        %1104 = vmatprep.subr.bf16.mxu0 0
        %1105 = vmatpush1.bf16.msra.mxu0 0
        %1106 = vmatprep.subr.bf16.mxu0 0
        %1107 = vmatpush1.bf16.msra.mxu0 0
        %1108 = vmatprep.subr.bf16.mxu0 0
        %1109 = vmatpush1.bf16.msra.mxu0 0
        %1110 = vmatprep.subr.bf16.mxu0 0
        %1111 = vmatpush1.bf16.msra.mxu0 0
        %1112 = vmatprep.subr.bf16.mxu0 0
        %1113 = vmatpush1.bf16.msra.mxu0 0
        %1114 = vmatprep.subr.bf16.mxu0 0
        %1115 = vmatpush1.bf16.msra.mxu0 0
        %1116 = vmatprep.subr.bf16.mxu0 0
        %1117 = vmatpush1.bf16.msra.mxu0 0
        %1118 = vmatprep.subr.bf16.mxu0 0
        %1119 = vmatpush1.bf16.msra.mxu0 0
        %1120 = vmatprep.subr.bf16.mxu0 0
        %1121 = vmatpush1.bf16.msra.mxu0 0
        %1122 = vmatprep.subr.bf16.mxu0 0
        %1123 = vmatpush1.bf16.msra.mxu0 0
        %1124 = vmatprep.subr.bf16.mxu0 0
        %1125 = vmatpush1.bf16.msra.mxu0 0
        %1126 = vmatprep.subr.bf16.mxu0 0
        %1127 = vmatpush1.bf16.msra.mxu0 0
        %1128 = vmatprep.subr.bf16.mxu0 0
        %1129 = vmatpush1.bf16.msra.mxu0 0
        %1130 = vmatprep.subr.bf16.mxu0 0
        %1131 = vmatpush1.bf16.msra.mxu0 0
        %1132 = vmatprep.mubr.bf16.mxu0 0
        %1133 = vmatmul.mubr.bf16.gmra.mrb[0].mxu0 %v1098
        %v1134 = vpop.f32.mrb[0].mxu0
        %v1135 = vadd.f32 0.0, %v1134
        %v1136 = vpop.f32.mrb[0].mxu0
        %v1137 = vadd.f32 0.0, %v1136
        %v1138 = vpop.f32.mrb[0].mxu0
        %v1139 = vpop.f32.mrb[0].mxu0
        %1140 = vdwg.mxu0
        %1141 = vmatprep.subr.bf16.mxu0 0
        %1142 = vmatpush1.bf16.msra.mxu0 %v1090
        %1143 = vmatprep.subr.bf16.mxu0 0
        %1144 = vmatpush1.bf16.msra.mxu0 0
        %1145 = vmatprep.subr.bf16.mxu0 0
        %1146 = vmatpush1.bf16.msra.mxu0 0
        %1147 = vmatprep.subr.bf16.mxu0 0
        %1148 = vmatpush1.bf16.msra.mxu0 0
        %1149 = vmatprep.subr.bf16.mxu0 0
        %1150 = vmatpush1.bf16.msra.mxu0 0
        %1151 = vmatprep.subr.bf16.mxu0 0
        %1152 = vmatpush1.bf16.msra.mxu0 0
        %1153 = vmatprep.subr.bf16.mxu0 0
        %1154 = vmatpush1.bf16.msra.mxu0 0
        %1155 = vmatprep.subr.bf16.mxu0 0
        %1156 = vmatpush1.bf16.msra.mxu0 0
        %1157 = vmatprep.subr.bf16.mxu0 0
        %1158 = vmatpush1.bf16.msra.mxu0 0
        %1159 = vmatprep.subr.bf16.mxu0 0
        %1160 = vmatpush1.bf16.msra.mxu0 0
        %1161 = vmatprep.subr.bf16.mxu0 0
        %1162 = vmatpush1.bf16.msra.mxu0 0
        %1163 = vmatprep.subr.bf16.mxu0 0
        %1164 = vmatpush1.bf16.msra.mxu0 0
        %1165 = vmatprep.subr.bf16.mxu0 0
        %1166 = vmatpush1.bf16.msra.mxu0 0
        %1167 = vmatprep.subr.bf16.mxu0 0
        %1168 = vmatpush1.bf16.msra.mxu0 0
        %1169 = vmatprep.subr.bf16.mxu0 0
        %1170 = vmatpush1.bf16.msra.mxu0 0
        %1171 = vmatprep.subr.bf16.mxu0 0
        %1172 = vmatpush1.bf16.msra.mxu0 0
        %1173 = vmatprep.mubr.bf16.mxu0 0
        %1174 = vmatmul.mubr.bf16.gmra.mrb[0].mxu0 %v1098
        %v1175 = vpop.f32.mrb[0].mxu0
        %v1176 = vadd.f32 0.0, %v1175
        %v1177 = vpop.f32.mrb[0].mxu0
        %v1178 = vpop.f32.mrb[0].mxu0
        %v1179 = vpop.f32.mrb[0].mxu0
        %1180 = vdwg.mxu0
        %v1181 = vadd.f32 %v1080, %v1135
        %v1182 = vadd.f32 %v1081, %v1137
        %v1183 = vadd.f32 %v1082, %v1176
        %s1184 = scalar_lea.vmem %s4, 20
        %v1185 = vld [vmem:[%s1184] sm:$0xf]
        %1186 = vrot.lane.b32.xlu0 %v693, 108
        %v1187 = vpop.permute.xlu0 %1186
        %1188 = vrot.lane.b32.xlu0 %v694, 108
        %v1189 = vpop.permute.xlu0 %1188
        %1190 = vrot.lane.b32.xlu0 %v695, 108
        %v1191 = vpop.permute.xlu0 %1190
        %vm1192 = vcmask 883712
        %v1193 = vsel %vm1192, %v1187, %v1189
        %v1194 = vsel %vm1192, %v1189, %v1191
        %v1199 = vsel %vm532, %v1185, 0
        %1201 = vmatprep.subr.bf16.mxu0 %v1194
        %1202 = vmatpush1.bf16.msra.mxu0 %v1193
        %1203 = vmatprep.subr.bf16.mxu0 0
        %1204 = vmatpush1.bf16.msra.mxu0 0
        %1205 = vmatprep.subr.bf16.mxu0 0
        %1206 = vmatpush1.bf16.msra.mxu0 0
        %1207 = vmatprep.subr.bf16.mxu0 0
        %1208 = vmatpush1.bf16.msra.mxu0 0
        %1209 = vmatprep.subr.bf16.mxu0 0
        %1210 = vmatpush1.bf16.msra.mxu0 0
        %1211 = vmatprep.subr.bf16.mxu0 0
        %1212 = vmatpush1.bf16.msra.mxu0 0
        %1213 = vmatprep.subr.bf16.mxu0 0
        %1214 = vmatpush1.bf16.msra.mxu0 0
        %1215 = vmatprep.subr.bf16.mxu0 0
        %1216 = vmatpush1.bf16.msra.mxu0 0
        %1217 = vmatprep.subr.bf16.mxu0 0
        %1218 = vmatpush1.bf16.msra.mxu0 0
        %1219 = vmatprep.subr.bf16.mxu0 0
        %1220 = vmatpush1.bf16.msra.mxu0 0
        %1221 = vmatprep.subr.bf16.mxu0 0
        %1222 = vmatpush1.bf16.msra.mxu0 0
        %1223 = vmatprep.subr.bf16.mxu0 0
        %1224 = vmatpush1.bf16.msra.mxu0 0
        %1225 = vmatprep.subr.bf16.mxu0 0
        %1226 = vmatpush1.bf16.msra.mxu0 0
        %1227 = vmatprep.subr.bf16.mxu0 0
        %1228 = vmatpush1.bf16.msra.mxu0 0
        %1229 = vmatprep.subr.bf16.mxu0 0
        %1230 = vmatpush1.bf16.msra.mxu0 0
        %1231 = vmatprep.subr.bf16.mxu0 0
        %1232 = vmatpush1.bf16.msra.mxu0 0
        %1233 = vmatprep.mubr.bf16.mxu0 0
        %1234 = vmatmul.mubr.bf16.gmra.mrb[0].mxu0 %v1199
        %v1235 = vpop.f32.mrb[0].mxu0
        %v1236 = vadd.f32 0.0, %v1235
        %v1237 = vpop.f32.mrb[0].mxu0
        %v1238 = vadd.f32 0.0, %v1237
        %v1239 = vpop.f32.mrb[0].mxu0
        %v1240 = vpop.f32.mrb[0].mxu0
        %1241 = vdwg.mxu0
        %1242 = vmatprep.subr.bf16.mxu0 0
        %1243 = vmatpush1.bf16.msra.mxu0 %v1191
        %1244 = vmatprep.subr.bf16.mxu0 0
        %1245 = vmatpush1.bf16.msra.mxu0 0
        %1246 = vmatprep.subr.bf16.mxu0 0
        %1247 = vmatpush1.bf16.msra.mxu0 0
        %1248 = vmatprep.subr.bf16.mxu0 0
        %1249 = vmatpush1.bf16.msra.mxu0 0
        %1250 = vmatprep.subr.bf16.mxu0 0
        %1251 = vmatpush1.bf16.msra.mxu0 0
        %1252 = vmatprep.subr.bf16.mxu0 0
        %1253 = vmatpush1.bf16.msra.mxu0 0
        %1254 = vmatprep.subr.bf16.mxu0 0
        %1255 = vmatpush1.bf16.msra.mxu0 0
        %1256 = vmatprep.subr.bf16.mxu0 0
        %1257 = vmatpush1.bf16.msra.mxu0 0
        %1258 = vmatprep.subr.bf16.mxu0 0
        %1259 = vmatpush1.bf16.msra.mxu0 0
        %1260 = vmatprep.subr.bf16.mxu0 0
        %1261 = vmatpush1.bf16.msra.mxu0 0
        %1262 = vmatprep.subr.bf16.mxu0 0
        %1263 = vmatpush1.bf16.msra.mxu0 0
        %1264 = vmatprep.subr.bf16.mxu0 0
        %1265 = vmatpush1.bf16.msra.mxu0 0
        %1266 = vmatprep.subr.bf16.mxu0 0
        %1267 = vmatpush1.bf16.msra.mxu0 0
        %1268 = vmatprep.subr.bf16.mxu0 0
        %1269 = vmatpush1.bf16.msra.mxu0 0
        %1270 = vmatprep.subr.bf16.mxu0 0
        %1271 = vmatpush1.bf16.msra.mxu0 0
        %1272 = vmatprep.subr.bf16.mxu0 0
        %1273 = vmatpush1.bf16.msra.mxu0 0
        %1274 = vmatprep.mubr.bf16.mxu0 0
        %1275 = vmatmul.mubr.bf16.gmra.mrb[0].mxu0 %v1199
        %v1276 = vpop.f32.mrb[0].mxu0
        %v1277 = vadd.f32 0.0, %v1276
        %v1278 = vpop.f32.mrb[0].mxu0
        %v1279 = vpop.f32.mrb[0].mxu0
        %v1280 = vpop.f32.mrb[0].mxu0
        %1281 = vdwg.mxu0
        %v1282 = vadd.f32 %v1181, %v1236
        %v1283 = vadd.f32 %v1182, %v1238
        %v1284 = vadd.f32 %v1183, %v1277
        %s1285 = scalar_lea.vmem %s4, 24
        %v1286 = vld [vmem:[%s1285] sm:$0xf]
        %1287 = vrot.lane.b32.xlu0 %v693, 92
        %v1288 = vpop.permute.xlu0 %1287
        %1289 = vrot.lane.b32.xlu0 %v694, 92
        %v1290 = vpop.permute.xlu0 %1289
        %1291 = vrot.lane.b32.xlu0 %v695, 92
        %v1292 = vpop.permute.xlu0 %1291
        %vm1293 = vcmask 752640
        %v1294 = vsel %vm1293, %v1288, %v1290
        %v1295 = vsel %vm1293, %v1290, %v1292
        %v1300 = vsel %vm532, %v1286, 0
        %1302 = vmatprep.subr.bf16.mxu0 %v1295
        %1303 = vmatpush1.bf16.msra.mxu0 %v1294
        %1304 = vmatprep.subr.bf16.mxu0 0
        %1305 = vmatpush1.bf16.msra.mxu0 0
        %1306 = vmatprep.subr.bf16.mxu0 0
        %1307 = vmatpush1.bf16.msra.mxu0 0
        %1308 = vmatprep.subr.bf16.mxu0 0
        %1309 = vmatpush1.bf16.msra.mxu0 0
        %1310 = vmatprep.subr.bf16.mxu0 0
        %1311 = vmatpush1.bf16.msra.mxu0 0
        %1312 = vmatprep.subr.bf16.mxu0 0
        %1313 = vmatpush1.bf16.msra.mxu0 0
        %1314 = vmatprep.subr.bf16.mxu0 0
        %1315 = vmatpush1.bf16.msra.mxu0 0
        %1316 = vmatprep.subr.bf16.mxu0 0
        %1317 = vmatpush1.bf16.msra.mxu0 0
        %1318 = vmatprep.subr.bf16.mxu0 0
        %1319 = vmatpush1.bf16.msra.mxu0 0
        %1320 = vmatprep.subr.bf16.mxu0 0
        %1321 = vmatpush1.bf16.msra.mxu0 0
        %1322 = vmatprep.subr.bf16.mxu0 0
        %1323 = vmatpush1.bf16.msra.mxu0 0
        %1324 = vmatprep.subr.bf16.mxu0 0
        %1325 = vmatpush1.bf16.msra.mxu0 0
        %1326 = vmatprep.subr.bf16.mxu0 0
        %1327 = vmatpush1.bf16.msra.mxu0 0
        %1328 = vmatprep.subr.bf16.mxu0 0
        %1329 = vmatpush1.bf16.msra.mxu0 0
        %1330 = vmatprep.subr.bf16.mxu0 0
        %1331 = vmatpush1.bf16.msra.mxu0 0
        %1332 = vmatprep.subr.bf16.mxu0 0
        %1333 = vmatpush1.bf16.msra.mxu0 0
        %1334 = vmatprep.mubr.bf16.mxu0 0
        %1335 = vmatmul.mubr.bf16.gmra.mrb[0].mxu0 %v1300
        %v1336 = vpop.f32.mrb[0].mxu0
        %v1337 = vadd.f32 0.0, %v1336
        %v1338 = vpop.f32.mrb[0].mxu0
        %v1339 = vadd.f32 0.0, %v1338
        %v1340 = vpop.f32.mrb[0].mxu0
        %v1341 = vpop.f32.mrb[0].mxu0
        %1342 = vdwg.mxu0
        %1343 = vmatprep.subr.bf16.mxu0 0
        %1344 = vmatpush1.bf16.msra.mxu0 %v1292
        %1345 = vmatprep.subr.bf16.mxu0 0
        %1346 = vmatpush1.bf16.msra.mxu0 0
        %1347 = vmatprep.subr.bf16.mxu0 0
        %1348 = vmatpush1.bf16.msra.mxu0 0
        %1349 = vmatprep.subr.bf16.mxu0 0
        %1350 = vmatpush1.bf16.msra.mxu0 0
        %1351 = vmatprep.subr.bf16.mxu0 0
        %1352 = vmatpush1.bf16.msra.mxu0 0
        %1353 = vmatprep.subr.bf16.mxu0 0
        %1354 = vmatpush1.bf16.msra.mxu0 0
        %1355 = vmatprep.subr.bf16.mxu0 0
        %1356 = vmatpush1.bf16.msra.mxu0 0
        %1357 = vmatprep.subr.bf16.mxu0 0
        %1358 = vmatpush1.bf16.msra.mxu0 0
        %1359 = vmatprep.subr.bf16.mxu0 0
        %1360 = vmatpush1.bf16.msra.mxu0 0
        %1361 = vmatprep.subr.bf16.mxu0 0
        %1362 = vmatpush1.bf16.msra.mxu0 0
        %1363 = vmatprep.subr.bf16.mxu0 0
        %1364 = vmatpush1.bf16.msra.mxu0 0
        %1365 = vmatprep.subr.bf16.mxu0 0
        %1366 = vmatpush1.bf16.msra.mxu0 0
        %1367 = vmatprep.subr.bf16.mxu0 0
        %1368 = vmatpush1.bf16.msra.mxu0 0
        %1369 = vmatprep.subr.bf16.mxu0 0
        %1370 = vmatpush1.bf16.msra.mxu0 0
        %1371 = vmatprep.subr.bf16.mxu0 0
        %1372 = vmatpush1.bf16.msra.mxu0 0
        %1373 = vmatprep.subr.bf16.mxu0 0
        %1374 = vmatpush1.bf16.msra.mxu0 0
        %1375 = vmatprep.mubr.bf16.mxu0 0
        %1376 = vmatmul.mubr.bf16.gmra.mrb[0].mxu0 %v1300
        %v1377 = vpop.f32.mrb[0].mxu0
        %v1378 = vadd.f32 0.0, %v1377
        %v1379 = vpop.f32.mrb[0].mxu0
        %v1380 = vpop.f32.mrb[0].mxu0
        %v1381 = vpop.f32.mrb[0].mxu0
        %1382 = vdwg.mxu0
        %v1383 = vadd.f32 %v1282, %v1337
        %v1384 = vadd.f32 %v1283, %v1339
        %v1385 = vadd.f32 %v1284, %v1378
        %s1386 = scalar_lea.vmem %s4, 28
        %v1387 = vld [vmem:[%s1386] sm:$0xf]
        %1388 = vrot.lane.b32.xlu0 %v693, 91
        %v1389 = vpop.permute.xlu0 %1388
        %1390 = vrot.lane.b32.xlu0 %v694, 91
        %v1391 = vpop.permute.xlu0 %1390
        %1392 = vrot.lane.b32.xlu0 %v695, 91
        %v1393 = vpop.permute.xlu0 %1392
        %vm1394 = vcmask 744448
        %v1395 = vsel %vm1394, %v1389, %v1391
        %v1396 = vsel %vm1394, %v1391, %v1393
        %v1401 = vsel %vm532, %v1387, 0
        %1403 = vmatprep.subr.bf16.mxu0 %v1396
        %1404 = vmatpush1.bf16.msra.mxu0 %v1395
        %1405 = vmatprep.subr.bf16.mxu0 0
        %1406 = vmatpush1.bf16.msra.mxu0 0
        %1407 = vmatprep.subr.bf16.mxu0 0
        %1408 = vmatpush1.bf16.msra.mxu0 0
        %1409 = vmatprep.subr.bf16.mxu0 0
        %1410 = vmatpush1.bf16.msra.mxu0 0
        %1411 = vmatprep.subr.bf16.mxu0 0
        %1412 = vmatpush1.bf16.msra.mxu0 0
        %1413 = vmatprep.subr.bf16.mxu0 0
        %1414 = vmatpush1.bf16.msra.mxu0 0
        %1415 = vmatprep.subr.bf16.mxu0 0
        %1416 = vmatpush1.bf16.msra.mxu0 0
        %1417 = vmatprep.subr.bf16.mxu0 0
        %1418 = vmatpush1.bf16.msra.mxu0 0
        %1419 = vmatprep.subr.bf16.mxu0 0
        %1420 = vmatpush1.bf16.msra.mxu0 0
        %1421 = vmatprep.subr.bf16.mxu0 0
        %1422 = vmatpush1.bf16.msra.mxu0 0
        %1423 = vmatprep.subr.bf16.mxu0 0
        %1424 = vmatpush1.bf16.msra.mxu0 0
        %1425 = vmatprep.subr.bf16.mxu0 0
        %1426 = vmatpush1.bf16.msra.mxu0 0
        %1427 = vmatprep.subr.bf16.mxu0 0
        %1428 = vmatpush1.bf16.msra.mxu0 0
        %1429 = vmatprep.subr.bf16.mxu0 0
        %1430 = vmatpush1.bf16.msra.mxu0 0
        %1431 = vmatprep.subr.bf16.mxu0 0
        %1432 = vmatpush1.bf16.msra.mxu0 0
        %1433 = vmatprep.subr.bf16.mxu0 0
        %1434 = vmatpush1.bf16.msra.mxu0 0
        %1435 = vmatprep.mubr.bf16.mxu0 0
        %1436 = vmatmul.mubr.bf16.gmra.mrb[0].mxu0 %v1401
        %v1437 = vpop.f32.mrb[0].mxu0
        %v1438 = vadd.f32 0.0, %v1437
        %v1439 = vpop.f32.mrb[0].mxu0
        %v1440 = vadd.f32 0.0, %v1439
        %v1441 = vpop.f32.mrb[0].mxu0
        %v1442 = vpop.f32.mrb[0].mxu0
        %1443 = vdwg.mxu0
        %1444 = vmatprep.subr.bf16.mxu0 0
        %1445 = vmatpush1.bf16.msra.mxu0 %v1393
        %1446 = vmatprep.subr.bf16.mxu0 0
        %1447 = vmatpush1.bf16.msra.mxu0 0
        %1448 = vmatprep.subr.bf16.mxu0 0
        %1449 = vmatpush1.bf16.msra.mxu0 0
        %1450 = vmatprep.subr.bf16.mxu0 0
        %1451 = vmatpush1.bf16.msra.mxu0 0
        %1452 = vmatprep.subr.bf16.mxu0 0
        %1453 = vmatpush1.bf16.msra.mxu0 0
        %1454 = vmatprep.subr.bf16.mxu0 0
        %1455 = vmatpush1.bf16.msra.mxu0 0
        %1456 = vmatprep.subr.bf16.mxu0 0
        %1457 = vmatpush1.bf16.msra.mxu0 0
        %1458 = vmatprep.subr.bf16.mxu0 0
        %1459 = vmatpush1.bf16.msra.mxu0 0
        %1460 = vmatprep.subr.bf16.mxu0 0
        %1461 = vmatpush1.bf16.msra.mxu0 0
        %1462 = vmatprep.subr.bf16.mxu0 0
        %1463 = vmatpush1.bf16.msra.mxu0 0
        %1464 = vmatprep.subr.bf16.mxu0 0
        %1465 = vmatpush1.bf16.msra.mxu0 0
        %1466 = vmatprep.subr.bf16.mxu0 0
        %1467 = vmatpush1.bf16.msra.mxu0 0
        %1468 = vmatprep.subr.bf16.mxu0 0
        %1469 = vmatpush1.bf16.msra.mxu0 0
        %1470 = vmatprep.subr.bf16.mxu0 0
        %1471 = vmatpush1.bf16.msra.mxu0 0
        %1472 = vmatprep.subr.bf16.mxu0 0
        %1473 = vmatpush1.bf16.msra.mxu0 0
        %1474 = vmatprep.subr.bf16.mxu0 0
        %1475 = vmatpush1.bf16.msra.mxu0 0
        %1476 = vmatprep.mubr.bf16.mxu0 0
        %1477 = vmatmul.mubr.bf16.gmra.mrb[0].mxu0 %v1401
        %v1478 = vpop.f32.mrb[0].mxu0
        %v1479 = vadd.f32 0.0, %v1478
        %v1480 = vpop.f32.mrb[0].mxu0
        %v1481 = vpop.f32.mrb[0].mxu0
        %v1482 = vpop.f32.mrb[0].mxu0
        %1483 = vdwg.mxu0
        %v1484 = vadd.f32 %v1383, %v1438
        %v1485 = vadd.f32 %v1384, %v1440
        %v1486 = vadd.f32 %v1385, %v1479
        %s1487 = scalar_lea.vmem %s4, 32
        %v1488 = vld [vmem:[%s1487] sm:$0xf]
        %1489 = vrot.lane.b32.xlu0 %v693, 90
        %v1490 = vpop.permute.xlu0 %1489
        %1491 = vrot.lane.b32.xlu0 %v694, 90
        %v1492 = vpop.permute.xlu0 %1491
        %1493 = vrot.lane.b32.xlu0 %v695, 90
        %v1494 = vpop.permute.xlu0 %1493
        %vm1495 = vcmask 736256
        %v1496 = vsel %vm1495, %v1490, %v1492
        %v1497 = vsel %vm1495, %v1492, %v1494
        %v1502 = vsel %vm532, %v1488, 0
        %1504 = vmatprep.subr.bf16.mxu0 %v1497
        %1505 = vmatpush1.bf16.msra.mxu0 %v1496
        %1506 = vmatprep.subr.bf16.mxu0 0
        %1507 = vmatpush1.bf16.msra.mxu0 0
        %1508 = vmatprep.subr.bf16.mxu0 0
        %1509 = vmatpush1.bf16.msra.mxu0 0
        %1510 = vmatprep.subr.bf16.mxu0 0
        %1511 = vmatpush1.bf16.msra.mxu0 0
        %1512 = vmatprep.subr.bf16.mxu0 0
        %1513 = vmatpush1.bf16.msra.mxu0 0
        %1514 = vmatprep.subr.bf16.mxu0 0
        %1515 = vmatpush1.bf16.msra.mxu0 0
        %1516 = vmatprep.subr.bf16.mxu0 0
        %1517 = vmatpush1.bf16.msra.mxu0 0
        %1518 = vmatprep.subr.bf16.mxu0 0
        %1519 = vmatpush1.bf16.msra.mxu0 0
        %1520 = vmatprep.subr.bf16.mxu0 0
        %1521 = vmatpush1.bf16.msra.mxu0 0
        %1522 = vmatprep.subr.bf16.mxu0 0
        %1523 = vmatpush1.bf16.msra.mxu0 0
        %1524 = vmatprep.subr.bf16.mxu0 0
        %1525 = vmatpush1.bf16.msra.mxu0 0
        %1526 = vmatprep.subr.bf16.mxu0 0
        %1527 = vmatpush1.bf16.msra.mxu0 0
        %1528 = vmatprep.subr.bf16.mxu0 0
        %1529 = vmatpush1.bf16.msra.mxu0 0
        %1530 = vmatprep.subr.bf16.mxu0 0
        %1531 = vmatpush1.bf16.msra.mxu0 0
        %1532 = vmatprep.subr.bf16.mxu0 0
        %1533 = vmatpush1.bf16.msra.mxu0 0
        %1534 = vmatprep.subr.bf16.mxu0 0
        %1535 = vmatpush1.bf16.msra.mxu0 0
        %1536 = vmatprep.mubr.bf16.mxu0 0
        %1537 = vmatmul.mubr.bf16.gmra.mrb[0].mxu0 %v1502
        %v1538 = vpop.f32.mrb[0].mxu0
        %v1539 = vadd.f32 0.0, %v1538
        %v1540 = vpop.f32.mrb[0].mxu0
        %v1541 = vadd.f32 0.0, %v1540
        %v1542 = vpop.f32.mrb[0].mxu0
        %v1543 = vpop.f32.mrb[0].mxu0
        %1544 = vdwg.mxu0
        %1545 = vmatprep.subr.bf16.mxu0 0
        %1546 = vmatpush1.bf16.msra.mxu0 %v1494
        %1547 = vmatprep.subr.bf16.mxu0 0
        %1548 = vmatpush1.bf16.msra.mxu0 0
        %1549 = vmatprep.subr.bf16.mxu0 0
        %1550 = vmatpush1.bf16.msra.mxu0 0
        %1551 = vmatprep.subr.bf16.mxu0 0
        %1552 = vmatpush1.bf16.msra.mxu0 0
        %1553 = vmatprep.subr.bf16.mxu0 0
        %1554 = vmatpush1.bf16.msra.mxu0 0
        %1555 = vmatprep.subr.bf16.mxu0 0
        %1556 = vmatpush1.bf16.msra.mxu0 0
        %1557 = vmatprep.subr.bf16.mxu0 0
        %1558 = vmatpush1.bf16.msra.mxu0 0
        %1559 = vmatprep.subr.bf16.mxu0 0
        %1560 = vmatpush1.bf16.msra.mxu0 0
        %1561 = vmatprep.subr.bf16.mxu0 0
        %1562 = vmatpush1.bf16.msra.mxu0 0
        %1563 = vmatprep.subr.bf16.mxu0 0
        %1564 = vmatpush1.bf16.msra.mxu0 0
        %1565 = vmatprep.subr.bf16.mxu0 0
        %1566 = vmatpush1.bf16.msra.mxu0 0
        %1567 = vmatprep.subr.bf16.mxu0 0
        %1568 = vmatpush1.bf16.msra.mxu0 0
        %1569 = vmatprep.subr.bf16.mxu0 0
        %1570 = vmatpush1.bf16.msra.mxu0 0
        %1571 = vmatprep.subr.bf16.mxu0 0
        %1572 = vmatpush1.bf16.msra.mxu0 0
        %1573 = vmatprep.subr.bf16.mxu0 0
        %1574 = vmatpush1.bf16.msra.mxu0 0
        %1575 = vmatprep.subr.bf16.mxu0 0
        %1576 = vmatpush1.bf16.msra.mxu0 0
        %1577 = vmatprep.mubr.bf16.mxu0 0
        %1578 = vmatmul.mubr.bf16.gmra.mrb[0].mxu0 %v1502
        %v1579 = vpop.f32.mrb[0].mxu0
        %v1580 = vadd.f32 0.0, %v1579
        %v1581 = vpop.f32.mrb[0].mxu0
        %v1582 = vpop.f32.mrb[0].mxu0
        %v1583 = vpop.f32.mrb[0].mxu0
        %1584 = vdwg.mxu0
        %v1585 = vadd.f32 %v1484, %v1539
        %v1586 = vadd.f32 %v1485, %v1541
        %v1587 = vadd.f32 %v1486, %v1580
        %v1588 = vld [vmem:[%s5] sm:$0xff]
        %1590 = vset.pattern.permute.xlu0 0
        %1591 = vperm.xlu0 %1590, %v1588
        %v1592 = vpop.permute.xlu0 %1591
        %v1594 = vadd.f32 %v1585, %v1592
        %v1595 = vadd.f32 %v1586, %v1592
        %v1596 = vadd.f32 %v1587, %v1592
        %v1597 = vmax.f32 %v1594, 0.0
        %v1598 = vmax.f32 %v1595, 0.0
        %v1599 = vmax.f32 %v1596, 0.0
        %v1600 = vld [vmem:[%s8] sm:$0x7]
        %v1602 = vlaneseq
        %v1603 = vshrl.u32 %v1602, 7
        %v1604 = vsub.s32 0, %v1603
        %v1605 = vrot.slane %v1600, %v1604
        %v1606 = vlaneseq
        %v1607 = vshrl.u32 %v1606, 7
        %v1608 = vsub.s32 1, %v1607
        %v1609 = vrot.slane %v1600, %v1608
        %v1610 = vlaneseq
        %v1611 = vshrl.u32 %v1610, 7
        %v1612 = vsub.s32 2, %v1611
        %v1613 = vrot.slane %v1600, %v1612
        %v1617 = vmul.f32 %v1597, %v1605
        %v1618 = vmul.f32 %v1598, %v1609
        %v1619 = vmul.f32 %v1599, %v1613
        %v1620 = vpack.c.bf16 %v1617, %v1617
        %v1621 = vpack.c.bf16 %v1618, %v1618
        %v1622 = vpack.c.bf16 %v1619, %v1619
        %v1626 = vunpack.c.l.b16 %v1620
        %v1627 = vunpack.c.l.b16 %v1621
        %v1628 = vunpack.c.l.b16 %v1622
        %v1629 = vpack.c.b16 %v1627, %v1626
        %v1630 = vpack.c.b16 %v1628, %v1628
        %1631 = vrot.lane.b32.xlu0 %v1629, 19
        %v1632 = vpop.permute.xlu0 %1631
        %1633 = vrot.lane.b32.xlu0 %v1630, 19
        %v1634 = vpop.permute.xlu0 %1633
        %v1635 = vrot.slane %v1632, 4
        %vm1636 = vcmask 154624
        %v1637 = vsel %vm1636, %v1635, %v1632
        %v1638 = vsel %vm1636, %v1635, %v1634
        %vm1641 = vcmask 1043608
        %vm1642 = vcmask 1047556
        %vm1643 = vmor %vm1642, %vm1641
        %1644 = vst.msk [vmem:[#allocation3] sm:$0xff] %vm1643, %v1637
        %vm1645 = vcmask 396288
        %1646 = vst.msk [vmem:[#allocation3 + $0x8] sm:$0xf] %vm1645, %v1638
        %v1647 = vld [vmem:[%s6] sm:$0xf]
        %v1648 = vld [vmem:[#allocation3] sm:$0xff]
        %v1649 = vld [vmem:[#allocation3 + $0x8] sm:$0xf]
        %s1650 = scalar_lea.vmem %s6, 4
        %v1651 = vld [vmem:[%s1650] sm:$0xf]
        %v1654 = vunpack.c.l.b16 %v1648
        %v1655 = vunpack.c.h.b16 %v1648
        %v1656 = vunpack.c.l.b16 %v1649
        %v1657 = vpack.c.b16 %v1654, %v1654
        %v1658 = vpack.c.b16 %v1655, %v1655
        %v1659 = vpack.c.b16 %v1656, %v1656
        %1660 = vrot.lane.b32.xlu0 %v1657, 127
        %v1661 = vpop.permute.xlu0 %1660
        %1662 = vrot.lane.b32.xlu0 %v1658, 127
        %v1663 = vpop.permute.xlu0 %1662
        %1664 = vrot.lane.b32.xlu0 %v1659, 127
        %v1665 = vpop.permute.xlu0 %1664
        %v1666 = vsel %vm707, %v1661, %v1663
        %v1667 = vsel %vm707, %v1663, %v1665
        %vm1668 = vcmask 64512
        %v1670 = vsel %vm1668, %v1651, 0
        %vm1672 = vcmask 1043456
        %v1674 = vsel %vm1672, %v1666, 0
        %v1677 = vsel %vm1672, %v1667, 0
        %v1680 = vsel %vm1672, %v1665, 0
        %1682 = vmatprep.subr.bf16.mxu0 %v1677
        %1683 = vmatpush1.bf16.msra.mxu0 %v1674
        %1684 = vmatprep.subr.bf16.mxu0 0
        %1685 = vmatpush1.bf16.msra.mxu0 0
        %1686 = vmatprep.subr.bf16.mxu0 0
        %1687 = vmatpush1.bf16.msra.mxu0 0
        %1688 = vmatprep.subr.bf16.mxu0 0
        %1689 = vmatpush1.bf16.msra.mxu0 0
        %1690 = vmatprep.subr.bf16.mxu0 0
        %1691 = vmatpush1.bf16.msra.mxu0 0
        %1692 = vmatprep.subr.bf16.mxu0 0
        %1693 = vmatpush1.bf16.msra.mxu0 0
        %1694 = vmatprep.subr.bf16.mxu0 0
        %1695 = vmatpush1.bf16.msra.mxu0 0
        %1696 = vmatprep.subr.bf16.mxu0 0
        %1697 = vmatpush1.bf16.msra.mxu0 0
        %1698 = vmatprep.subr.bf16.mxu0 0
        %1699 = vmatpush1.bf16.msra.mxu0 0
        %1700 = vmatprep.subr.bf16.mxu0 0
        %1701 = vmatpush1.bf16.msra.mxu0 0
        %1702 = vmatprep.subr.bf16.mxu0 0
        %1703 = vmatpush1.bf16.msra.mxu0 0
        %1704 = vmatprep.subr.bf16.mxu0 0
        %1705 = vmatpush1.bf16.msra.mxu0 0
        %1706 = vmatprep.subr.bf16.mxu0 0
        %1707 = vmatpush1.bf16.msra.mxu0 0
        %1708 = vmatprep.subr.bf16.mxu0 0
        %1709 = vmatpush1.bf16.msra.mxu0 0
        %1710 = vmatprep.subr.bf16.mxu0 0
        %1711 = vmatpush1.bf16.msra.mxu0 0
        %1712 = vmatprep.subr.bf16.mxu0 0
        %1713 = vmatpush1.bf16.msra.mxu0 0
        %1714 = vmatprep.mubr.bf16.mxu0 0
        %1715 = vmatmul.mubr.bf16.gmra.mrb[0].mxu0 %v1670
        %v1716 = vpop.f32.mrb[0].mxu0
        %v1717 = vadd.f32 0.0, %v1716
        %v1718 = vpop.f32.mrb[0].mxu0
        %v1719 = vadd.f32 0.0, %v1718
        %v1720 = vpop.f32.mrb[0].mxu0
        %v1721 = vpop.f32.mrb[0].mxu0
        %1722 = vdwg.mxu0
        %1723 = vmatprep.subr.bf16.mxu0 0
        %1724 = vmatpush1.bf16.msra.mxu0 %v1680
        %1725 = vmatprep.subr.bf16.mxu0 0
        %1726 = vmatpush1.bf16.msra.mxu0 0
        %1727 = vmatprep.subr.bf16.mxu0 0
        %1728 = vmatpush1.bf16.msra.mxu0 0
        %1729 = vmatprep.subr.bf16.mxu0 0
        %1730 = vmatpush1.bf16.msra.mxu0 0
        %1731 = vmatprep.subr.bf16.mxu0 0
        %1732 = vmatpush1.bf16.msra.mxu0 0
        %1733 = vmatprep.subr.bf16.mxu0 0
        %1734 = vmatpush1.bf16.msra.mxu0 0
        %1735 = vmatprep.subr.bf16.mxu0 0
        %1736 = vmatpush1.bf16.msra.mxu0 0
        %1737 = vmatprep.subr.bf16.mxu0 0
        %1738 = vmatpush1.bf16.msra.mxu0 0
        %1739 = vmatprep.subr.bf16.mxu0 0
        %1740 = vmatpush1.bf16.msra.mxu0 0
        %1741 = vmatprep.subr.bf16.mxu0 0
        %1742 = vmatpush1.bf16.msra.mxu0 0
        %1743 = vmatprep.subr.bf16.mxu0 0
        %1744 = vmatpush1.bf16.msra.mxu0 0
        %1745 = vmatprep.subr.bf16.mxu0 0
        %1746 = vmatpush1.bf16.msra.mxu0 0
        %1747 = vmatprep.subr.bf16.mxu0 0
        %1748 = vmatpush1.bf16.msra.mxu0 0
        %1749 = vmatprep.subr.bf16.mxu0 0
        %1750 = vmatpush1.bf16.msra.mxu0 0
        %1751 = vmatprep.subr.bf16.mxu0 0
        %1752 = vmatpush1.bf16.msra.mxu0 0
        %1753 = vmatprep.subr.bf16.mxu0 0
        %1754 = vmatpush1.bf16.msra.mxu0 0
        %1755 = vmatprep.mubr.bf16.mxu0 0
        %1756 = vmatmul.mubr.bf16.gmra.mrb[0].mxu0 %v1670
        %v1757 = vpop.f32.mrb[0].mxu0
        %v1758 = vadd.f32 0.0, %v1757
        %v1759 = vpop.f32.mrb[0].mxu0
        %v1760 = vpop.f32.mrb[0].mxu0
        %v1761 = vpop.f32.mrb[0].mxu0
        %1762 = vdwg.mxu0
        %v1764 = vsel %vm1668, %v1647, 0
        %v1767 = vsel %vm1672, %v1657, 0
        %v1770 = vsel %vm1672, %v1658, 0
        %v1773 = vsel %vm1672, %v1659, 0
        %1775 = vmatprep.subr.bf16.mxu0 %v1770
        %1776 = vmatpush1.bf16.msra.mxu0 %v1767
        %1777 = vmatprep.subr.bf16.mxu0 0
        %1778 = vmatpush1.bf16.msra.mxu0 0
        %1779 = vmatprep.subr.bf16.mxu0 0
        %1780 = vmatpush1.bf16.msra.mxu0 0
        %1781 = vmatprep.subr.bf16.mxu0 0
        %1782 = vmatpush1.bf16.msra.mxu0 0
        %1783 = vmatprep.subr.bf16.mxu0 0
        %1784 = vmatpush1.bf16.msra.mxu0 0
        %1785 = vmatprep.subr.bf16.mxu0 0
        %1786 = vmatpush1.bf16.msra.mxu0 0
        %1787 = vmatprep.subr.bf16.mxu0 0
        %1788 = vmatpush1.bf16.msra.mxu0 0
        %1789 = vmatprep.subr.bf16.mxu0 0
        %1790 = vmatpush1.bf16.msra.mxu0 0
        %1791 = vmatprep.subr.bf16.mxu0 0
        %1792 = vmatpush1.bf16.msra.mxu0 0
        %1793 = vmatprep.subr.bf16.mxu0 0
        %1794 = vmatpush1.bf16.msra.mxu0 0
        %1795 = vmatprep.subr.bf16.mxu0 0
        %1796 = vmatpush1.bf16.msra.mxu0 0
        %1797 = vmatprep.subr.bf16.mxu0 0
        %1798 = vmatpush1.bf16.msra.mxu0 0
        %1799 = vmatprep.subr.bf16.mxu0 0
        %1800 = vmatpush1.bf16.msra.mxu0 0
        %1801 = vmatprep.subr.bf16.mxu0 0
        %1802 = vmatpush1.bf16.msra.mxu0 0
        %1803 = vmatprep.subr.bf16.mxu0 0
        %1804 = vmatpush1.bf16.msra.mxu0 0
        %1805 = vmatprep.subr.bf16.mxu0 0
        %1806 = vmatpush1.bf16.msra.mxu0 0
        %1807 = vmatprep.mubr.bf16.mxu0 0
        %1808 = vmatmul.mubr.bf16.gmra.mrb[0].mxu0 %v1764
        %v1809 = vpop.f32.mrb[0].mxu0
        %v1810 = vadd.f32 %v1717, %v1809
        %v1811 = vpop.f32.mrb[0].mxu0
        %v1812 = vadd.f32 %v1719, %v1811
        %v1813 = vpop.f32.mrb[0].mxu0
        %v1814 = vpop.f32.mrb[0].mxu0
        %1815 = vdwg.mxu0
        %1816 = vmatprep.subr.bf16.mxu0 0
        %1817 = vmatpush1.bf16.msra.mxu0 %v1773
        %1818 = vmatprep.subr.bf16.mxu0 0
        %1819 = vmatpush1.bf16.msra.mxu0 0
        %1820 = vmatprep.subr.bf16.mxu0 0
        %1821 = vmatpush1.bf16.msra.mxu0 0
        %1822 = vmatprep.subr.bf16.mxu0 0
        %1823 = vmatpush1.bf16.msra.mxu0 0
        %1824 = vmatprep.subr.bf16.mxu0 0
        %1825 = vmatpush1.bf16.msra.mxu0 0
        %1826 = vmatprep.subr.bf16.mxu0 0
        %1827 = vmatpush1.bf16.msra.mxu0 0
        %1828 = vmatprep.subr.bf16.mxu0 0
        %1829 = vmatpush1.bf16.msra.mxu0 0
        %1830 = vmatprep.subr.bf16.mxu0 0
        %1831 = vmatpush1.bf16.msra.mxu0 0
        %1832 = vmatprep.subr.bf16.mxu0 0
        %1833 = vmatpush1.bf16.msra.mxu0 0
        %1834 = vmatprep.subr.bf16.mxu0 0
        %1835 = vmatpush1.bf16.msra.mxu0 0
        %1836 = vmatprep.subr.bf16.mxu0 0
        %1837 = vmatpush1.bf16.msra.mxu0 0
        %1838 = vmatprep.subr.bf16.mxu0 0
        %1839 = vmatpush1.bf16.msra.mxu0 0
        %1840 = vmatprep.subr.bf16.mxu0 0
        %1841 = vmatpush1.bf16.msra.mxu0 0
        %1842 = vmatprep.subr.bf16.mxu0 0
        %1843 = vmatpush1.bf16.msra.mxu0 0
        %1844 = vmatprep.subr.bf16.mxu0 0
        %1845 = vmatpush1.bf16.msra.mxu0 0
        %1846 = vmatprep.subr.bf16.mxu0 0
        %1847 = vmatpush1.bf16.msra.mxu0 0
        %1848 = vmatprep.mubr.bf16.mxu0 0
        %1849 = vmatmul.mubr.bf16.gmra.mrb[0].mxu0 %v1764
        %v1850 = vpop.f32.mrb[0].mxu0
        %v1851 = vadd.f32 %v1758, %v1850
        %v1852 = vpop.f32.mrb[0].mxu0
        %v1853 = vpop.f32.mrb[0].mxu0
        %v1854 = vpop.f32.mrb[0].mxu0
        %1855 = vdwg.mxu0
        %s1856 = scalar_lea.vmem %s6, 8
        %v1857 = vld [vmem:[%s1856] sm:$0xf]
        %1858 = vrot.lane.b32.xlu0 %v1657, 126
        %v1859 = vpop.permute.xlu0 %1858
        %1860 = vrot.lane.b32.xlu0 %v1658, 126
        %v1861 = vpop.permute.xlu0 %1860
        %1862 = vrot.lane.b32.xlu0 %v1659, 126
        %v1863 = vpop.permute.xlu0 %1862
        %v1864 = vsel %vm889, %v1859, %v1861
        %v1865 = vsel %vm889, %v1861, %v1863
        %v1867 = vsel %vm1668, %v1857, 0
        %v1870 = vsel %vm1672, %v1864, 0
        %v1873 = vsel %vm1672, %v1865, 0
        %v1876 = vsel %vm1672, %v1863, 0
        %1878 = vmatprep.subr.bf16.mxu0 %v1873
        %1879 = vmatpush1.bf16.msra.mxu0 %v1870
        %1880 = vmatprep.subr.bf16.mxu0 0
        %1881 = vmatpush1.bf16.msra.mxu0 0
        %1882 = vmatprep.subr.bf16.mxu0 0
        %1883 = vmatpush1.bf16.msra.mxu0 0
        %1884 = vmatprep.subr.bf16.mxu0 0
        %1885 = vmatpush1.bf16.msra.mxu0 0
        %1886 = vmatprep.subr.bf16.mxu0 0
        %1887 = vmatpush1.bf16.msra.mxu0 0
        %1888 = vmatprep.subr.bf16.mxu0 0
        %1889 = vmatpush1.bf16.msra.mxu0 0
        %1890 = vmatprep.subr.bf16.mxu0 0
        %1891 = vmatpush1.bf16.msra.mxu0 0
        %1892 = vmatprep.subr.bf16.mxu0 0
        %1893 = vmatpush1.bf16.msra.mxu0 0
        %1894 = vmatprep.subr.bf16.mxu0 0
        %1895 = vmatpush1.bf16.msra.mxu0 0
        %1896 = vmatprep.subr.bf16.mxu0 0
        %1897 = vmatpush1.bf16.msra.mxu0 0
        %1898 = vmatprep.subr.bf16.mxu0 0
        %1899 = vmatpush1.bf16.msra.mxu0 0
        %1900 = vmatprep.subr.bf16.mxu0 0
        %1901 = vmatpush1.bf16.msra.mxu0 0
        %1902 = vmatprep.subr.bf16.mxu0 0
        %1903 = vmatpush1.bf16.msra.mxu0 0
        %1904 = vmatprep.subr.bf16.mxu0 0
        %1905 = vmatpush1.bf16.msra.mxu0 0
        %1906 = vmatprep.subr.bf16.mxu0 0
        %1907 = vmatpush1.bf16.msra.mxu0 0
        %1908 = vmatprep.subr.bf16.mxu0 0
        %1909 = vmatpush1.bf16.msra.mxu0 0
        %1910 = vmatprep.mubr.bf16.mxu0 0
        %1911 = vmatmul.mubr.bf16.gmra.mrb[0].mxu0 %v1867
        %v1912 = vpop.f32.mrb[0].mxu0
        %v1913 = vadd.f32 0.0, %v1912
        %v1914 = vpop.f32.mrb[0].mxu0
        %v1915 = vadd.f32 0.0, %v1914
        %v1916 = vpop.f32.mrb[0].mxu0
        %v1917 = vpop.f32.mrb[0].mxu0
        %1918 = vdwg.mxu0
        %1919 = vmatprep.subr.bf16.mxu0 0
        %1920 = vmatpush1.bf16.msra.mxu0 %v1876
        %1921 = vmatprep.subr.bf16.mxu0 0
        %1922 = vmatpush1.bf16.msra.mxu0 0
        %1923 = vmatprep.subr.bf16.mxu0 0
        %1924 = vmatpush1.bf16.msra.mxu0 0
        %1925 = vmatprep.subr.bf16.mxu0 0
        %1926 = vmatpush1.bf16.msra.mxu0 0
        %1927 = vmatprep.subr.bf16.mxu0 0
        %1928 = vmatpush1.bf16.msra.mxu0 0
        %1929 = vmatprep.subr.bf16.mxu0 0
        %1930 = vmatpush1.bf16.msra.mxu0 0
        %1931 = vmatprep.subr.bf16.mxu0 0
        %1932 = vmatpush1.bf16.msra.mxu0 0
        %1933 = vmatprep.subr.bf16.mxu0 0
        %1934 = vmatpush1.bf16.msra.mxu0 0
        %1935 = vmatprep.subr.bf16.mxu0 0
        %1936 = vmatpush1.bf16.msra.mxu0 0
        %1937 = vmatprep.subr.bf16.mxu0 0
        %1938 = vmatpush1.bf16.msra.mxu0 0
        %1939 = vmatprep.subr.bf16.mxu0 0
        %1940 = vmatpush1.bf16.msra.mxu0 0
        %1941 = vmatprep.subr.bf16.mxu0 0
        %1942 = vmatpush1.bf16.msra.mxu0 0
        %1943 = vmatprep.subr.bf16.mxu0 0
        %1944 = vmatpush1.bf16.msra.mxu0 0
        %1945 = vmatprep.subr.bf16.mxu0 0
        %1946 = vmatpush1.bf16.msra.mxu0 0
        %1947 = vmatprep.subr.bf16.mxu0 0
        %1948 = vmatpush1.bf16.msra.mxu0 0
        %1949 = vmatprep.subr.bf16.mxu0 0
        %1950 = vmatpush1.bf16.msra.mxu0 0
        %1951 = vmatprep.mubr.bf16.mxu0 0
        %1952 = vmatmul.mubr.bf16.gmra.mrb[0].mxu0 %v1867
        %v1953 = vpop.f32.mrb[0].mxu0
        %v1954 = vadd.f32 0.0, %v1953
        %v1955 = vpop.f32.mrb[0].mxu0
        %v1956 = vpop.f32.mrb[0].mxu0
        %v1957 = vpop.f32.mrb[0].mxu0
        %1958 = vdwg.mxu0
        %v1959 = vadd.f32 %v1810, %v1913
        %v1960 = vadd.f32 %v1812, %v1915
        %v1961 = vadd.f32 %v1851, %v1954
        %s1962 = scalar_lea.vmem %s6, 12
        %v1963 = vld [vmem:[%s1962] sm:$0xf]
        %1964 = vrot.lane.b32.xlu0 %v1657, 110
        %v1965 = vpop.permute.xlu0 %1964
        %1966 = vrot.lane.b32.xlu0 %v1658, 110
        %v1967 = vpop.permute.xlu0 %1966
        %1968 = vrot.lane.b32.xlu0 %v1659, 110
        %v1969 = vpop.permute.xlu0 %1968
        %v1970 = vsel %vm990, %v1965, %v1967
        %v1971 = vsel %vm990, %v1967, %v1969
        %v1973 = vsel %vm1668, %v1963, 0
        %v1976 = vsel %vm1672, %v1970, 0
        %v1979 = vsel %vm1672, %v1971, 0
        %v1982 = vsel %vm1672, %v1969, 0
        %1984 = vmatprep.subr.bf16.mxu0 %v1979
        %1985 = vmatpush1.bf16.msra.mxu0 %v1976
        %1986 = vmatprep.subr.bf16.mxu0 0
        %1987 = vmatpush1.bf16.msra.mxu0 0
        %1988 = vmatprep.subr.bf16.mxu0 0
        %1989 = vmatpush1.bf16.msra.mxu0 0
        %1990 = vmatprep.subr.bf16.mxu0 0
        %1991 = vmatpush1.bf16.msra.mxu0 0
        %1992 = vmatprep.subr.bf16.mxu0 0
        %1993 = vmatpush1.bf16.msra.mxu0 0
        %1994 = vmatprep.subr.bf16.mxu0 0
        %1995 = vmatpush1.bf16.msra.mxu0 0
        %1996 = vmatprep.subr.bf16.mxu0 0
        %1997 = vmatpush1.bf16.msra.mxu0 0
        %1998 = vmatprep.subr.bf16.mxu0 0
        %1999 = vmatpush1.bf16.msra.mxu0 0
        %2000 = vmatprep.subr.bf16.mxu0 0
        %2001 = vmatpush1.bf16.msra.mxu0 0
        %2002 = vmatprep.subr.bf16.mxu0 0
        %2003 = vmatpush1.bf16.msra.mxu0 0
        %2004 = vmatprep.subr.bf16.mxu0 0
        %2005 = vmatpush1.bf16.msra.mxu0 0
        %2006 = vmatprep.subr.bf16.mxu0 0
        %2007 = vmatpush1.bf16.msra.mxu0 0
        %2008 = vmatprep.subr.bf16.mxu0 0
        %2009 = vmatpush1.bf16.msra.mxu0 0
        %2010 = vmatprep.subr.bf16.mxu0 0
        %2011 = vmatpush1.bf16.msra.mxu0 0
        %2012 = vmatprep.subr.bf16.mxu0 0
        %2013 = vmatpush1.bf16.msra.mxu0 0
        %2014 = vmatprep.subr.bf16.mxu0 0
        %2015 = vmatpush1.bf16.msra.mxu0 0
        %2016 = vmatprep.mubr.bf16.mxu0 0
        %2017 = vmatmul.mubr.bf16.gmra.mrb[0].mxu0 %v1973
        %v2018 = vpop.f32.mrb[0].mxu0
        %v2019 = vadd.f32 0.0, %v2018
        %v2020 = vpop.f32.mrb[0].mxu0
        %v2021 = vadd.f32 0.0, %v2020
        %v2022 = vpop.f32.mrb[0].mxu0
        %v2023 = vpop.f32.mrb[0].mxu0
        %2024 = vdwg.mxu0
        %2025 = vmatprep.subr.bf16.mxu0 0
        %2026 = vmatpush1.bf16.msra.mxu0 %v1982
        %2027 = vmatprep.subr.bf16.mxu0 0
        %2028 = vmatpush1.bf16.msra.mxu0 0
        %2029 = vmatprep.subr.bf16.mxu0 0
        %2030 = vmatpush1.bf16.msra.mxu0 0
        %2031 = vmatprep.subr.bf16.mxu0 0
        %2032 = vmatpush1.bf16.msra.mxu0 0
        %2033 = vmatprep.subr.bf16.mxu0 0
        %2034 = vmatpush1.bf16.msra.mxu0 0
        %2035 = vmatprep.subr.bf16.mxu0 0
        %2036 = vmatpush1.bf16.msra.mxu0 0
        %2037 = vmatprep.subr.bf16.mxu0 0
        %2038 = vmatpush1.bf16.msra.mxu0 0
        %2039 = vmatprep.subr.bf16.mxu0 0
        %2040 = vmatpush1.bf16.msra.mxu0 0
        %2041 = vmatprep.subr.bf16.mxu0 0
        %2042 = vmatpush1.bf16.msra.mxu0 0
        %2043 = vmatprep.subr.bf16.mxu0 0
        %2044 = vmatpush1.bf16.msra.mxu0 0
        %2045 = vmatprep.subr.bf16.mxu0 0
        %2046 = vmatpush1.bf16.msra.mxu0 0
        %2047 = vmatprep.subr.bf16.mxu0 0
        %2048 = vmatpush1.bf16.msra.mxu0 0
        %2049 = vmatprep.subr.bf16.mxu0 0
        %2050 = vmatpush1.bf16.msra.mxu0 0
        %2051 = vmatprep.subr.bf16.mxu0 0
        %2052 = vmatpush1.bf16.msra.mxu0 0
        %2053 = vmatprep.subr.bf16.mxu0 0
        %2054 = vmatpush1.bf16.msra.mxu0 0
        %2055 = vmatprep.subr.bf16.mxu0 0
        %2056 = vmatpush1.bf16.msra.mxu0 0
        %2057 = vmatprep.mubr.bf16.mxu0 0
        %2058 = vmatmul.mubr.bf16.gmra.mrb[0].mxu0 %v1973
        %v2059 = vpop.f32.mrb[0].mxu0
        %v2060 = vadd.f32 0.0, %v2059
        %v2061 = vpop.f32.mrb[0].mxu0
        %v2062 = vpop.f32.mrb[0].mxu0
        %v2063 = vpop.f32.mrb[0].mxu0
        %2064 = vdwg.mxu0
        %v2065 = vadd.f32 %v1959, %v2019
        %v2066 = vadd.f32 %v1960, %v2021
        %v2067 = vadd.f32 %v1961, %v2060
        %s2068 = scalar_lea.vmem %s6, 16
        %v2069 = vld [vmem:[%s2068] sm:$0xf]
        %2070 = vrot.lane.b32.xlu0 %v1657, 109
        %v2071 = vpop.permute.xlu0 %2070
        %2072 = vrot.lane.b32.xlu0 %v1658, 109
        %v2073 = vpop.permute.xlu0 %2072
        %2074 = vrot.lane.b32.xlu0 %v1659, 109
        %v2075 = vpop.permute.xlu0 %2074
        %v2076 = vsel %vm1091, %v2071, %v2073
        %v2077 = vsel %vm1091, %v2073, %v2075
        %v2079 = vsel %vm1668, %v2069, 0
        %v2082 = vsel %vm1672, %v2076, 0
        %v2085 = vsel %vm1672, %v2077, 0
        %v2088 = vsel %vm1672, %v2075, 0
        %2090 = vmatprep.subr.bf16.mxu0 %v2085
        %2091 = vmatpush1.bf16.msra.mxu0 %v2082
        %2092 = vmatprep.subr.bf16.mxu0 0
        %2093 = vmatpush1.bf16.msra.mxu0 0
        %2094 = vmatprep.subr.bf16.mxu0 0
        %2095 = vmatpush1.bf16.msra.mxu0 0
        %2096 = vmatprep.subr.bf16.mxu0 0
        %2097 = vmatpush1.bf16.msra.mxu0 0
        %2098 = vmatprep.subr.bf16.mxu0 0
        %2099 = vmatpush1.bf16.msra.mxu0 0
        %2100 = vmatprep.subr.bf16.mxu0 0
        %2101 = vmatpush1.bf16.msra.mxu0 0
        %2102 = vmatprep.subr.bf16.mxu0 0
        %2103 = vmatpush1.bf16.msra.mxu0 0
        %2104 = vmatprep.subr.bf16.mxu0 0
        %2105 = vmatpush1.bf16.msra.mxu0 0
        %2106 = vmatprep.subr.bf16.mxu0 0
        %2107 = vmatpush1.bf16.msra.mxu0 0
        %2108 = vmatprep.subr.bf16.mxu0 0
        %2109 = vmatpush1.bf16.msra.mxu0 0
        %2110 = vmatprep.subr.bf16.mxu0 0
        %2111 = vmatpush1.bf16.msra.mxu0 0
        %2112 = vmatprep.subr.bf16.mxu0 0
        %2113 = vmatpush1.bf16.msra.mxu0 0
        %2114 = vmatprep.subr.bf16.mxu0 0
        %2115 = vmatpush1.bf16.msra.mxu0 0
        %2116 = vmatprep.subr.bf16.mxu0 0
        %2117 = vmatpush1.bf16.msra.mxu0 0
        %2118 = vmatprep.subr.bf16.mxu0 0
        %2119 = vmatpush1.bf16.msra.mxu0 0
        %2120 = vmatprep.subr.bf16.mxu0 0
        %2121 = vmatpush1.bf16.msra.mxu0 0
        %2122 = vmatprep.mubr.bf16.mxu0 0
        %2123 = vmatmul.mubr.bf16.gmra.mrb[0].mxu0 %v2079
        %v2124 = vpop.f32.mrb[0].mxu0
        %v2125 = vadd.f32 0.0, %v2124
        %v2126 = vpop.f32.mrb[0].mxu0
        %v2127 = vadd.f32 0.0, %v2126
        %v2128 = vpop.f32.mrb[0].mxu0
        %v2129 = vpop.f32.mrb[0].mxu0
        %2130 = vdwg.mxu0
        %2131 = vmatprep.subr.bf16.mxu0 0
        %2132 = vmatpush1.bf16.msra.mxu0 %v2088
        %2133 = vmatprep.subr.bf16.mxu0 0
        %2134 = vmatpush1.bf16.msra.mxu0 0
        %2135 = vmatprep.subr.bf16.mxu0 0
        %2136 = vmatpush1.bf16.msra.mxu0 0
        %2137 = vmatprep.subr.bf16.mxu0 0
        %2138 = vmatpush1.bf16.msra.mxu0 0
        %2139 = vmatprep.subr.bf16.mxu0 0
        %2140 = vmatpush1.bf16.msra.mxu0 0
        %2141 = vmatprep.subr.bf16.mxu0 0
        %2142 = vmatpush1.bf16.msra.mxu0 0
        %2143 = vmatprep.subr.bf16.mxu0 0
        %2144 = vmatpush1.bf16.msra.mxu0 0
        %2145 = vmatprep.subr.bf16.mxu0 0
        %2146 = vmatpush1.bf16.msra.mxu0 0
        %2147 = vmatprep.subr.bf16.mxu0 0
        %2148 = vmatpush1.bf16.msra.mxu0 0
        %2149 = vmatprep.subr.bf16.mxu0 0
        %2150 = vmatpush1.bf16.msra.mxu0 0
        %2151 = vmatprep.subr.bf16.mxu0 0
        %2152 = vmatpush1.bf16.msra.mxu0 0
        %2153 = vmatprep.subr.bf16.mxu0 0
        %2154 = vmatpush1.bf16.msra.mxu0 0
        %2155 = vmatprep.subr.bf16.mxu0 0
        %2156 = vmatpush1.bf16.msra.mxu0 0
        %2157 = vmatprep.subr.bf16.mxu0 0
        %2158 = vmatpush1.bf16.msra.mxu0 0
        %2159 = vmatprep.subr.bf16.mxu0 0
        %2160 = vmatpush1.bf16.msra.mxu0 0
        %2161 = vmatprep.subr.bf16.mxu0 0
        %2162 = vmatpush1.bf16.msra.mxu0 0
        %2163 = vmatprep.mubr.bf16.mxu0 0
        %2164 = vmatmul.mubr.bf16.gmra.mrb[0].mxu0 %v2079
        %v2165 = vpop.f32.mrb[0].mxu0
        %v2166 = vadd.f32 0.0, %v2165
        %v2167 = vpop.f32.mrb[0].mxu0
        %v2168 = vpop.f32.mrb[0].mxu0
        %v2169 = vpop.f32.mrb[0].mxu0
        %2170 = vdwg.mxu0
        %v2171 = vadd.f32 %v2065, %v2125
        %v2172 = vadd.f32 %v2066, %v2127
        %v2173 = vadd.f32 %v2067, %v2166
        %s2174 = scalar_lea.vmem %s6, 20
        %v2175 = vld [vmem:[%s2174] sm:$0xf]
        %2176 = vrot.lane.b32.xlu0 %v1657, 108
        %v2177 = vpop.permute.xlu0 %2176
        %2178 = vrot.lane.b32.xlu0 %v1658, 108
        %v2179 = vpop.permute.xlu0 %2178
        %2180 = vrot.lane.b32.xlu0 %v1659, 108
        %v2181 = vpop.permute.xlu0 %2180
        %v2182 = vsel %vm1192, %v2177, %v2179
        %v2183 = vsel %vm1192, %v2179, %v2181
        %v2185 = vsel %vm1668, %v2175, 0
        %v2188 = vsel %vm1672, %v2182, 0
        %v2191 = vsel %vm1672, %v2183, 0
        %v2194 = vsel %vm1672, %v2181, 0
        %2196 = vmatprep.subr.bf16.mxu0 %v2191
        %2197 = vmatpush1.bf16.msra.mxu0 %v2188
        %2198 = vmatprep.subr.bf16.mxu0 0
        %2199 = vmatpush1.bf16.msra.mxu0 0
        %2200 = vmatprep.subr.bf16.mxu0 0
        %2201 = vmatpush1.bf16.msra.mxu0 0
        %2202 = vmatprep.subr.bf16.mxu0 0
        %2203 = vmatpush1.bf16.msra.mxu0 0
        %2204 = vmatprep.subr.bf16.mxu0 0
        %2205 = vmatpush1.bf16.msra.mxu0 0
        %2206 = vmatprep.subr.bf16.mxu0 0
        %2207 = vmatpush1.bf16.msra.mxu0 0
        %2208 = vmatprep.subr.bf16.mxu0 0
        %2209 = vmatpush1.bf16.msra.mxu0 0
        %2210 = vmatprep.subr.bf16.mxu0 0
        %2211 = vmatpush1.bf16.msra.mxu0 0
        %2212 = vmatprep.subr.bf16.mxu0 0
        %2213 = vmatpush1.bf16.msra.mxu0 0
        %2214 = vmatprep.subr.bf16.mxu0 0
        %2215 = vmatpush1.bf16.msra.mxu0 0
        %2216 = vmatprep.subr.bf16.mxu0 0
        %2217 = vmatpush1.bf16.msra.mxu0 0
        %2218 = vmatprep.subr.bf16.mxu0 0
        %2219 = vmatpush1.bf16.msra.mxu0 0
        %2220 = vmatprep.subr.bf16.mxu0 0
        %2221 = vmatpush1.bf16.msra.mxu0 0
        %2222 = vmatprep.subr.bf16.mxu0 0
        %2223 = vmatpush1.bf16.msra.mxu0 0
        %2224 = vmatprep.subr.bf16.mxu0 0
        %2225 = vmatpush1.bf16.msra.mxu0 0
        %2226 = vmatprep.subr.bf16.mxu0 0
        %2227 = vmatpush1.bf16.msra.mxu0 0
        %2228 = vmatprep.mubr.bf16.mxu0 0
        %2229 = vmatmul.mubr.bf16.gmra.mrb[0].mxu0 %v2185
        %v2230 = vpop.f32.mrb[0].mxu0
        %v2231 = vadd.f32 0.0, %v2230
        %v2232 = vpop.f32.mrb[0].mxu0
        %v2233 = vadd.f32 0.0, %v2232
        %v2234 = vpop.f32.mrb[0].mxu0
        %v2235 = vpop.f32.mrb[0].mxu0
        %2236 = vdwg.mxu0
        %2237 = vmatprep.subr.bf16.mxu0 0
        %2238 = vmatpush1.bf16.msra.mxu0 %v2194
        %2239 = vmatprep.subr.bf16.mxu0 0
        %2240 = vmatpush1.bf16.msra.mxu0 0
        %2241 = vmatprep.subr.bf16.mxu0 0
        %2242 = vmatpush1.bf16.msra.mxu0 0
        %2243 = vmatprep.subr.bf16.mxu0 0
        %2244 = vmatpush1.bf16.msra.mxu0 0
        %2245 = vmatprep.subr.bf16.mxu0 0
        %2246 = vmatpush1.bf16.msra.mxu0 0
        %2247 = vmatprep.subr.bf16.mxu0 0
        %2248 = vmatpush1.bf16.msra.mxu0 0
        %2249 = vmatprep.subr.bf16.mxu0 0
        %2250 = vmatpush1.bf16.msra.mxu0 0
        %2251 = vmatprep.subr.bf16.mxu0 0
        %2252 = vmatpush1.bf16.msra.mxu0 0
        %2253 = vmatprep.subr.bf16.mxu0 0
        %2254 = vmatpush1.bf16.msra.mxu0 0
        %2255 = vmatprep.subr.bf16.mxu0 0
        %2256 = vmatpush1.bf16.msra.mxu0 0
        %2257 = vmatprep.subr.bf16.mxu0 0
        %2258 = vmatpush1.bf16.msra.mxu0 0
        %2259 = vmatprep.subr.bf16.mxu0 0
        %2260 = vmatpush1.bf16.msra.mxu0 0
        %2261 = vmatprep.subr.bf16.mxu0 0
        %2262 = vmatpush1.bf16.msra.mxu0 0
        %2263 = vmatprep.subr.bf16.mxu0 0
        %2264 = vmatpush1.bf16.msra.mxu0 0
        %2265 = vmatprep.subr.bf16.mxu0 0
        %2266 = vmatpush1.bf16.msra.mxu0 0
        %2267 = vmatprep.subr.bf16.mxu0 0
        %2268 = vmatpush1.bf16.msra.mxu0 0
        %2269 = vmatprep.mubr.bf16.mxu0 0
        %2270 = vmatmul.mubr.bf16.gmra.mrb[0].mxu0 %v2185
        %v2271 = vpop.f32.mrb[0].mxu0
        %v2272 = vadd.f32 0.0, %v2271
        %v2273 = vpop.f32.mrb[0].mxu0
        %v2274 = vpop.f32.mrb[0].mxu0
        %v2275 = vpop.f32.mrb[0].mxu0
        %2276 = vdwg.mxu0
        %v2277 = vadd.f32 %v2171, %v2231
        %v2278 = vadd.f32 %v2172, %v2233
        %v2279 = vadd.f32 %v2173, %v2272
        %s2280 = scalar_lea.vmem %s6, 24
        %v2281 = vld [vmem:[%s2280] sm:$0xf]
        %2282 = vrot.lane.b32.xlu0 %v1657, 92
        %v2283 = vpop.permute.xlu0 %2282
        %2284 = vrot.lane.b32.xlu0 %v1658, 92
        %v2285 = vpop.permute.xlu0 %2284
        %2286 = vrot.lane.b32.xlu0 %v1659, 92
        %v2287 = vpop.permute.xlu0 %2286
        %v2288 = vsel %vm1293, %v2283, %v2285
        %v2289 = vsel %vm1293, %v2285, %v2287
        %v2291 = vsel %vm1668, %v2281, 0
        %v2294 = vsel %vm1672, %v2288, 0
        %v2297 = vsel %vm1672, %v2289, 0
        %v2300 = vsel %vm1672, %v2287, 0
        %2302 = vmatprep.subr.bf16.mxu0 %v2297
        %2303 = vmatpush1.bf16.msra.mxu0 %v2294
        %2304 = vmatprep.subr.bf16.mxu0 0
        %2305 = vmatpush1.bf16.msra.mxu0 0
        %2306 = vmatprep.subr.bf16.mxu0 0
        %2307 = vmatpush1.bf16.msra.mxu0 0
        %2308 = vmatprep.subr.bf16.mxu0 0
        %2309 = vmatpush1.bf16.msra.mxu0 0
        %2310 = vmatprep.subr.bf16.mxu0 0
        %2311 = vmatpush1.bf16.msra.mxu0 0
        %2312 = vmatprep.subr.bf16.mxu0 0
        %2313 = vmatpush1.bf16.msra.mxu0 0
        %2314 = vmatprep.subr.bf16.mxu0 0
        %2315 = vmatpush1.bf16.msra.mxu0 0
        %2316 = vmatprep.subr.bf16.mxu0 0
        %2317 = vmatpush1.bf16.msra.mxu0 0
        %2318 = vmatprep.subr.bf16.mxu0 0
        %2319 = vmatpush1.bf16.msra.mxu0 0
        %2320 = vmatprep.subr.bf16.mxu0 0
        %2321 = vmatpush1.bf16.msra.mxu0 0
        %2322 = vmatprep.subr.bf16.mxu0 0
        %2323 = vmatpush1.bf16.msra.mxu0 0
        %2324 = vmatprep.subr.bf16.mxu0 0
        %2325 = vmatpush1.bf16.msra.mxu0 0
        %2326 = vmatprep.subr.bf16.mxu0 0
        %2327 = vmatpush1.bf16.msra.mxu0 0
        %2328 = vmatprep.subr.bf16.mxu0 0
        %2329 = vmatpush1.bf16.msra.mxu0 0
        %2330 = vmatprep.subr.bf16.mxu0 0
        %2331 = vmatpush1.bf16.msra.mxu0 0
        %2332 = vmatprep.subr.bf16.mxu0 0
        %2333 = vmatpush1.bf16.msra.mxu0 0
        %2334 = vmatprep.mubr.bf16.mxu0 0
        %2335 = vmatmul.mubr.bf16.gmra.mrb[0].mxu0 %v2291
        %v2336 = vpop.f32.mrb[0].mxu0
        %v2337 = vadd.f32 0.0, %v2336
        %v2338 = vpop.f32.mrb[0].mxu0
        %v2339 = vadd.f32 0.0, %v2338
        %v2340 = vpop.f32.mrb[0].mxu0
        %v2341 = vpop.f32.mrb[0].mxu0
        %2342 = vdwg.mxu0
        %2343 = vmatprep.subr.bf16.mxu0 0
        %2344 = vmatpush1.bf16.msra.mxu0 %v2300
        %2345 = vmatprep.subr.bf16.mxu0 0
        %2346 = vmatpush1.bf16.msra.mxu0 0
        %2347 = vmatprep.subr.bf16.mxu0 0
        %2348 = vmatpush1.bf16.msra.mxu0 0
        %2349 = vmatprep.subr.bf16.mxu0 0
        %2350 = vmatpush1.bf16.msra.mxu0 0
        %2351 = vmatprep.subr.bf16.mxu0 0
        %2352 = vmatpush1.bf16.msra.mxu0 0
        %2353 = vmatprep.subr.bf16.mxu0 0
        %2354 = vmatpush1.bf16.msra.mxu0 0
        %2355 = vmatprep.subr.bf16.mxu0 0
        %2356 = vmatpush1.bf16.msra.mxu0 0
        %2357 = vmatprep.subr.bf16.mxu0 0
        %2358 = vmatpush1.bf16.msra.mxu0 0
        %2359 = vmatprep.subr.bf16.mxu0 0
        %2360 = vmatpush1.bf16.msra.mxu0 0
        %2361 = vmatprep.subr.bf16.mxu0 0
        %2362 = vmatpush1.bf16.msra.mxu0 0
        %2363 = vmatprep.subr.bf16.mxu0 0
        %2364 = vmatpush1.bf16.msra.mxu0 0
        %2365 = vmatprep.subr.bf16.mxu0 0
        %2366 = vmatpush1.bf16.msra.mxu0 0
        %2367 = vmatprep.subr.bf16.mxu0 0
        %2368 = vmatpush1.bf16.msra.mxu0 0
        %2369 = vmatprep.subr.bf16.mxu0 0
        %2370 = vmatpush1.bf16.msra.mxu0 0
        %2371 = vmatprep.subr.bf16.mxu0 0
        %2372 = vmatpush1.bf16.msra.mxu0 0
        %2373 = vmatprep.subr.bf16.mxu0 0
        %2374 = vmatpush1.bf16.msra.mxu0 0
        %2375 = vmatprep.mubr.bf16.mxu0 0
        %2376 = vmatmul.mubr.bf16.gmra.mrb[0].mxu0 %v2291
        %v2377 = vpop.f32.mrb[0].mxu0
        %v2378 = vadd.f32 0.0, %v2377
        %v2379 = vpop.f32.mrb[0].mxu0
        %v2380 = vpop.f32.mrb[0].mxu0
        %v2381 = vpop.f32.mrb[0].mxu0
        %2382 = vdwg.mxu0
        %v2383 = vadd.f32 %v2277, %v2337
        %v2384 = vadd.f32 %v2278, %v2339
        %v2385 = vadd.f32 %v2279, %v2378
        %s2386 = scalar_lea.vmem %s6, 28
        %v2387 = vld [vmem:[%s2386] sm:$0xf]
        %2388 = vrot.lane.b32.xlu0 %v1657, 91
        %v2389 = vpop.permute.xlu0 %2388
        %2390 = vrot.lane.b32.xlu0 %v1658, 91
        %v2391 = vpop.permute.xlu0 %2390
        %2392 = vrot.lane.b32.xlu0 %v1659, 91
        %v2393 = vpop.permute.xlu0 %2392
        %v2394 = vsel %vm1394, %v2389, %v2391
        %v2395 = vsel %vm1394, %v2391, %v2393
        %v2397 = vsel %vm1668, %v2387, 0
        %v2400 = vsel %vm1672, %v2394, 0
        %v2403 = vsel %vm1672, %v2395, 0
        %v2406 = vsel %vm1672, %v2393, 0
        %2408 = vmatprep.subr.bf16.mxu0 %v2403
        %2409 = vmatpush1.bf16.msra.mxu0 %v2400
        %2410 = vmatprep.subr.bf16.mxu0 0
        %2411 = vmatpush1.bf16.msra.mxu0 0
        %2412 = vmatprep.subr.bf16.mxu0 0
        %2413 = vmatpush1.bf16.msra.mxu0 0
        %2414 = vmatprep.subr.bf16.mxu0 0
        %2415 = vmatpush1.bf16.msra.mxu0 0
        %2416 = vmatprep.subr.bf16.mxu0 0
        %2417 = vmatpush1.bf16.msra.mxu0 0
        %2418 = vmatprep.subr.bf16.mxu0 0
        %2419 = vmatpush1.bf16.msra.mxu0 0
        %2420 = vmatprep.subr.bf16.mxu0 0
        %2421 = vmatpush1.bf16.msra.mxu0 0
        %2422 = vmatprep.subr.bf16.mxu0 0
        %2423 = vmatpush1.bf16.msra.mxu0 0
        %2424 = vmatprep.subr.bf16.mxu0 0
        %2425 = vmatpush1.bf16.msra.mxu0 0
        %2426 = vmatprep.subr.bf16.mxu0 0
        %2427 = vmatpush1.bf16.msra.mxu0 0
        %2428 = vmatprep.subr.bf16.mxu0 0
        %2429 = vmatpush1.bf16.msra.mxu0 0
        %2430 = vmatprep.subr.bf16.mxu0 0
        %2431 = vmatpush1.bf16.msra.mxu0 0
        %2432 = vmatprep.subr.bf16.mxu0 0
        %2433 = vmatpush1.bf16.msra.mxu0 0
        %2434 = vmatprep.subr.bf16.mxu0 0
        %2435 = vmatpush1.bf16.msra.mxu0 0
        %2436 = vmatprep.subr.bf16.mxu0 0
        %2437 = vmatpush1.bf16.msra.mxu0 0
        %2438 = vmatprep.subr.bf16.mxu0 0
        %2439 = vmatpush1.bf16.msra.mxu0 0
        %2440 = vmatprep.mubr.bf16.mxu0 0
        %2441 = vmatmul.mubr.bf16.gmra.mrb[0].mxu0 %v2397
        %v2442 = vpop.f32.mrb[0].mxu0
        %v2443 = vadd.f32 0.0, %v2442
        %v2444 = vpop.f32.mrb[0].mxu0
        %v2445 = vadd.f32 0.0, %v2444
        %v2446 = vpop.f32.mrb[0].mxu0
        %v2447 = vpop.f32.mrb[0].mxu0
        %2448 = vdwg.mxu0
        %2449 = vmatprep.subr.bf16.mxu0 0
        %2450 = vmatpush1.bf16.msra.mxu0 %v2406
        %2451 = vmatprep.subr.bf16.mxu0 0
        %2452 = vmatpush1.bf16.msra.mxu0 0
        %2453 = vmatprep.subr.bf16.mxu0 0
        %2454 = vmatpush1.bf16.msra.mxu0 0
        %2455 = vmatprep.subr.bf16.mxu0 0
        %2456 = vmatpush1.bf16.msra.mxu0 0
        %2457 = vmatprep.subr.bf16.mxu0 0
        %2458 = vmatpush1.bf16.msra.mxu0 0
        %2459 = vmatprep.subr.bf16.mxu0 0
        %2460 = vmatpush1.bf16.msra.mxu0 0
        %2461 = vmatprep.subr.bf16.mxu0 0
        %2462 = vmatpush1.bf16.msra.mxu0 0
        %2463 = vmatprep.subr.bf16.mxu0 0
        %2464 = vmatpush1.bf16.msra.mxu0 0
        %2465 = vmatprep.subr.bf16.mxu0 0
        %2466 = vmatpush1.bf16.msra.mxu0 0
        %2467 = vmatprep.subr.bf16.mxu0 0
        %2468 = vmatpush1.bf16.msra.mxu0 0
        %2469 = vmatprep.subr.bf16.mxu0 0
        %2470 = vmatpush1.bf16.msra.mxu0 0
        %2471 = vmatprep.subr.bf16.mxu0 0
        %2472 = vmatpush1.bf16.msra.mxu0 0
        %2473 = vmatprep.subr.bf16.mxu0 0
        %2474 = vmatpush1.bf16.msra.mxu0 0
        %2475 = vmatprep.subr.bf16.mxu0 0
        %2476 = vmatpush1.bf16.msra.mxu0 0
        %2477 = vmatprep.subr.bf16.mxu0 0
        %2478 = vmatpush1.bf16.msra.mxu0 0
        %2479 = vmatprep.subr.bf16.mxu0 0
        %2480 = vmatpush1.bf16.msra.mxu0 0
        %2481 = vmatprep.mubr.bf16.mxu0 0
        %2482 = vmatmul.mubr.bf16.gmra.mrb[0].mxu0 %v2397
        %v2483 = vpop.f32.mrb[0].mxu0
        %v2484 = vadd.f32 0.0, %v2483
        %v2485 = vpop.f32.mrb[0].mxu0
        %v2486 = vpop.f32.mrb[0].mxu0
        %v2487 = vpop.f32.mrb[0].mxu0
        %2488 = vdwg.mxu0
        %v2489 = vadd.f32 %v2383, %v2443
        %v2490 = vadd.f32 %v2384, %v2445
        %v2491 = vadd.f32 %v2385, %v2484
        %s2492 = scalar_lea.vmem %s6, 32
        %v2493 = vld [vmem:[%s2492] sm:$0xf]
        %2494 = vrot.lane.b32.xlu0 %v1657, 90
        %v2495 = vpop.permute.xlu0 %2494
        %2496 = vrot.lane.b32.xlu0 %v1658, 90
        %v2497 = vpop.permute.xlu0 %2496
        %2498 = vrot.lane.b32.xlu0 %v1659, 90
        %v2499 = vpop.permute.xlu0 %2498
        %v2500 = vsel %vm1495, %v2495, %v2497
        %v2501 = vsel %vm1495, %v2497, %v2499
        %v2503 = vsel %vm1668, %v2493, 0
        %v2506 = vsel %vm1672, %v2500, 0
        %v2509 = vsel %vm1672, %v2501, 0
        %v2512 = vsel %vm1672, %v2499, 0
        %2514 = vmatprep.subr.bf16.mxu0 %v2509
        %2515 = vmatpush1.bf16.msra.mxu0 %v2506
        %2516 = vmatprep.subr.bf16.mxu0 0
        %2517 = vmatpush1.bf16.msra.mxu0 0
        %2518 = vmatprep.subr.bf16.mxu0 0
        %2519 = vmatpush1.bf16.msra.mxu0 0
        %2520 = vmatprep.subr.bf16.mxu0 0
        %2521 = vmatpush1.bf16.msra.mxu0 0
        %2522 = vmatprep.subr.bf16.mxu0 0
        %2523 = vmatpush1.bf16.msra.mxu0 0
        %2524 = vmatprep.subr.bf16.mxu0 0
        %2525 = vmatpush1.bf16.msra.mxu0 0
        %2526 = vmatprep.subr.bf16.mxu0 0
        %2527 = vmatpush1.bf16.msra.mxu0 0
        %2528 = vmatprep.subr.bf16.mxu0 0
        %2529 = vmatpush1.bf16.msra.mxu0 0
        %2530 = vmatprep.subr.bf16.mxu0 0
        %2531 = vmatpush1.bf16.msra.mxu0 0
        %2532 = vmatprep.subr.bf16.mxu0 0
        %2533 = vmatpush1.bf16.msra.mxu0 0
        %2534 = vmatprep.subr.bf16.mxu0 0
        %2535 = vmatpush1.bf16.msra.mxu0 0
        %2536 = vmatprep.subr.bf16.mxu0 0
        %2537 = vmatpush1.bf16.msra.mxu0 0
        %2538 = vmatprep.subr.bf16.mxu0 0
        %2539 = vmatpush1.bf16.msra.mxu0 0
        %2540 = vmatprep.subr.bf16.mxu0 0
        %2541 = vmatpush1.bf16.msra.mxu0 0
        %2542 = vmatprep.subr.bf16.mxu0 0
        %2543 = vmatpush1.bf16.msra.mxu0 0
        %2544 = vmatprep.subr.bf16.mxu0 0
        %2545 = vmatpush1.bf16.msra.mxu0 0
        %2546 = vmatprep.mubr.bf16.mxu0 0
        %2547 = vmatmul.mubr.bf16.gmra.mrb[0].mxu0 %v2503
        %v2548 = vpop.f32.mrb[0].mxu0
        %v2549 = vadd.f32 0.0, %v2548
        %v2550 = vpop.f32.mrb[0].mxu0
        %v2551 = vadd.f32 0.0, %v2550
        %v2552 = vpop.f32.mrb[0].mxu0
        %v2553 = vpop.f32.mrb[0].mxu0
        %2554 = vdwg.mxu0
        %2555 = vmatprep.subr.bf16.mxu0 0
        %2556 = vmatpush1.bf16.msra.mxu0 %v2512
        %2557 = vmatprep.subr.bf16.mxu0 0
        %2558 = vmatpush1.bf16.msra.mxu0 0
        %2559 = vmatprep.subr.bf16.mxu0 0
        %2560 = vmatpush1.bf16.msra.mxu0 0
        %2561 = vmatprep.subr.bf16.mxu0 0
        %2562 = vmatpush1.bf16.msra.mxu0 0
        %2563 = vmatprep.subr.bf16.mxu0 0
        %2564 = vmatpush1.bf16.msra.mxu0 0
        %2565 = vmatprep.subr.bf16.mxu0 0
        %2566 = vmatpush1.bf16.msra.mxu0 0
        %2567 = vmatprep.subr.bf16.mxu0 0
        %2568 = vmatpush1.bf16.msra.mxu0 0
        %2569 = vmatprep.subr.bf16.mxu0 0
        %2570 = vmatpush1.bf16.msra.mxu0 0
        %2571 = vmatprep.subr.bf16.mxu0 0
        %2572 = vmatpush1.bf16.msra.mxu0 0
        %2573 = vmatprep.subr.bf16.mxu0 0
        %2574 = vmatpush1.bf16.msra.mxu0 0
        %2575 = vmatprep.subr.bf16.mxu0 0
        %2576 = vmatpush1.bf16.msra.mxu0 0
        %2577 = vmatprep.subr.bf16.mxu0 0
        %2578 = vmatpush1.bf16.msra.mxu0 0
        %2579 = vmatprep.subr.bf16.mxu0 0
        %2580 = vmatpush1.bf16.msra.mxu0 0
        %2581 = vmatprep.subr.bf16.mxu0 0
        %2582 = vmatpush1.bf16.msra.mxu0 0
        %2583 = vmatprep.subr.bf16.mxu0 0
        %2584 = vmatpush1.bf16.msra.mxu0 0
        %2585 = vmatprep.subr.bf16.mxu0 0
        %2586 = vmatpush1.bf16.msra.mxu0 0
        %2587 = vmatprep.mubr.bf16.mxu0 0
        %2588 = vmatmul.mubr.bf16.gmra.mrb[0].mxu0 %v2503
        %v2589 = vpop.f32.mrb[0].mxu0
        %v2590 = vadd.f32 0.0, %v2589
        %v2591 = vpop.f32.mrb[0].mxu0
        %v2592 = vpop.f32.mrb[0].mxu0
        %v2593 = vpop.f32.mrb[0].mxu0
        %2594 = vdwg.mxu0
        %v2595 = vadd.f32 %v2489, %v2549
        %v2596 = vadd.f32 %v2490, %v2551
        %v2597 = vadd.f32 %v2491, %v2590
        %v2598 = vld [vmem:[%s7] sm:$0xff]
        %2600 = vset.pattern.permute.xlu0 0
        %2601 = vperm.xlu0 %2600, %v2598
        %v2602 = vpop.permute.xlu0 %2601
        %v2604 = vadd.f32 %v2595, %v2602
        %v2605 = vadd.f32 %v2596, %v2602
        %v2606 = vadd.f32 %v2597, %v2602
        %v2607 = vmax.f32 %v2604, 0.0
        %v2608 = vmax.f32 %v2605, 0.0
        %v2609 = vmax.f32 %v2606, 0.0
        %2610 = vst [vmem:[%s340] sm:$0xff] %v2607
        %2611 = vst [vmem:[%s340 + $0x8] sm:$0xff] %v2608
        %vm2612 = vcmask 261120
        %2613 = vst.msk [vmem:[%s340 + $0x10] sm:$0xff] %vm2612, %v2609
        %s2614 = sand.u32 %s230, 1
        %s2615 = scalar_lea.sflag [#allocation5], %s2614
        %s2616 = sand.u32 %s230, 1
        %s2617 = smul.addr %s2616, 24
        %s2618 = scalar_lea.vmem [#allocation4], %s2617
        // Predicated region
        $region57: #{tpu_custom_call.1} parent=55 // pred_check
          %p2619 = pneg %p240
        $region58: #{tpu_custom_call.1} parent=55 // pred_check_branch
          %2621 = sbr.rel (%p2619) target = $region60
        $region59: #{tpu_custom_call.1} parent=55 // pred_region
          %s2623 = ssub.s32 384, 384
          %2624 = vsyncadd %s2615, %s2623
          %s2625 = smul.addr %s23, 3
          %s2626 = smul.addr %s2625, 128
          %s2627 = scalar_lea.hbm %s9, %s2626
          %s2629 = sshll.u32 %s2618, 4
          %s2630 = int_to_ptr.vmem [resolvable:$true] %s2629
          %2632 = dma.vmem_to_hbm [thread:$0]  %s2630, 384, %s2627, %s2615
        $region60: #{tpu_custom_call.1} parent=55 // pred_fallthru
          _
      $region56: #{tpu_custom_call.1} parent=5 // pred_fallthru
        _
      %p2633 = scmp.le.s32.totalorder 2, %s18
      // Predicated region
      $region61: #{tpu_custom_call.1} parent=5 // pred_check
        %p2634 = pneg %p2633
      $region62: #{tpu_custom_call.1} parent=5 // pred_check_branch
        %2636 = sbr.rel (%p2634) target = $region64
      $region63: #{tpu_custom_call.1} parent=5 // pred_region
        %s2637 = ssub.s32 %s18, 2
        // Predicated region
        $region65: #{tpu_custom_call.1} parent=63 // pred_check
          %p2638 = pneg %p246
        $region66: #{tpu_custom_call.1} parent=63 // pred_check_branch
          %2640 = sbr.rel (%p2638) target = $region68
        $region67: #{tpu_custom_call.1} parent=63 // pred_region
          %s2641 = sand.u32 %s231, 1
          %s2642 = scalar_lea.sflag [#allocation5], %s2641
          %s2643 = sand.u32 %s231, 1
          %s2644 = smul.addr %s2643, 24
          %s2645 = scalar_lea.vmem [#allocation4], %s2644
          %2646 = dma.done %s2642, 384
        $region68: #{tpu_custom_call.1} parent=63 // pred_fallthru
          _
      $region64: #{tpu_custom_call.1} parent=5 // pred_fallthru
        _
    $region6: #{tpu_custom_call.1} parent=1 // loop_footer
      %s22 = sadd.s32 1, %s18
    $region7: #{tpu_custom_call.1} parent=1 // loop_footer_branch
      %17 = sbr.rel target = $region3
    $region8: #{tpu_custom_call.1} parent=1 // loop_exit
      _
    %2647 = vsyncpa [#allocation5], 1
    %s2648 = scalar_lea.sflag [#allocation5], 1
    %2649 = vsyncpa %s2648, 1

</llo_original>
